<compile_context>
chip_gen: v7x
topology: tpu7x:2x2x1
jax: 0.10.0
libtpu: 0.0.40
codegen_flags: <defaults>
</compile_context>

<pallas_src>
import functools

import jax
import jax.numpy as jnp
from jax import lax
from jax.experimental import pallas as pl
from jax.experimental.pallas import tpu as pltpu


def _round_up(v, m):
    return ((v + m - 1) // m) * m


# ----------------------------------------------------------------------------
# Fused kernel: conv1 -> conv2 -> (mean | exp(log_diag) | cov_factor) for all
# models.  Layout: channels on sublanes, flattened padded spatial on lanes.
# ----------------------------------------------------------------------------
def _fused_ssn_kernel(xcol_ref, w1_ref, b1_ref, w2_ref, b2_ref, wh_ref, bh_ref,
                      out_ref, h1_scr, slab_scr, *, Wp, margin, num_classes):
    F = h1_scr.shape[0]                    # filters
    Pext = h1_scr.shape[1]                 # padded frame + shift margins
    Ppad = xcol_ref.shape[-1]              # flattened padded frame (Hp*Wp)
    n_models = w1_ref.shape[0]
    nc = num_classes

    # Zero the shift margins of the h1 scratch (what conv2 reads there only
    # feeds halo output pixels, discarded in the wrapper, but keep it
    # deterministic).  Central Ppad columns are fully rewritten per model.
    h1_scr[:, 0:margin] = jnp.zeros((F, margin), h1_scr.dtype)
    h1_scr[:, margin + Ppad:Pext] = jnp.zeros((F, Pext - margin - Ppad),
                                              h1_scr.dtype)

    xcol = xcol_ref[...]                   # (9*Cin + 1, Ppad) bf16, shared

    for m in range(n_models):              # unrolled: M small, weights in VMEM
        # ---- conv1: single MXU matmul, K = 9*Cin + 1 (sentinel channel) ----
        # Sentinel channel is -1e9 at halo/pad pixels with weight 1.0 -> ReLU
        # forces h1 = 0 exactly there (zero padding seen by conv2).
        h1 = jnp.maximum(
            jnp.dot(w1_ref[m], xcol, preferred_element_type=jnp.float32)
            + b1_ref[m], 0.0)                                    # (F, Ppad) f32
        h1_scr[:, margin:margin + Ppad] = h1.astype(h1_scr.dtype)

        # ---- conv2: im2col-in-VMEM (K-concatenated slab) + ONE matmul ------
        # Slab writes land on sublane-tile boundaries (multiples of F); the
        # shifted reads are static lane slices (XLU rotates, off the MXU/VPU
        # critical slots).
        for t in range(9):
            dh, dw = divmod(t, 3)
            delta = (dh - 1) * Wp + (dw - 1)
            slab_scr[t * F:(t + 1) * F, :] = \
                h1_scr[:, margin + delta:margin + delta + Ppad]
        h2 = jnp.maximum(
            jnp.dot(w2_ref[m], slab_scr[...],
                    preferred_element_type=jnp.float32)
            + b2_ref[m], 0.0)                                    # (F, Ppad) f32

        # ---- fused 1x1 heads: one f32 matmul, lane-dense channels-first ----
        y = (jnp.dot(wh_ref[m], h2, preferred_element_type=jnp.float32)
             + bh_ref[m])                                        # (Ctot, Ppad)
        row = lax.broadcasted_iota(jnp.int32, y.shape, 0)
        is_diag = (row >= nc) & (row < 2 * nc)
        # exp() only ever sees the diag rows (others are zeroed first), so no
        # spurious inf can be produced for rows the select discards.
        y_exp = jnp.exp(jnp.where(is_diag, y, 0.0))
        out_ref[m] = jnp.where(is_diag, y_exp, y)


# ----------------------------------------------------------------------------
# Wrapper
# ----------------------------------------------------------------------------
def ensemble_ssn_forward(image_nchw, params, num_classes, rank,
                         enforce_lowrank=False):
    """Equivalent of EnsembleSSN.forward: returns a list (len=number_of_models)
    of (logit_mean, output_dict) tuples."""
    x = image_nchw.astype(jnp.float32)                  # (N, Cin, H, W)
    N, Cin, H, W = x.shape
    M = params["w1"].shape[0]
    F = params["w1"].shape[-1]
    nc = num_classes
    Ctot = 2 * nc + nc * rank

    Hp, Wp = H + 2, W + 2
    Ppad = Hp * Wp
    MC = max(128, _round_up(Wp + 1, 128))               # lane-aligned margin
    Pext = Ppad + 2 * MC
    Kc1 = 9 * Cin + 1                                   # + sentinel channel

    # conv1 im2col built once in the wrapper, transposed: (channels, pixels).
    xp2 = jnp.pad(x, ((0, 0), (0, 0), (2, 2), (2, 2)))
    taps = [xp2[:, :, dh:dh + Hp, dw:dw + Wp]
            for dh in range(3) for dw in range(3)]
    x_col = jnp.stack(taps, axis=1).reshape(N, 9 * Cin, Ppad)
    rr = jnp.arange(Hp)
    cc = jnp.arange(Wp)
    valid = (((rr >= 1) & (rr <= H))[:, None]
             & ((cc >= 1) & (cc <= W))[None, :])
    sent = jnp.where(valid, 0.0, -1e9).astype(jnp.float32).reshape(1, 1, Ppad)
    x_col = jnp.concatenate([x_col, jnp.broadcast_to(sent, (N, 1, Ppad))],
                            axis=1).astype(jnp.bfloat16)          # (N,Kc1,Ppad)

    # Weight packing: taps flattened, operands transposed (channels first),
    # three 1x1 heads fused into one matmul; convs bf16, heads f32.
    # NOTE: PyTorch conv weights (Cout, Cin, kh, kw) must be permuted to
    # (kh, kw, Cin, Cout) before being placed in params["w1"]/["w2"].
    ones = jnp.ones((M, F, 1), jnp.float32)
    w1cT = jnp.concatenate(
        [jnp.swapaxes(params["w1"].reshape(M, 9 * Cin, F), 1, 2), ones],
        axis=-1).astype(jnp.bfloat16)                              # (M,F,Kc1)
    w2cT = jnp.swapaxes(params["w2"].reshape(M, 9 * F, F),
                        1, 2).astype(jnp.bfloat16)                 # (M,F,9F)
    whT = jnp.swapaxes(
        jnp.concatenate([params["wm"], params["wd"], params["wf"]], axis=-1),
        1, 2).astype(jnp.float32)                                  # (M,Ctot,F)
    b1 = jnp.swapaxes(params["b1"], 1, 2).astype(jnp.float32)      # (M,F,1)
    b2 = jnp.swapaxes(params["b2"], 1, 2).astype(jnp.float32)
    bhT = jnp.swapaxes(
        jnp.concatenate([params["bm"], params["bd"], params["bf"]], axis=-1),
        1, 2).astype(jnp.float32)                                  # (M,Ctot,1)

    flops = 2 * N * M * Ppad * (F * Kc1 + F * 9 * F + Ctot * F)
    bytes_accessed = (x_col.size * 2 + (w1cT.size + w2cT.size) * 2
                      + (whT.size + b1.size + b2.size + bhT.size) * 4
                      + N * M * Ctot * Ppad * 4)

    out = pl.pallas_call(
        functools.partial(_fused_ssn_kernel, Wp=Wp, margin=MC,
                          num_classes=nc),
        out_shape=jax.ShapeDtypeStruct((N, M, Ctot, Ppad), jnp.float32),
        grid_spec=pltpu.PrefetchScalarGridSpec(
            num_scalar_prefetch=0,
            # Model loop folded into the body (weights are tiny and stay
            # VMEM-resident); at N=1 deployments keep M as a parallel axis
            # instead so both v7x TensorCores have work.
            grid=(N,),
            in_specs=[
                pl.BlockSpec((pl.Squeezed(), Kc1, Ppad), lambda n: (n, 0, 0)),
                pl.BlockSpec((M, F, Kc1), lambda n: (0, 0, 0)),
                pl.BlockSpec((M, F, 1), lambda n: (0, 0, 0)),
                pl.BlockSpec((M, F, 9 * F), lambda n: (0, 0, 0)),
                pl.BlockSpec((M, F, 1), lambda n: (0, 0, 0)),
                pl.BlockSpec((M, Ctot, F), lambda n: (0, 0, 0)),
                pl.BlockSpec((M, Ctot, 1), lambda n: (0, 0, 0)),
            ],
            out_specs=pl.BlockSpec((pl.Squeezed(), M, Ctot, Ppad),
                                   lambda n: (n, 0, 0, 0)),
            scratch_shapes=[pltpu.VMEM((F, Pext), jnp.bfloat16),     # h1
                            pltpu.VMEM((9 * F, Ppad), jnp.bfloat16)],  # slab
        ),
        compiler_params=pltpu.CompilerParams(
            dimension_semantics=("parallel",)),
        cost_estimate=pl.CostEstimate(flops=flops,
                                      transcendentals=N * M * Ppad * nc,
                                      bytes_accessed=bytes_accessed),
    )(x_col, w1cT, b1, w2cT, b2, whT, bhT)

    # Drop halo pixels; channels-first layout falls straight out of the kernel.
    out_img = out.reshape(N, M, Ctot, Hp, Wp)[:, :, :, 1:H + 1, 1:W + 1]

    # TODO(synk): torch.distributions (LowRankMultivariateNormal /
    # ReshapedDistribution) and the `enforce_lowrank` switch have no JAX-array
    # equivalent here; the distribution's parameters are returned instead.
    outputs = []
    for m in range(M):
        logit_mean = out_img[:, m, 0:nc]                          # (N,nc,H,W)
        cov_diag = out_img[:, m, nc:2 * nc].reshape(N, nc * H * W)
        # NOTE: the nc*rank factor-head channels are interpreted rank-major
        # (view(b, rank, nc, -1) -> flatten -> transpose), matching the
        # reference SSN implementation.
        cov_factor = jnp.transpose(
            out_img[:, m, 2 * nc:].reshape(N, rank, nc * H * W), (0, 2, 1))
        outputs.append((logit_mean, {
            "logit_mean": logit_mean,
            "cov_diag": cov_diag,
            "cov_factor": cov_factor,
            "distribution": None,
        }))
    return outputs


# ----------------------------------------------------------------------------
# Parameters & pure-JAX reference (for a correctness spot-check)
# ----------------------------------------------------------------------------
def init_ensemble_params(key, number_of_models, input_channels, num_classes,
                         num_filters, rank):
    ks = jax.random.split(key, 10)
    s = 0.1
    M, Cin, F, nc = number_of_models, input_channels, num_filters, num_classes
    return {
        "w1": s * jax.random.normal(ks[0], (M, 3, 3, Cin, F), jnp.float32),
        "b1": s * jax.random.normal(ks[1], (M, 1, F), jnp.float32),
        "w2": s * jax.random.normal(ks[2], (M, 3, 3, F, F), jnp.float32),
        "b2": s * jax.random.normal(ks[3], (M, 1, F), jnp.float32),
        "wm": s * jax.random.normal(ks[4], (M, F, nc), jnp.float32),
        "bm": s * jax.random.normal(ks[5], (M, 1, nc), jnp.float32),
        "wd": s * jax.random.normal(ks[6], (M, F, nc), jnp.float32),
        "bd": -3.0 + s * jax.random.normal(ks[7], (M, 1, nc), jnp.float32),
        "wf": s * jax.random.normal(ks[8], (M, F, nc * rank), jnp.float32),
        "bf": s * jax.random.normal(ks[9], (M, 1, nc * rank), jnp.float32),
    }


def _reference_forward(x_nhwc, params, nc, rank):
    dn = ("NHWC", "HWIO", "NHWC")
    M = params["w1"].shape[0]
    means, diags, facs = [], [], []
    for m in range(M):
        h1 = jax.nn.relu(
            lax.conv_general_dilated(x_nhwc, params["w1"][m], (1, 1), "SAME",
                                     dimension_numbers=dn)
            + params["b1"][m].reshape(1, 1, 1, -1))
        h2 = jax.nn.relu(
            lax.conv_general_dilated(h1, params["w2"][m], (1, 1), "SAME",
                                     dimension_numbers=dn)
            + params["b2"][m].reshape(1, 1, 1, -1))
        means.append(jnp.einsum("nhwf,fc->nhwc", h2, params["wm"][m])
                     + params["bm"][m].reshape(1, 1, 1, -1))
        diags.append(jnp.exp(jnp.einsum("nhwf,fc->nhwc", h2, params["wd"][m])
                             + params["bd"][m].reshape(1, 1, 1, -1)))
        facs.append(jnp.einsum("nhwf,fc->nhwc", h2, params["wf"][m])
                    + params["bf"][m].reshape(1, 1, 1, -1))
    return jnp.stack(means), jnp.stack(diags), jnp.stack(facs)


# ----------------------------------------------------------------------------
if __name__ == "__main__":
    number_of_models = 3
    input_channels = 4
    num_classes = 1
    num_filters = 32
    rank = 5
    batch, H, W = 2, 16, 16

    key = jax.random.PRNGKey(0)
    k_img, k_par = jax.random.split(key)
    image = jax.random.normal(k_img, (batch, input_channels, H, W), jnp.float32)
    params = init_ensemble_params(k_par, number_of_models, input_channels,
                                  num_classes, num_filters, rank)

    outputs = ensemble_ssn_forward(image, params, num_classes, rank)

    assert len(outputs) == number_of_models
    for logit_mean, out_dict in outputs:
        jax.block_until_ready(logit_mean)
        jax.block_until_ready(out_dict["cov_diag"])
        jax.block_until_ready(out_dict["cov_factor"])
        assert logit_mean.shape == (batch, num_classes, H, W)
        assert out_dict["cov_diag"].shape == (batch, H * W * num_classes)
        assert out_dict["cov_factor"].shape == (batch, H * W * num_classes, rank)

    # spot-check against a pure-JAX f32 reference (bf16 conv path -> loose tol)
    nc = num_classes
    x_nhwc = jnp.transpose(image, (0, 2, 3, 1))
    ref_mean, ref_diag, ref_fac = _reference_forward(x_nhwc, params, nc, rank)
    for m, (logit_mean, out_dict) in enumerate(outputs):
        got_mean = jnp.transpose(logit_mean, (0, 2, 3, 1))
        got_diag = jnp.transpose(
            out_dict["cov_diag"].reshape(batch, nc, H, W), (0, 2, 3, 1))
        got_fac = jnp.transpose(
            jnp.transpose(out_dict["cov_factor"], (0, 2, 1))
            .reshape(batch, rank * nc, H, W), (0, 2, 3, 1))
        err_m = float(jnp.max(jnp.abs(got_mean - ref_mean[m])))
        err_d = float(jnp.max(jnp.abs(got_diag - ref_diag[m])))
        err_f = float(jnp.max(jnp.abs(got_fac - ref_fac[m])))
        assert max(err_m, err_d, err_f) < 5e-2, (m, err_m, err_d, err_f)

    print("KERNEL_OK")
</pallas_src>

<mosaic_0001>
module attributes {stable_mosaic.version = 11 : i64} {
  func.func @_fused_ssn_kernel(%arg0: i32, %arg1: memref<1x37x324xbf16, #tpu.memory_space<vmem>>, %arg2: memref<3x32x37xbf16, #tpu.memory_space<vmem>>, %arg3: memref<3x32x1xf32, #tpu.memory_space<vmem>>, %arg4: memref<3x32x288xbf16, #tpu.memory_space<vmem>>, %arg5: memref<3x32x1xf32, #tpu.memory_space<vmem>>, %arg6: memref<3x7x32xf32, #tpu.memory_space<vmem>>, %arg7: memref<3x7x1xf32, #tpu.memory_space<vmem>>, %arg8: memref<1x3x7x324xf32, #tpu.memory_space<vmem>>, %arg9: memref<32x580xbf16, #tpu.memory_space<vmem>>, %arg10: memref<288x324xbf16, #tpu.memory_space<vmem>>) attributes {dimension_semantics = [#tpu.dimension_semantics<parallel>], iteration_bounds = array<i64: 2>, scalar_prefetch = 0 : i64, scratch_operands = 2 : i64, tpu.core_type = #tpu.core_type<tc>, window_params = [{transform_indices = @transform_0, window_bounds = array<i64: 1, 37, 324>}, {pipeline_mode = #tpu.pipeline_mode<synchronous>, transform_indices = @transform_1, window_bounds = array<i64: 3, 32, 37>}, {pipeline_mode = #tpu.pipeline_mode<synchronous>, transform_indices = @transform_2, window_bounds = array<i64: 3, 32, 1>}, {pipeline_mode = #tpu.pipeline_mode<synchronous>, transform_indices = @transform_3, window_bounds = array<i64: 3, 32, 288>}, {pipeline_mode = #tpu.pipeline_mode<synchronous>, transform_indices = @transform_4, window_bounds = array<i64: 3, 32, 1>}, {pipeline_mode = #tpu.pipeline_mode<synchronous>, transform_indices = @transform_5, window_bounds = array<i64: 3, 7, 32>}, {pipeline_mode = #tpu.pipeline_mode<synchronous>, transform_indices = @transform_6, window_bounds = array<i64: 3, 7, 1>}, {transform_indices = @transform_7, window_bounds = array<i64: 1, 3, 7, 324>}]} {
    %cst = arith.constant 0.000000e+00 : bf16
    %0 = vector.broadcast %cst : bf16 to vector<32x128xbf16>
    %c0 = arith.constant 0 : index
    %c0_0 = arith.constant 0 : index
    %1 = vector.load %arg9[%c0, %c0_0] : memref<32x580xbf16, #tpu.memory_space<vmem>>, vector<32x128xbf16>
    tpu.vector_store %arg9[%c0, %c0_0], %0 {strides = array<i32>} : memref<32x580xbf16, #tpu.memory_space<vmem>>, vector<32x128xbf16>,
    %cst_1 = arith.constant 0.000000e+00 : bf16
    %2 = vector.broadcast %cst_1 : bf16 to vector<32x128xbf16>
    %c0_2 = arith.constant 0 : index
    %c452 = arith.constant 452 : index
    %3 = vector.load %arg9[%c0_2, %c452] : memref<32x580xbf16, #tpu.memory_space<vmem>>, vector<32x128xbf16>
    tpu.vector_store %arg9[%c0_2, %c452], %2 {strides = array<i32>} : memref<32x580xbf16, #tpu.memory_space<vmem>>, vector<32x128xbf16>,
    %c0_3 = arith.constant 0 : index
    %c0_4 = arith.constant 0 : index
    %c0_5 = arith.constant 0 : index
    %4 = vector.load %arg1[%c0_3, %c0_4, %c0_5] : memref<1x37x324xbf16, #tpu.memory_space<vmem>>, vector<1x37x324xbf16>
    %5 = vector.shape_cast %4 : vector<1x37x324xbf16> to vector<37x324xbf16>
    %c0_6 = arith.constant 0 : index
    %c0_7 = arith.constant 0 : index
    %c0_8 = arith.constant 0 : index
    %6 = vector.load %arg2[%c0_6, %c0_7, %c0_8] : memref<3x32x37xbf16, #tpu.memory_space<vmem>>, vector<1x32x37xbf16>
    %7 = vector.shape_cast %6 : vector<1x32x37xbf16> to vector<32x37xbf16>
    %cst_9 = arith.constant dense<0.000000e+00> : vector<32x324xf32>
    %8 = tpu.matmul %7, %5, %cst_9 {dimension_numbers = #tpu.dot_dimension_numbers<[1], [0], [0], [1], [0, 0, 1, 1], [], []>} : vector<32x37xbf16>, vector<37x324xbf16>, vector<32x324xf32> -> vector<32x324xf32>
    %c0_10 = arith.constant 0 : index
    %c0_11 = arith.constant 0 : index
    %c0_12 = arith.constant 0 : index
    %9 = vector.load %arg3[%c0_10, %c0_11, %c0_12] : memref<3x32x1xf32, #tpu.memory_space<vmem>>, vector<1x32x1xf32>
    %10 = vector.shape_cast %9 : vector<1x32x1xf32> to vector<32x1xf32>
    %11 = vector.broadcast %10 : vector<32x1xf32> to vector<32x324xf32>
    %12 = arith.addf %8, %11 : vector<32x324xf32>
    %cst_13 = arith.constant 0.000000e+00 : f32
    %13 = vector.broadcast %cst_13 : f32 to vector<32x324xf32>
    %14 = arith.maximumf %12, %13 : vector<32x324xf32>
    %15 = arith.truncf %14 : vector<32x324xf32> to vector<32x324xbf16>
    %c0_14 = arith.constant 0 : index
    %c128 = arith.constant 128 : index
    %16 = vector.load %arg9[%c0_14, %c128] : memref<32x580xbf16, #tpu.memory_space<vmem>>, vector<32x324xbf16>
    tpu.vector_store %arg9[%c0_14, %c128], %15 {strides = array<i32>} : memref<32x580xbf16, #tpu.memory_space<vmem>>, vector<32x324xbf16>,
    %c0_15 = arith.constant 0 : index
    %c109 = arith.constant 109 : index
    %17 = vector.load %arg9[%c0_15, %c109] : memref<32x580xbf16, #tpu.memory_space<vmem>>, vector<32x324xbf16>
    %c0_16 = arith.constant 0 : index
    %c0_17 = arith.constant 0 : index
    %18 = vector.load %arg10[%c0_16, %c0_17] : memref<288x324xbf16, #tpu.memory_space<vmem>>, vector<32x324xbf16>
    tpu.vector_store %arg10[%c0_16, %c0_17], %17 {strides = array<i32>} : memref<288x324xbf16, #tpu.memory_space<vmem>>, vector<32x324xbf16>,
    %c0_18 = arith.constant 0 : index
    %c110 = arith.constant 110 : index
    %19 = vector.load %arg9[%c0_18, %c110] : memref<32x580xbf16, #tpu.memory_space<vmem>>, vector<32x324xbf16>
    %c32 = arith.constant 32 : index
    %c0_19 = arith.constant 0 : index
    %20 = vector.load %arg10[%c32, %c0_19] : memref<288x324xbf16, #tpu.memory_space<vmem>>, vector<32x324xbf16>
    tpu.vector_store %arg10[%c32, %c0_19], %19 {strides = array<i32>} : memref<288x324xbf16, #tpu.memory_space<vmem>>, vector<32x324xbf16>,
    %c0_20 = arith.constant 0 : index
    %c111 = arith.constant 111 : index
    %21 = vector.load %arg9[%c0_20, %c111] : memref<32x580xbf16, #tpu.memory_space<vmem>>, vector<32x324xbf16>
    %c64 = arith.constant 64 : index
    %c0_21 = arith.constant 0 : index
    %22 = vector.load %arg10[%c64, %c0_21] : memref<288x324xbf16, #tpu.memory_space<vmem>>, vector<32x324xbf16>
    tpu.vector_store %arg10[%c64, %c0_21], %21 {strides = array<i32>} : memref<288x324xbf16, #tpu.memory_space<vmem>>, vector<32x324xbf16>,
    %c0_22 = arith.constant 0 : index
    %c127 = arith.constant 127 : index
    %23 = vector.load %arg9[%c0_22, %c127] : memref<32x580xbf16, #tpu.memory_space<vmem>>, vector<32x324xbf16>
    %c96 = arith.constant 96 : index
    %c0_23 = arith.constant 0 : index
    %24 = vector.load %arg10[%c96, %c0_23] : memref<288x324xbf16, #tpu.memory_space<vmem>>, vector<32x324xbf16>
    tpu.vector_store %arg10[%c96, %c0_23], %23 {strides = array<i32>} : memref<288x324xbf16, #tpu.memory_space<vmem>>, vector<32x324xbf16>,
    %c0_24 = arith.constant 0 : index
    %c128_25 = arith.constant 128 : index
    %25 = vector.load %arg9[%c0_24, %c128_25] : memref<32x580xbf16, #tpu.memory_space<vmem>>, vector<32x324xbf16>
    %c128_26 = arith.constant 128 : index
    %c0_27 = arith.constant 0 : index
    %26 = vector.load %arg10[%c128_26, %c0_27] : memref<288x324xbf16, #tpu.memory_space<vmem>>, vector<32x324xbf16>
    tpu.vector_store %arg10[%c128_26, %c0_27], %25 {strides = array<i32>} : memref<288x324xbf16, #tpu.memory_space<vmem>>, vector<32x324xbf16>,
    %c0_28 = arith.constant 0 : index
    %c129 = arith.constant 129 : index
    %27 = vector.load %arg9[%c0_28, %c129] : memref<32x580xbf16, #tpu.memory_space<vmem>>, vector<32x324xbf16>
    %c160 = arith.constant 160 : index
    %c0_29 = arith.constant 0 : index
    %28 = vector.load %arg10[%c160, %c0_29] : memref<288x324xbf16, #tpu.memory_space<vmem>>, vector<32x324xbf16>
    tpu.vector_store %arg10[%c160, %c0_29], %27 {strides = array<i32>} : memref<288x324xbf16, #tpu.memory_space<vmem>>, vector<32x324xbf16>,
    %c0_30 = arith.constant 0 : index
    %c145 = arith.constant 145 : index
    %29 = vector.load %arg9[%c0_30, %c145] : memref<32x580xbf16, #tpu.memory_space<vmem>>, vector<32x324xbf16>
    %c192 = arith.constant 192 : index
    %c0_31 = arith.constant 0 : index
    %30 = vector.load %arg10[%c192, %c0_31] : memref<288x324xbf16, #tpu.memory_space<vmem>>, vector<32x324xbf16>
    tpu.vector_store %arg10[%c192, %c0_31], %29 {strides = array<i32>} : memref<288x324xbf16, #tpu.memory_space<vmem>>, vector<32x324xbf16>,
    %c0_32 = arith.constant 0 : index
    %c146 = arith.constant 146 : index
    %31 = vector.load %arg9[%c0_32, %c146] : memref<32x580xbf16, #tpu.memory_space<vmem>>, vector<32x324xbf16>
    %c224 = arith.constant 224 : index
    %c0_33 = arith.constant 0 : index
    %32 = vector.load %arg10[%c224, %c0_33] : memref<288x324xbf16, #tpu.memory_space<vmem>>, vector<32x324xbf16>
    tpu.vector_store %arg10[%c224, %c0_33], %31 {strides = array<i32>} : memref<288x324xbf16, #tpu.memory_space<vmem>>, vector<32x324xbf16>,
    %c0_34 = arith.constant 0 : index
    %c147 = arith.constant 147 : index
    %33 = vector.load %arg9[%c0_34, %c147] : memref<32x580xbf16, #tpu.memory_space<vmem>>, vector<32x324xbf16>
    %c256 = arith.constant 256 : index
    %c0_35 = arith.constant 0 : index
    %34 = vector.load %arg10[%c256, %c0_35] : memref<288x324xbf16, #tpu.memory_space<vmem>>, vector<32x324xbf16>
    tpu.vector_store %arg10[%c256, %c0_35], %33 {strides = array<i32>} : memref<288x324xbf16, #tpu.memory_space<vmem>>, vector<32x324xbf16>,
    %c0_36 = arith.constant 0 : index
    %c0_37 = arith.constant 0 : index
    %c0_38 = arith.constant 0 : index
    %35 = vector.load %arg4[%c0_36, %c0_37, %c0_38] : memref<3x32x288xbf16, #tpu.memory_space<vmem>>, vector<1x32x288xbf16>
    %36 = vector.shape_cast %35 : vector<1x32x288xbf16> to vector<32x288xbf16>
    %c0_39 = arith.constant 0 : index
    %c0_40 = arith.constant 0 : index
    %37 = vector.load %arg10[%c0_39, %c0_40] : memref<288x324xbf16, #tpu.memory_space<vmem>>, vector<288x324xbf16>
    %cst_41 = arith.constant dense<0.000000e+00> : vector<32x324xf32>
    %38 = tpu.matmul %36, %37, %cst_41 {dimension_numbers = #tpu.dot_dimension_numbers<[1], [0], [0], [1], [0, 0, 1, 1], [], []>} : vector<32x288xbf16>, vector<288x324xbf16>, vector<32x324xf32> -> vector<32x324xf32>
    %c0_42 = arith.constant 0 : index
    %c0_43 = arith.constant 0 : index
    %c0_44 = arith.constant 0 : index
    %39 = vector.load %arg5[%c0_42, %c0_43, %c0_44] : memref<3x32x1xf32, #tpu.memory_space<vmem>>, vector<1x32x1xf32>
    %40 = vector.shape_cast %39 : vector<1x32x1xf32> to vector<32x1xf32>
    %41 = vector.broadcast %40 : vector<32x1xf32> to vector<32x324xf32>
    %42 = arith.addf %38, %41 : vector<32x324xf32>
    %cst_45 = arith.constant 0.000000e+00 : f32
    %43 = vector.broadcast %cst_45 : f32 to vector<32x324xf32>
    %44 = arith.maximumf %42, %43 : vector<32x324xf32>
    %c0_46 = arith.constant 0 : index
    %c0_47 = arith.constant 0 : index
    %c0_48 = arith.constant 0 : index
    %45 = vector.load %arg6[%c0_46, %c0_47, %c0_48] : memref<3x7x32xf32, #tpu.memory_space<vmem>>, vector<1x7x32xf32>
    %46 = vector.shape_cast %45 : vector<1x7x32xf32> to vector<7x32xf32>
    %cst_49 = arith.constant dense<0.000000e+00> : vector<7x324xf32>
    %47 = tpu.matmul %46, %44, %cst_49 {dimension_numbers = #tpu.dot_dimension_numbers<[1], [0], [0], [1], [0, 0, 1, 1], [], []>} : vector<7x32xf32>, vector<32x324xf32>, vector<7x324xf32> -> vector<7x324xf32>
    %c0_50 = arith.constant 0 : index
    %c0_51 = arith.constant 0 : index
    %c0_52 = arith.constant 0 : index
    %48 = vector.load %arg7[%c0_50, %c0_51, %c0_52] : memref<3x7x1xf32, #tpu.memory_space<vmem>>, vector<1x7x1xf32>
    %49 = vector.shape_cast %48 : vector<1x7x1xf32> to vector<7x1xf32>
    %50 = vector.broadcast %49 : vector<7x1xf32> to vector<7x324xf32>
    %51 = arith.addf %47, %50 : vector<7x324xf32>
    %52 = tpu.iota {dimensions = array<i32: 0>} : vector<7x324xi32>
    %c1_i32 = arith.constant 1 : i32
    %53 = vector.broadcast %c1_i32 : i32 to vector<7x324xi32>
    %54 = arith.cmpi sge, %52, %53 : vector<7x324xi32>
    %c2_i32 = arith.constant 2 : i32
    %55 = vector.broadcast %c2_i32 : i32 to vector<7x324xi32>
    %56 = arith.cmpi slt, %52, %55 : vector<7x324xi32>
    %57 = arith.andi %54, %56 : vector<7x324xi1>
    %cst_53 = arith.constant 0.000000e+00 : f32
    %58 = vector.broadcast %cst_53 : f32 to vector<7x324xf32>
    %59 = arith.select %57, %51, %58 : vector<7x324xi1>, vector<7x324xf32>
    %60 = math.exp %59 : vector<7x324xf32>
    %61 = arith.select %57, %60, %51 : vector<7x324xi1>, vector<7x324xf32>
    %c0_54 = arith.constant 0 : index
    %c0_55 = arith.constant 0 : index
    %c0_56 = arith.constant 0 : index
    %c0_57 = arith.constant 0 : index
    %62 = vector.load %arg8[%c0_54, %c0_55, %c0_56, %c0_57] : memref<1x3x7x324xf32, #tpu.memory_space<vmem>>, vector<1x1x7x324xf32>
    %63 = vector.shape_cast %62 : vector<1x1x7x324xf32> to vector<7x324xf32>
    %64 = vector.shape_cast %61 : vector<7x324xf32> to vector<1x1x7x324xf32>
    tpu.vector_store %arg8[%c0_54, %c0_55, %c0_56, %c0_57], %64 {strides = array<i32>} : memref<1x3x7x324xf32, #tpu.memory_space<vmem>>, vector<1x1x7x324xf32>,
    %c1 = arith.constant 1 : index
    %c0_58 = arith.constant 0 : index
    %c0_59 = arith.constant 0 : index
    %65 = vector.load %arg2[%c1, %c0_58, %c0_59] : memref<3x32x37xbf16, #tpu.memory_space<vmem>>, vector<1x32x37xbf16>
    %66 = vector.shape_cast %65 : vector<1x32x37xbf16> to vector<32x37xbf16>
    %cst_60 = arith.constant dense<0.000000e+00> : vector<32x324xf32>
    %67 = tpu.matmul %66, %5, %cst_60 {dimension_numbers = #tpu.dot_dimension_numbers<[1], [0], [0], [1], [0, 0, 1, 1], [], []>} : vector<32x37xbf16>, vector<37x324xbf16>, vector<32x324xf32> -> vector<32x324xf32>
    %c1_61 = arith.constant 1 : index
    %c0_62 = arith.constant 0 : index
    %c0_63 = arith.constant 0 : index
    %68 = vector.load %arg3[%c1_61, %c0_62, %c0_63] : memref<3x32x1xf32, #tpu.memory_space<vmem>>, vector<1x32x1xf32>
    %69 = vector.shape_cast %68 : vector<1x32x1xf32> to vector<32x1xf32>
    %70 = vector.broadcast %69 : vector<32x1xf32> to vector<32x324xf32>
    %71 = arith.addf %67, %70 : vector<32x324xf32>
    %cst_64 = arith.constant 0.000000e+00 : f32
    %72 = vector.broadcast %cst_64 : f32 to vector<32x324xf32>
    %73 = arith.maximumf %71, %72 : vector<32x324xf32>
    %74 = arith.truncf %73 : vector<32x324xf32> to vector<32x324xbf16>
    %c0_65 = arith.constant 0 : index
    %c128_66 = arith.constant 128 : index
    %75 = vector.load %arg9[%c0_65, %c128_66] : memref<32x580xbf16, #tpu.memory_space<vmem>>, vector<32x324xbf16>
    tpu.vector_store %arg9[%c0_65, %c128_66], %74 {strides = array<i32>} : memref<32x580xbf16, #tpu.memory_space<vmem>>, vector<32x324xbf16>,
    %c0_67 = arith.constant 0 : index
    %c109_68 = arith.constant 109 : index
    %76 = vector.load %arg9[%c0_67, %c109_68] : memref<32x580xbf16, #tpu.memory_space<vmem>>, vector<32x324xbf16>
    %c0_69 = arith.constant 0 : index
    %c0_70 = arith.constant 0 : index
    %77 = vector.load %arg10[%c0_69, %c0_70] : memref<288x324xbf16, #tpu.memory_space<vmem>>, vector<32x324xbf16>
    tpu.vector_store %arg10[%c0_69, %c0_70], %76 {strides = array<i32>} : memref<288x324xbf16, #tpu.memory_space<vmem>>, vector<32x324xbf16>,
    %c0_71 = arith.constant 0 : index
    %c110_72 = arith.constant 110 : index
    %78 = vector.load %arg9[%c0_71, %c110_72] : memref<32x580xbf16, #tpu.memory_space<vmem>>, vector<32x324xbf16>
    %c32_73 = arith.constant 32 : index
    %c0_74 = arith.constant 0 : index
    %79 = vector.load %arg10[%c32_73, %c0_74] : memref<288x324xbf16, #tpu.memory_space<vmem>>, vector<32x324xbf16>
    tpu.vector_store %arg10[%c32_73, %c0_74], %78 {strides = array<i32>} : memref<288x324xbf16, #tpu.memory_space<vmem>>, vector<32x324xbf16>,
    %c0_75 = arith.constant 0 : index
    %c111_76 = arith.constant 111 : index
    %80 = vector.load %arg9[%c0_75, %c111_76] : memref<32x580xbf16, #tpu.memory_space<vmem>>, vector<32x324xbf16>
    %c64_77 = arith.constant 64 : index
    %c0_78 = arith.constant 0 : index
    %81 = vector.load %arg10[%c64_77, %c0_78] : memref<288x324xbf16, #tpu.memory_space<vmem>>, vector<32x324xbf16>
    tpu.vector_store %arg10[%c64_77, %c0_78], %80 {strides = array<i32>} : memref<288x324xbf16, #tpu.memory_space<vmem>>, vector<32x324xbf16>,
    %c0_79 = arith.constant 0 : index
    %c127_80 = arith.constant 127 : index
    %82 = vector.load %arg9[%c0_79, %c127_80] : memref<32x580xbf16, #tpu.memory_space<vmem>>, vector<32x324xbf16>
    %c96_81 = arith.constant 96 : index
    %c0_82 = arith.constant 0 : index
    %83 = vector.load %arg10[%c96_81, %c0_82] : memref<288x324xbf16, #tpu.memory_space<vmem>>, vector<32x324xbf16>
    tpu.vector_store %arg10[%c96_81, %c0_82], %82 {strides = array<i32>} : memref<288x324xbf16, #tpu.memory_space<vmem>>, vector<32x324xbf16>,
    %c0_83 = arith.constant 0 : index
    %c128_84 = arith.constant 128 : index
    %84 = vector.load %arg9[%c0_83, %c128_84] : memref<32x580xbf16, #tpu.memory_space<vmem>>, vector<32x324xbf16>
    %c128_85 = arith.constant 128 : index
    %c0_86 = arith.constant 0 : index
    %85 = vector.load %arg10[%c128_85, %c0_86] : memref<288x324xbf16, #tpu.memory_space<vmem>>, vector<32x324xbf16>
    tpu.vector_store %arg10[%c128_85, %c0_86], %84 {strides = array<i32>} : memref<288x324xbf16, #tpu.memory_space<vmem>>, vector<32x324xbf16>,
    %c0_87 = arith.constant 0 : index
    %c129_88 = arith.constant 129 : index
    %86 = vector.load %arg9[%c0_87, %c129_88] : memref<32x580xbf16, #tpu.memory_space<vmem>>, vector<32x324xbf16>
    %c160_89 = arith.constant 160 : index
    %c0_90 = arith.constant 0 : index
    %87 = vector.load %arg10[%c160_89, %c0_90] : memref<288x324xbf16, #tpu.memory_space<vmem>>, vector<32x324xbf16>
    tpu.vector_store %arg10[%c160_89, %c0_90], %86 {strides = array<i32>} : memref<288x324xbf16, #tpu.memory_space<vmem>>, vector<32x324xbf16>,
    %c0_91 = arith.constant 0 : index
    %c145_92 = arith.constant 145 : index
    %88 = vector.load %arg9[%c0_91, %c145_92] : memref<32x580xbf16, #tpu.memory_space<vmem>>, vector<32x324xbf16>
    %c192_93 = arith.constant 192 : index
    %c0_94 = arith.constant 0 : index
    %89 = vector.load %arg10[%c192_93, %c0_94] : memref<288x324xbf16, #tpu.memory_space<vmem>>, vector<32x324xbf16>
    tpu.vector_store %arg10[%c192_93, %c0_94], %88 {strides = array<i32>} : memref<288x324xbf16, #tpu.memory_space<vmem>>, vector<32x324xbf16>,
    %c0_95 = arith.constant 0 : index
    %c146_96 = arith.constant 146 : index
    %90 = vector.load %arg9[%c0_95, %c146_96] : memref<32x580xbf16, #tpu.memory_space<vmem>>, vector<32x324xbf16>
    %c224_97 = arith.constant 224 : index
    %c0_98 = arith.constant 0 : index
    %91 = vector.load %arg10[%c224_97, %c0_98] : memref<288x324xbf16, #tpu.memory_space<vmem>>, vector<32x324xbf16>
    tpu.vector_store %arg10[%c224_97, %c0_98], %90 {strides = array<i32>} : memref<288x324xbf16, #tpu.memory_space<vmem>>, vector<32x324xbf16>,
    %c0_99 = arith.constant 0 : index
    %c147_100 = arith.constant 147 : index
    %92 = vector.load %arg9[%c0_99, %c147_100] : memref<32x580xbf16, #tpu.memory_space<vmem>>, vector<32x324xbf16>
    %c256_101 = arith.constant 256 : index
    %c0_102 = arith.constant 0 : index
    %93 = vector.load %arg10[%c256_101, %c0_102] : memref<288x324xbf16, #tpu.memory_space<vmem>>, vector<32x324xbf16>
    tpu.vector_store %arg10[%c256_101, %c0_102], %92 {strides = array<i32>} : memref<288x324xbf16, #tpu.memory_space<vmem>>, vector<32x324xbf16>,
    %c1_103 = arith.constant 1 : index
    %c0_104 = arith.constant 0 : index
    %c0_105 = arith.constant 0 : index
    %94 = vector.load %arg4[%c1_103, %c0_104, %c0_105] : memref<3x32x288xbf16, #tpu.memory_space<vmem>>, vector<1x32x288xbf16>
    %95 = vector.shape_cast %94 : vector<1x32x288xbf16> to vector<32x288xbf16>
    %c0_106 = arith.constant 0 : index
    %c0_107 = arith.constant 0 : index
    %96 = vector.load %arg10[%c0_106, %c0_107] : memref<288x324xbf16, #tpu.memory_space<vmem>>, vector<288x324xbf16>
    %cst_108 = arith.constant dense<0.000000e+00> : vector<32x324xf32>
    %97 = tpu.matmul %95, %96, %cst_108 {dimension_numbers = #tpu.dot_dimension_numbers<[1], [0], [0], [1], [0, 0, 1, 1], [], []>} : vector<32x288xbf16>, vector<288x324xbf16>, vector<32x324xf32> -> vector<32x324xf32>
    %c1_109 = arith.constant 1 : index
    %c0_110 = arith.constant 0 : index
    %c0_111 = arith.constant 0 : index
    %98 = vector.load %arg5[%c1_109, %c0_110, %c0_111] : memref<3x32x1xf32, #tpu.memory_space<vmem>>, vector<1x32x1xf32>
    %99 = vector.shape_cast %98 : vector<1x32x1xf32> to vector<32x1xf32>
    %100 = vector.broadcast %99 : vector<32x1xf32> to vector<32x324xf32>
    %101 = arith.addf %97, %100 : vector<32x324xf32>
    %cst_112 = arith.constant 0.000000e+00 : f32
    %102 = vector.broadcast %cst_112 : f32 to vector<32x324xf32>
    %103 = arith.maximumf %101, %102 : vector<32x324xf32>
    %c1_113 = arith.constant 1 : index
    %c0_114 = arith.constant 0 : index
    %c0_115 = arith.constant 0 : index
    %104 = vector.load %arg6[%c1_113, %c0_114, %c0_115] : memref<3x7x32xf32, #tpu.memory_space<vmem>>, vector<1x7x32xf32>
    %105 = vector.shape_cast %104 : vector<1x7x32xf32> to vector<7x32xf32>
    %cst_116 = arith.constant dense<0.000000e+00> : vector<7x324xf32>
    %106 = tpu.matmul %105, %103, %cst_116 {dimension_numbers = #tpu.dot_dimension_numbers<[1], [0], [0], [1], [0, 0, 1, 1], [], []>} : vector<7x32xf32>, vector<32x324xf32>, vector<7x324xf32> -> vector<7x324xf32>
    %c1_117 = arith.constant 1 : index
    %c0_118 = arith.constant 0 : index
    %c0_119 = arith.constant 0 : index
    %107 = vector.load %arg7[%c1_117, %c0_118, %c0_119] : memref<3x7x1xf32, #tpu.memory_space<vmem>>, vector<1x7x1xf32>
    %108 = vector.shape_cast %107 : vector<1x7x1xf32> to vector<7x1xf32>
    %109 = vector.broadcast %108 : vector<7x1xf32> to vector<7x324xf32>
    %110 = arith.addf %106, %109 : vector<7x324xf32>
    %111 = tpu.iota {dimensions = array<i32: 0>} : vector<7x324xi32>
    %c1_i32_120 = arith.constant 1 : i32
    %112 = vector.broadcast %c1_i32_120 : i32 to vector<7x324xi32>
    %113 = arith.cmpi sge, %111, %112 : vector<7x324xi32>
    %c2_i32_121 = arith.constant 2 : i32
    %114 = vector.broadcast %c2_i32_121 : i32 to vector<7x324xi32>
    %115 = arith.cmpi slt, %111, %114 : vector<7x324xi32>
    %116 = arith.andi %113, %115 : vector<7x324xi1>
    %cst_122 = arith.constant 0.000000e+00 : f32
    %117 = vector.broadcast %cst_122 : f32 to vector<7x324xf32>
    %118 = arith.select %116, %110, %117 : vector<7x324xi1>, vector<7x324xf32>
    %119 = math.exp %118 : vector<7x324xf32>
    %120 = arith.select %116, %119, %110 : vector<7x324xi1>, vector<7x324xf32>
    %c0_123 = arith.constant 0 : index
    %c1_124 = arith.constant 1 : index
    %c0_125 = arith.constant 0 : index
    %c0_126 = arith.constant 0 : index
    %121 = vector.load %arg8[%c0_123, %c1_124, %c0_125, %c0_126] : memref<1x3x7x324xf32, #tpu.memory_space<vmem>>, vector<1x1x7x324xf32>
    %122 = vector.shape_cast %121 : vector<1x1x7x324xf32> to vector<7x324xf32>
    %123 = vector.shape_cast %120 : vector<7x324xf32> to vector<1x1x7x324xf32>
    tpu.vector_store %arg8[%c0_123, %c1_124, %c0_125, %c0_126], %123 {strides = array<i32>} : memref<1x3x7x324xf32, #tpu.memory_space<vmem>>, vector<1x1x7x324xf32>,
    %c2 = arith.constant 2 : index
    %c0_127 = arith.constant 0 : index
    %c0_128 = arith.constant 0 : index
    %124 = vector.load %arg2[%c2, %c0_127, %c0_128] : memref<3x32x37xbf16, #tpu.memory_space<vmem>>, vector<1x32x37xbf16>
    %125 = vector.shape_cast %124 : vector<1x32x37xbf16> to vector<32x37xbf16>
    %cst_129 = arith.constant dense<0.000000e+00> : vector<32x324xf32>
    %126 = tpu.matmul %125, %5, %cst_129 {dimension_numbers = #tpu.dot_dimension_numbers<[1], [0], [0], [1], [0, 0, 1, 1], [], []>} : vector<32x37xbf16>, vector<37x324xbf16>, vector<32x324xf32> -> vector<32x324xf32>
    %c2_130 = arith.constant 2 : index
    %c0_131 = arith.constant 0 : index
    %c0_132 = arith.constant 0 : index
    %127 = vector.load %arg3[%c2_130, %c0_131, %c0_132] : memref<3x32x1xf32, #tpu.memory_space<vmem>>, vector<1x32x1xf32>
    %128 = vector.shape_cast %127 : vector<1x32x1xf32> to vector<32x1xf32>
    %129 = vector.broadcast %128 : vector<32x1xf32> to vector<32x324xf32>
    %130 = arith.addf %126, %129 : vector<32x324xf32>
    %cst_133 = arith.constant 0.000000e+00 : f32
    %131 = vector.broadcast %cst_133 : f32 to vector<32x324xf32>
    %132 = arith.maximumf %130, %131 : vector<32x324xf32>
    %133 = arith.truncf %132 : vector<32x324xf32> to vector<32x324xbf16>
    %c0_134 = arith.constant 0 : index
    %c128_135 = arith.constant 128 : index
    %134 = vector.load %arg9[%c0_134, %c128_135] : memref<32x580xbf16, #tpu.memory_space<vmem>>, vector<32x324xbf16>
    tpu.vector_store %arg9[%c0_134, %c128_135], %133 {strides = array<i32>} : memref<32x580xbf16, #tpu.memory_space<vmem>>, vector<32x324xbf16>,
    %c0_136 = arith.constant 0 : index
    %c109_137 = arith.constant 109 : index
    %135 = vector.load %arg9[%c0_136, %c109_137] : memref<32x580xbf16, #tpu.memory_space<vmem>>, vector<32x324xbf16>
    %c0_138 = arith.constant 0 : index
    %c0_139 = arith.constant 0 : index
    %136 = vector.load %arg10[%c0_138, %c0_139] : memref<288x324xbf16, #tpu.memory_space<vmem>>, vector<32x324xbf16>
    tpu.vector_store %arg10[%c0_138, %c0_139], %135 {strides = array<i32>} : memref<288x324xbf16, #tpu.memory_space<vmem>>, vector<32x324xbf16>,
    %c0_140 = arith.constant 0 : index
    %c110_141 = arith.constant 110 : index
    %137 = vector.load %arg9[%c0_140, %c110_141] : memref<32x580xbf16, #tpu.memory_space<vmem>>, vector<32x324xbf16>
    %c32_142 = arith.constant 32 : index
    %c0_143 = arith.constant 0 : index
    %138 = vector.load %arg10[%c32_142, %c0_143] : memref<288x324xbf16, #tpu.memory_space<vmem>>, vector<32x324xbf16>
    tpu.vector_store %arg10[%c32_142, %c0_143], %137 {strides = array<i32>} : memref<288x324xbf16, #tpu.memory_space<vmem>>, vector<32x324xbf16>,
    %c0_144 = arith.constant 0 : index
    %c111_145 = arith.constant 111 : index
    %139 = vector.load %arg9[%c0_144, %c111_145] : memref<32x580xbf16, #tpu.memory_space<vmem>>, vector<32x324xbf16>
    %c64_146 = arith.constant 64 : index
    %c0_147 = arith.constant 0 : index
    %140 = vector.load %arg10[%c64_146, %c0_147] : memref<288x324xbf16, #tpu.memory_space<vmem>>, vector<32x324xbf16>
    tpu.vector_store %arg10[%c64_146, %c0_147], %139 {strides = array<i32>} : memref<288x324xbf16, #tpu.memory_space<vmem>>, vector<32x324xbf16>,
    %c0_148 = arith.constant 0 : index
    %c127_149 = arith.constant 127 : index
    %141 = vector.load %arg9[%c0_148, %c127_149] : memref<32x580xbf16, #tpu.memory_space<vmem>>, vector<32x324xbf16>
    %c96_150 = arith.constant 96 : index
    %c0_151 = arith.constant 0 : index
    %142 = vector.load %arg10[%c96_150, %c0_151] : memref<288x324xbf16, #tpu.memory_space<vmem>>, vector<32x324xbf16>
    tpu.vector_store %arg10[%c96_150, %c0_151], %141 {strides = array<i32>} : memref<288x324xbf16, #tpu.memory_space<vmem>>, vector<32x324xbf16>,
    %c0_152 = arith.constant 0 : index
    %c128_153 = arith.constant 128 : index
    %143 = vector.load %arg9[%c0_152, %c128_153] : memref<32x580xbf16, #tpu.memory_space<vmem>>, vector<32x324xbf16>
    %c128_154 = arith.constant 128 : index
    %c0_155 = arith.constant 0 : index
    %144 = vector.load %arg10[%c128_154, %c0_155] : memref<288x324xbf16, #tpu.memory_space<vmem>>, vector<32x324xbf16>
    tpu.vector_store %arg10[%c128_154, %c0_155], %143 {strides = array<i32>} : memref<288x324xbf16, #tpu.memory_space<vmem>>, vector<32x324xbf16>,
    %c0_156 = arith.constant 0 : index
    %c129_157 = arith.constant 129 : index
    %145 = vector.load %arg9[%c0_156, %c129_157] : memref<32x580xbf16, #tpu.memory_space<vmem>>, vector<32x324xbf16>
    %c160_158 = arith.constant 160 : index
    %c0_159 = arith.constant 0 : index
    %146 = vector.load %arg10[%c160_158, %c0_159] : memref<288x324xbf16, #tpu.memory_space<vmem>>, vector<32x324xbf16>
    tpu.vector_store %arg10[%c160_158, %c0_159], %145 {strides = array<i32>} : memref<288x324xbf16, #tpu.memory_space<vmem>>, vector<32x324xbf16>,
    %c0_160 = arith.constant 0 : index
    %c145_161 = arith.constant 145 : index
    %147 = vector.load %arg9[%c0_160, %c145_161] : memref<32x580xbf16, #tpu.memory_space<vmem>>, vector<32x324xbf16>
    %c192_162 = arith.constant 192 : index
    %c0_163 = arith.constant 0 : index
    %148 = vector.load %arg10[%c192_162, %c0_163] : memref<288x324xbf16, #tpu.memory_space<vmem>>, vector<32x324xbf16>
    tpu.vector_store %arg10[%c192_162, %c0_163], %147 {strides = array<i32>} : memref<288x324xbf16, #tpu.memory_space<vmem>>, vector<32x324xbf16>,
    %c0_164 = arith.constant 0 : index
    %c146_165 = arith.constant 146 : index
    %149 = vector.load %arg9[%c0_164, %c146_165] : memref<32x580xbf16, #tpu.memory_space<vmem>>, vector<32x324xbf16>
    %c224_166 = arith.constant 224 : index
    %c0_167 = arith.constant 0 : index
    %150 = vector.load %arg10[%c224_166, %c0_167] : memref<288x324xbf16, #tpu.memory_space<vmem>>, vector<32x324xbf16>
    tpu.vector_store %arg10[%c224_166, %c0_167], %149 {strides = array<i32>} : memref<288x324xbf16, #tpu.memory_space<vmem>>, vector<32x324xbf16>,
    %c0_168 = arith.constant 0 : index
    %c147_169 = arith.constant 147 : index
    %151 = vector.load %arg9[%c0_168, %c147_169] : memref<32x580xbf16, #tpu.memory_space<vmem>>, vector<32x324xbf16>
    %c256_170 = arith.constant 256 : index
    %c0_171 = arith.constant 0 : index
    %152 = vector.load %arg10[%c256_170, %c0_171] : memref<288x324xbf16, #tpu.memory_space<vmem>>, vector<32x324xbf16>
    tpu.vector_store %arg10[%c256_170, %c0_171], %151 {strides = array<i32>} : memref<288x324xbf16, #tpu.memory_space<vmem>>, vector<32x324xbf16>,
    %c2_172 = arith.constant 2 : index
    %c0_173 = arith.constant 0 : index
    %c0_174 = arith.constant 0 : index
    %153 = vector.load %arg4[%c2_172, %c0_173, %c0_174] : memref<3x32x288xbf16, #tpu.memory_space<vmem>>, vector<1x32x288xbf16>
    %154 = vector.shape_cast %153 : vector<1x32x288xbf16> to vector<32x288xbf16>
    %c0_175 = arith.constant 0 : index
    %c0_176 = arith.constant 0 : index
    %155 = vector.load %arg10[%c0_175, %c0_176] : memref<288x324xbf16, #tpu.memory_space<vmem>>, vector<288x324xbf16>
    %cst_177 = arith.constant dense<0.000000e+00> : vector<32x324xf32>
    %156 = tpu.matmul %154, %155, %cst_177 {dimension_numbers = #tpu.dot_dimension_numbers<[1], [0], [0], [1], [0, 0, 1, 1], [], []>} : vector<32x288xbf16>, vector<288x324xbf16>, vector<32x324xf32> -> vector<32x324xf32>
    %c2_178 = arith.constant 2 : index
    %c0_179 = arith.constant 0 : index
    %c0_180 = arith.constant 0 : index
    %157 = vector.load %arg5[%c2_178, %c0_179, %c0_180] : memref<3x32x1xf32, #tpu.memory_space<vmem>>, vector<1x32x1xf32>
    %158 = vector.shape_cast %157 : vector<1x32x1xf32> to vector<32x1xf32>
    %159 = vector.broadcast %158 : vector<32x1xf32> to vector<32x324xf32>
    %160 = arith.addf %156, %159 : vector<32x324xf32>
    %cst_181 = arith.constant 0.000000e+00 : f32
    %161 = vector.broadcast %cst_181 : f32 to vector<32x324xf32>
    %162 = arith.maximumf %160, %161 : vector<32x324xf32>
    %c2_182 = arith.constant 2 : index
    %c0_183 = arith.constant 0 : index
    %c0_184 = arith.constant 0 : index
    %163 = vector.load %arg6[%c2_182, %c0_183, %c0_184] : memref<3x7x32xf32, #tpu.memory_space<vmem>>, vector<1x7x32xf32>
    %164 = vector.shape_cast %163 : vector<1x7x32xf32> to vector<7x32xf32>
    %cst_185 = arith.constant dense<0.000000e+00> : vector<7x324xf32>
    %165 = tpu.matmul %164, %162, %cst_185 {dimension_numbers = #tpu.dot_dimension_numbers<[1], [0], [0], [1], [0, 0, 1, 1], [], []>} : vector<7x32xf32>, vector<32x324xf32>, vector<7x324xf32> -> vector<7x324xf32>
    %c2_186 = arith.constant 2 : index
    %c0_187 = arith.constant 0 : index
    %c0_188 = arith.constant 0 : index
    %166 = vector.load %arg7[%c2_186, %c0_187, %c0_188] : memref<3x7x1xf32, #tpu.memory_space<vmem>>, vector<1x7x1xf32>
    %167 = vector.shape_cast %166 : vector<1x7x1xf32> to vector<7x1xf32>
    %168 = vector.broadcast %167 : vector<7x1xf32> to vector<7x324xf32>
    %169 = arith.addf %165, %168 : vector<7x324xf32>
    %170 = tpu.iota {dimensions = array<i32: 0>} : vector<7x324xi32>
    %c1_i32_189 = arith.constant 1 : i32
    %171 = vector.broadcast %c1_i32_189 : i32 to vector<7x324xi32>
    %172 = arith.cmpi sge, %170, %171 : vector<7x324xi32>
    %c2_i32_190 = arith.constant 2 : i32
    %173 = vector.broadcast %c2_i32_190 : i32 to vector<7x324xi32>
    %174 = arith.cmpi slt, %170, %173 : vector<7x324xi32>
    %175 = arith.andi %172, %174 : vector<7x324xi1>
    %cst_191 = arith.constant 0.000000e+00 : f32
    %176 = vector.broadcast %cst_191 : f32 to vector<7x324xf32>
    %177 = arith.select %175, %169, %176 : vector<7x324xi1>, vector<7x324xf32>
    %178 = math.exp %177 : vector<7x324xf32>
    %179 = arith.select %175, %178, %169 : vector<7x324xi1>, vector<7x324xf32>
    %c0_192 = arith.constant 0 : index
    %c2_193 = arith.constant 2 : index
    %c0_194 = arith.constant 0 : index
    %c0_195 = arith.constant 0 : index
    %180 = vector.load %arg8[%c0_192, %c2_193, %c0_194, %c0_195] : memref<1x3x7x324xf32, #tpu.memory_space<vmem>>, vector<1x1x7x324xf32>
    %181 = vector.shape_cast %180 : vector<1x1x7x324xf32> to vector<7x324xf32>
    %182 = vector.shape_cast %179 : vector<7x324xf32> to vector<1x1x7x324xf32>
    tpu.vector_store %arg8[%c0_192, %c2_193, %c0_194, %c0_195], %182 {strides = array<i32>} : memref<1x3x7x324xf32, #tpu.memory_space<vmem>>, vector<1x1x7x324xf32>,
    return
  }
  func.func @transform_0(%arg0: i32) -> (i32, i32, i32) {
    %c0_i32 = arith.constant 0 : i32
    %c0_i32_0 = arith.constant 0 : i32
    %c0_i32_1 = arith.constant 0 : i32
    return %arg0, %c0_i32, %c0_i32_0 : i32, i32, i32
  }
  func.func @transform_1(%arg0: i32) -> (i32, i32, i32) {
    %c0_i32 = arith.constant 0 : i32
    %c0_i32_0 = arith.constant 0 : i32
    %c0_i32_1 = arith.constant 0 : i32
    %c0_i32_2 = arith.constant 0 : i32
    return %c0_i32, %c0_i32_0, %c0_i32_1 : i32, i32, i32
  }
  func.func @transform_2(%arg0: i32) -> (i32, i32, i32) {
    %c0_i32 = arith.constant 0 : i32
    %c0_i32_0 = arith.constant 0 : i32
    %c0_i32_1 = arith.constant 0 : i32
    %c0_i32_2 = arith.constant 0 : i32
    return %c0_i32, %c0_i32_0, %c0_i32_1 : i32, i32, i32
  }
  func.func @transform_3(%arg0: i32) -> (i32, i32, i32) {
    %c0_i32 = arith.constant 0 : i32
    %c0_i32_0 = arith.constant 0 : i32
    %c0_i32_1 = arith.constant 0 : i32
    %c0_i32_2 = arith.constant 0 : i32
    return %c0_i32, %c0_i32_0, %c0_i32_1 : i32, i32, i32
  }
  func.func @transform_4(%arg0: i32) -> (i32, i32, i32) {
    %c0_i32 = arith.constant 0 : i32
    %c0_i32_0 = arith.constant 0 : i32
    %c0_i32_1 = arith.constant 0 : i32
    %c0_i32_2 = arith.constant 0 : i32
    return %c0_i32, %c0_i32_0, %c0_i32_1 : i32, i32, i32
  }
  func.func @transform_5(%arg0: i32) -> (i32, i32, i32) {
    %c0_i32 = arith.constant 0 : i32
    %c0_i32_0 = arith.constant 0 : i32
    %c0_i32_1 = arith.constant 0 : i32
    %c0_i32_2 = arith.constant 0 : i32
    return %c0_i32, %c0_i32_0, %c0_i32_1 : i32, i32, i32
  }
  func.func @transform_6(%arg0: i32) -> (i32, i32, i32) {
    %c0_i32 = arith.constant 0 : i32
    %c0_i32_0 = arith.constant 0 : i32
    %c0_i32_1 = arith.constant 0 : i32
    %c0_i32_2 = arith.constant 0 : i32
    return %c0_i32, %c0_i32_0, %c0_i32_1 : i32, i32, i32
  }
  func.func @transform_7(%arg0: i32) -> (i32, i32, i32, i32) {
    %c0_i32 = arith.constant 0 : i32
    %c0_i32_0 = arith.constant 0 : i32
    %c0_i32_1 = arith.constant 0 : i32
    %c0_i32_2 = arith.constant 0 : i32
    return %arg0, %c0_i32, %c0_i32_0, %c0_i32_1 : i32, i32, i32, i32
  }
}

</mosaic_0001>

<llo_original>
// kernel: tpu_custom_call.1
$region0: #{tpu_custom_call.1}
  #allocation0 [shape = 'u32[]', space=smem, size = 0x4, offset = 0x4, fixed_abs, tag = 'smem constant byte address 0x4 - core index']
  #allocation1 [shape = 'u32[144,128]{1,0:T(1,128)}', space=vmem, size = 0x12000, scoped, tag = 'internal scratch']
  #allocation2 [shape = 'bf16[32,580]{1,0:T(16,128)(2,1)}', space=vmem, size = 0xa000, scoped, tag = 'scratch operand']
  #allocation3 [shape = 'bf16[288,324]{1,0:T(16,128)(2,1)}', space=vmem, size = 0x36000, scoped, tag = 'scratch operand']
  %s0 = inlined_call_operand.vmem [shape: bf16[2,37,324], index: 0, kind: input, shape index: {}]
  %s1 = inlined_call_operand.vmem [shape: bf16[3,32,37], index: 1, kind: input, shape index: {}]
  %s2 = inlined_call_operand.vmem [shape: f32[3,32,1], index: 2, kind: input, shape index: {}]
  %s3 = inlined_call_operand.vmem [shape: bf16[3,32,288], index: 3, kind: input, shape index: {}]
  %s4 = inlined_call_operand.vmem [shape: f32[3,32,1], index: 4, kind: input, shape index: {}]
  %s5 = inlined_call_operand.vmem [shape: f32[3,7,32], index: 5, kind: input, shape index: {}]
  %s6 = inlined_call_operand.vmem [shape: f32[3,7,1], index: 6, kind: input, shape index: {}]
  %s7 = inlined_call_operand.vmem [shape: f32[2,3,7,324], index: 7, kind: output, shape index: {}]
  %s8 = sld [smem:[#allocation0]]
  $region61: #{tpu_custom_call.1} parent=0
    _
  %s10 = ssub.s32 1, %s8
  %s11 = scalar_select 0, %s10, %s8
  loop: start=0, step=1, limit=4
  $region2: #{tpu_custom_call.1} parent=0 // loop_pre_header
    _
  $region3: #{tpu_custom_call.1} parent=0 // loop_header
    %s13 = sphi 0, %s17
    %p14 = scmp.ge.s32.totalorder %s13, 4
    %s23 = sphi 0, %s25
    %s26 = sphi 0, %s23
    %s27 = sphi 0, %s26
    %s43 = sphi 0, %s27
    %s47 = sphi 0, %s47
    %s49 = sphi 0, %s47
    %s50 = sphi 0, %s49
    %s64 = sphi 0, %s50
    %s68 = sphi 0, %s68
    %s70 = sphi 0, %s68
    %s71 = sphi 0, %s70
    %s85 = sphi 0, %s71
    %s89 = sphi 0, %s89
    %s91 = sphi 0, %s89
    %s92 = sphi 0, %s91
    %s106 = sphi 0, %s92
    %s110 = sphi 0, %s110
    %s112 = sphi 0, %s110
    %s113 = sphi 0, %s112
    %s127 = sphi 0, %s113
    %s131 = sphi 0, %s131
    %s133 = sphi 0, %s131
    %s134 = sphi 0, %s133
    %s148 = sphi 0, %s134
    %s152 = sphi 0, %s152
    %s154 = sphi 0, %s152
    %s155 = sphi 0, %s154
    %s169 = sphi 0, %s155
    %s175 = sphi 0, %s177
    %s178 = sphi 0, %s175
    %s179 = sphi 0, %s178
    %s195 = sphi 0, %s179
  $region4: #{tpu_custom_call.1} parent=0 // loop_header_branch
    %16 = sbr.rel (%p14) target = $region8
  $region5: #{tpu_custom_call.1} parent=0 // loop_body
    %s18 = ssub.s32 %s13, 1
    %s19 = ssub.s32 %s13, 2
    %s20 = sadd.s32 %s13, 1
    %s21 = ssub.s32 %s13, %s20
    %p22 = scmp.eq.s32.totalorder %s21, 0
    %s24 = sadd.s32 %s23, 1
    %s25 = scalar_select %p22, %s23, %s24
    %p28 = pneg %p22
    %p29 = scmp.eq.s32.totalorder %s13, 1
    %p30 = por %p28, %p29
    %p31 = scmp.ne.s32.totalorder %s23, %s26
    %p32 = scmp.eq.s32.totalorder %s13, 0
    %p33 = por %p31, %p32
    %p34 = scmp.ne.s32.totalorder %s23, %s26
    %p35 = scmp.eq.s32.totalorder %s18, 1
    %p36 = por %p34, %p35
    %p37 = scmp.ne.s32.totalorder %s26, %s27
    %p38 = scmp.eq.s32.totalorder %s18, 0
    %p39 = por %p37, %p38
    %p40 = scmp.ne.s32.totalorder %s26, %s27
    %p41 = scmp.eq.s32.totalorder %s19, 1
    %p42 = por %p40, %p41
    %p44 = scmp.ne.s32.totalorder %s27, %s43
    %p45 = scmp.eq.s32.totalorder %s19, 0
    %p46 = por %p44, %p45
    %s48 = sadd.s32 %s47, 1
    %p51 = scmp.eq.s32.totalorder %s13, 1
    %p52 = scmp.ne.s32.totalorder %s47, %s49
    %p53 = scmp.eq.s32.totalorder %s13, 0
    %p54 = por %p52, %p53
    %p55 = scmp.ne.s32.totalorder %s47, %s49
    %p56 = scmp.eq.s32.totalorder %s18, 1
    %p57 = por %p55, %p56
    %p58 = scmp.ne.s32.totalorder %s49, %s50
    %p59 = scmp.eq.s32.totalorder %s18, 0
    %p60 = por %p58, %p59
    %p61 = scmp.ne.s32.totalorder %s49, %s50
    %p62 = scmp.eq.s32.totalorder %s19, 1
    %p63 = por %p61, %p62
    %p65 = scmp.ne.s32.totalorder %s50, %s64
    %p66 = scmp.eq.s32.totalorder %s19, 0
    %p67 = por %p65, %p66
    %s69 = sadd.s32 %s68, 1
    %p72 = scmp.eq.s32.totalorder %s13, 1
    %p73 = scmp.ne.s32.totalorder %s68, %s70
    %p74 = scmp.eq.s32.totalorder %s13, 0
    %p75 = por %p73, %p74
    %p76 = scmp.ne.s32.totalorder %s68, %s70
    %p77 = scmp.eq.s32.totalorder %s18, 1
    %p78 = por %p76, %p77
    %p79 = scmp.ne.s32.totalorder %s70, %s71
    %p80 = scmp.eq.s32.totalorder %s18, 0
    %p81 = por %p79, %p80
    %p82 = scmp.ne.s32.totalorder %s70, %s71
    %p83 = scmp.eq.s32.totalorder %s19, 1
    %p84 = por %p82, %p83
    %p86 = scmp.ne.s32.totalorder %s71, %s85
    %p87 = scmp.eq.s32.totalorder %s19, 0
    %p88 = por %p86, %p87
    %s90 = sadd.s32 %s89, 1
    %p93 = scmp.eq.s32.totalorder %s13, 1
    %p94 = scmp.ne.s32.totalorder %s89, %s91
    %p95 = scmp.eq.s32.totalorder %s13, 0
    %p96 = por %p94, %p95
    %p97 = scmp.ne.s32.totalorder %s89, %s91
    %p98 = scmp.eq.s32.totalorder %s18, 1
    %p99 = por %p97, %p98
    %p100 = scmp.ne.s32.totalorder %s91, %s92
    %p101 = scmp.eq.s32.totalorder %s18, 0
    %p102 = por %p100, %p101
    %p103 = scmp.ne.s32.totalorder %s91, %s92
    %p104 = scmp.eq.s32.totalorder %s19, 1
    %p105 = por %p103, %p104
    %p107 = scmp.ne.s32.totalorder %s92, %s106
    %p108 = scmp.eq.s32.totalorder %s19, 0
    %p109 = por %p107, %p108
    %s111 = sadd.s32 %s110, 1
    %p114 = scmp.eq.s32.totalorder %s13, 1
    %p115 = scmp.ne.s32.totalorder %s110, %s112
    %p116 = scmp.eq.s32.totalorder %s13, 0
    %p117 = por %p115, %p116
    %p118 = scmp.ne.s32.totalorder %s110, %s112
    %p119 = scmp.eq.s32.totalorder %s18, 1
    %p120 = por %p118, %p119
    %p121 = scmp.ne.s32.totalorder %s112, %s113
    %p122 = scmp.eq.s32.totalorder %s18, 0
    %p123 = por %p121, %p122
    %p124 = scmp.ne.s32.totalorder %s112, %s113
    %p125 = scmp.eq.s32.totalorder %s19, 1
    %p126 = por %p124, %p125
    %p128 = scmp.ne.s32.totalorder %s113, %s127
    %p129 = scmp.eq.s32.totalorder %s19, 0
    %p130 = por %p128, %p129
    %s132 = sadd.s32 %s131, 1
    %p135 = scmp.eq.s32.totalorder %s13, 1
    %p136 = scmp.ne.s32.totalorder %s131, %s133
    %p137 = scmp.eq.s32.totalorder %s13, 0
    %p138 = por %p136, %p137
    %p139 = scmp.ne.s32.totalorder %s131, %s133
    %p140 = scmp.eq.s32.totalorder %s18, 1
    %p141 = por %p139, %p140
    %p142 = scmp.ne.s32.totalorder %s133, %s134
    %p143 = scmp.eq.s32.totalorder %s18, 0
    %p144 = por %p142, %p143
    %p145 = scmp.ne.s32.totalorder %s133, %s134
    %p146 = scmp.eq.s32.totalorder %s19, 1
    %p147 = por %p145, %p146
    %p149 = scmp.ne.s32.totalorder %s134, %s148
    %p150 = scmp.eq.s32.totalorder %s19, 0
    %p151 = por %p149, %p150
    %s153 = sadd.s32 %s152, 1
    %p156 = scmp.eq.s32.totalorder %s13, 1
    %p157 = scmp.ne.s32.totalorder %s152, %s154
    %p158 = scmp.eq.s32.totalorder %s13, 0
    %p159 = por %p157, %p158
    %p160 = scmp.ne.s32.totalorder %s152, %s154
    %p161 = scmp.eq.s32.totalorder %s18, 1
    %p162 = por %p160, %p161
    %p163 = scmp.ne.s32.totalorder %s154, %s155
    %p164 = scmp.eq.s32.totalorder %s18, 0
    %p165 = por %p163, %p164
    %p166 = scmp.ne.s32.totalorder %s154, %s155
    %p167 = scmp.eq.s32.totalorder %s19, 1
    %p168 = por %p166, %p167
    %p170 = scmp.ne.s32.totalorder %s155, %s169
    %p171 = scmp.eq.s32.totalorder %s19, 0
    %p172 = por %p170, %p171
    %s173 = ssub.s32 %s13, %s20
    %p174 = scmp.eq.s32.totalorder %s173, 0
    %s176 = sadd.s32 %s175, 1
    %s177 = scalar_select %p174, %s175, %s176
    %p180 = pneg %p174
    %p181 = scmp.eq.s32.totalorder %s13, 1
    %p182 = por %p180, %p181
    %p183 = scmp.ne.s32.totalorder %s175, %s178
    %p184 = scmp.eq.s32.totalorder %s13, 0
    %p185 = por %p183, %p184
    %p186 = scmp.ne.s32.totalorder %s175, %s178
    %p187 = scmp.eq.s32.totalorder %s18, 1
    %p188 = por %p186, %p187
    %p189 = scmp.ne.s32.totalorder %s178, %s179
    %p190 = scmp.eq.s32.totalorder %s18, 0
    %p191 = por %p189, %p190
    %p192 = scmp.ne.s32.totalorder %s178, %s179
    %p193 = scmp.eq.s32.totalorder %s19, 1
    %p194 = por %p192, %p193
    %p196 = scmp.ne.s32.totalorder %s179, %s195
    %p197 = scmp.eq.s32.totalorder %s19, 0
    %p198 = por %p196, %p197
    %p199 = scmp.le.s32.totalorder 1, %s13
    %p200 = scmp.lt.s32.totalorder %s13, 3
    %p201 = pnand %p199, %p200
    %p202 = pneg %p201
    // Predicated region
    $region9: #{tpu_custom_call.1} parent=5 // pred_check
      _
    $region10: #{tpu_custom_call.1} parent=5 // pred_check_branch
      %204 = sbr.rel (%p201) target = $region12
    $region11: #{tpu_custom_call.1} parent=5 // pred_region
      %s205 = ssub.s32 %s13, 1
      // Predicated region
      $region13: #{tpu_custom_call.1} parent=11 // pred_check
        %p206 = pneg %p60
      $region14: #{tpu_custom_call.1} parent=11 // pred_check_branch
        %208 = sbr.rel (%p206) target = $region16
      $region15: #{tpu_custom_call.1} parent=11 // pred_region
        _
      $region16: #{tpu_custom_call.1} parent=11 // pred_fallthru
        _
      // Predicated region
      $region17: #{tpu_custom_call.1} parent=11 // pred_check
        %p209 = pneg %p81
      $region18: #{tpu_custom_call.1} parent=11 // pred_check_branch
        %211 = sbr.rel (%p209) target = $region20
      $region19: #{tpu_custom_call.1} parent=11 // pred_region
        _
      $region20: #{tpu_custom_call.1} parent=11 // pred_fallthru
        _
      // Predicated region
      $region21: #{tpu_custom_call.1} parent=11 // pred_check
        %p212 = pneg %p102
      $region22: #{tpu_custom_call.1} parent=11 // pred_check_branch
        %214 = sbr.rel (%p212) target = $region24
      $region23: #{tpu_custom_call.1} parent=11 // pred_region
        _
      $region24: #{tpu_custom_call.1} parent=11 // pred_fallthru
        _
      // Predicated region
      $region25: #{tpu_custom_call.1} parent=11 // pred_check
        %p215 = pneg %p123
      $region26: #{tpu_custom_call.1} parent=11 // pred_check_branch
        %217 = sbr.rel (%p215) target = $region28
      $region27: #{tpu_custom_call.1} parent=11 // pred_region
        _
      $region28: #{tpu_custom_call.1} parent=11 // pred_fallthru
        _
      // Predicated region
      $region29: #{tpu_custom_call.1} parent=11 // pred_check
        %p218 = pneg %p144
      $region30: #{tpu_custom_call.1} parent=11 // pred_check_branch
        %220 = sbr.rel (%p218) target = $region32
      $region31: #{tpu_custom_call.1} parent=11 // pred_region
        _
      $region32: #{tpu_custom_call.1} parent=11 // pred_fallthru
        _
      // Predicated region
      $region33: #{tpu_custom_call.1} parent=11 // pred_check
        %p221 = pneg %p165
      $region34: #{tpu_custom_call.1} parent=11 // pred_check_branch
        %223 = sbr.rel (%p221) target = $region36
      $region35: #{tpu_custom_call.1} parent=11 // pred_region
        _
      $region36: #{tpu_custom_call.1} parent=11 // pred_fallthru
        _
    $region12: #{tpu_custom_call.1} parent=5 // pred_fallthru
      _
    %p224 = scmp.lt.s32.totalorder %s13, 2
    // Predicated region
    $region37: #{tpu_custom_call.1} parent=5 // pred_check
      %p225 = pneg %p224
    $region38: #{tpu_custom_call.1} parent=5 // pred_check_branch
      %227 = sbr.rel (%p225) target = $region40
    $region39: #{tpu_custom_call.1} parent=5 // pred_region
      // Predicated region
      $region41: #{tpu_custom_call.1} parent=39 // pred_check
        %p228 = pneg %p33
      $region42: #{tpu_custom_call.1} parent=39 // pred_check_branch
        %230 = sbr.rel (%p228) target = $region44
      $region43: #{tpu_custom_call.1} parent=39 // pred_region
        %p231 = scmp.lt.s32.totalorder %s13, 1
        %s232 = scalar_select %p231, %s13, 1
        %s233 = smul.addr %s232, 15
        %s234 = smul.addr %s233, 4
        %s235 = scalar_lea.vmem %s0, %s234
      $region44: #{tpu_custom_call.1} parent=39 // pred_fallthru
        _
    $region40: #{tpu_custom_call.1} parent=5 // pred_fallthru
      _
    %p236 = scmp.le.s32.totalorder 1, %s13
    %p237 = scmp.lt.s32.totalorder %s13, 3
    %p238 = pnand %p236, %p237
    %p239 = pneg %p238
    // Predicated region
    $region45: #{tpu_custom_call.1} parent=5 // pred_check
      _
    $region46: #{tpu_custom_call.1} parent=5 // pred_check_branch
      %241 = sbr.rel (%p238) target = $region48
    $region47: #{tpu_custom_call.1} parent=5 // pred_region
      %s242 = ssub.s32 %s13, 1
      %p243 = scmp.lt.s32.totalorder %s18, 1
      %s244 = scalar_select %p243, %s18, 1
      %s245 = smul.addr %s244, 15
      %s246 = smul.addr %s245, 4
      %s247 = scalar_lea.vmem %s0, %s246
      %p248 = pneg %p39
      %p249 = pneg %p36
      %p250 = pneg %p60
      %p251 = pneg %p57
      %p252 = pneg %p81
      %p253 = pneg %p78
      %p254 = pneg %p102
      %p255 = pneg %p99
      %p256 = pneg %p123
      %p257 = pneg %p120
      %p258 = pneg %p144
      %p259 = pneg %p141
      %p260 = pneg %p165
      %p261 = pneg %p162
      %p262 = pneg %p191
      %p263 = pneg %p188
      %p264 = scmp.lt.s32.totalorder %s18, 1
      %s265 = scalar_select %p264, %s18, 1
      %s266 = smul.addr %s265, 9
      %s267 = smul.addr %s266, 8
      %s268 = scalar_lea.vmem %s7, %s267
      %p269 = scmp.lt.s32.totalorder %s18, 1
      %s270 = scalar_select %p269, %s18, 1
      %s271 = smul.addr %s270, 15
      %s272 = smul.addr %s271, 4
      %s273 = scalar_lea.vmem %s0, %s272
      %p274 = scmp.lt.s32.totalorder %s18, 1
      %s275 = scalar_select %p274, %s18, 1
      %s276 = smul.addr %s275, 9
      %s277 = smul.addr %s276, 8
      %s278 = scalar_lea.vmem %s7, %s277
      %280 = vst [vmem:[#allocation2] sm:$0xff] 0
      %281 = vst [vmem:[#allocation2 + $0x28] sm:$0xff] 0
      %vm282 = vcmask 1048096
      %283 = vst.msk [vmem:[#allocation2 + $0x18] sm:$0xff] %vm282, 0
      %vm284 = vcmask 556032
      %285 = vst.msk [vmem:[#allocation2 + $0x20] sm:$0xff] %vm284, 0
      %286 = vst.msk [vmem:[#allocation2 + $0x40] sm:$0xff] %vm282, 0
      %287 = vst.msk [vmem:[#allocation2 + $0x48] sm:$0xff] %vm284, 0
      %v288 = vld [vmem:[%s273] sm:$0xff]
      %v289 = vld [vmem:[%s273 + $0x8] sm:$0xf]
      %v290 = vld [vmem:[%s273 + $0xc] sm:$0xff]
      %v291 = vld [vmem:[%s273 + $0x14] sm:$0xf]
      %v292 = vld [vmem:[%s273 + $0x18] sm:$0xff]
      %v293 = vld [vmem:[%s273 + $0x20] sm:$0xf]
      %v294 = vld [vmem:[%s273 + $0x24] sm:$0xff]
      %v295 = vld [vmem:[%s273 + $0x2c] sm:$0xf]
      %v296 = vld [vmem:[%s273 + $0x30] sm:$0x77]
      %v297 = vld [vmem:[%s273 + $0x38] sm:$0x7]
      %v298 = vld [vmem:[%s1] sm:$0xf]
      %v299 = vld [vmem:[%s1 + $0x4] sm:$0xf]
      %v300 = vld [vmem:[%s1 + $0x8] sm:$0xf]
      %v301 = vld [vmem:[%s1 + $0xc] sm:$0xf]
      %v302 = vld [vmem:[%s2] sm:$0xff]
      %v303 = vld [vmem:[%s2 + $0x8] sm:$0xff]
      %v304 = vld [vmem:[%s2 + $0x10] sm:$0xff]
      %v305 = vld [vmem:[%s2 + $0x18] sm:$0xff]
      %307 = vset.pattern.permute.xlu0 0
      %308 = vperm.xlu0 %307, %v302
      %v309 = vpop.permute.xlu0 %308
      %312 = vset.pattern.permute.xlu0 0
      %313 = vperm.xlu0 %312, %v303
      %v314 = vpop.permute.xlu0 %313
      %317 = vset.pattern.permute.xlu0 0
      %318 = vperm.xlu0 %317, %v304
      %v319 = vpop.permute.xlu0 %318
      %322 = vset.pattern.permute.xlu0 0
      %323 = vperm.xlu0 %322, %v305
      %v324 = vpop.permute.xlu0 %323
      %v330 = vunpack.c.l.b16 %v298
      %v331 = vunpack.c.l.b16 %v299
      %v332 = vunpack.c.l.b16 %v300
      %v333 = vunpack.c.l.b16 %v301
      %v334 = vpack.c.b16 %v331, %v330
      %v335 = vpack.c.b16 %v333, %v332
      %v346 = vunpack.c.l.b16 %v288
      %v347 = vunpack.c.h.b16 %v288
      %v348 = vunpack.c.l.b16 %v289
      %v349 = vunpack.c.l.b16 %v290
      %v350 = vunpack.c.h.b16 %v290
      %v351 = vunpack.c.l.b16 %v291
      %v352 = vunpack.c.l.b16 %v292
      %v353 = vunpack.c.h.b16 %v292
      %v354 = vunpack.c.l.b16 %v293
      %v355 = vunpack.c.l.b16 %v294
      %v356 = vunpack.c.h.b16 %v294
      %v357 = vunpack.c.l.b16 %v295
      %v358 = vunpack.c.l.b16 %v296
      %v359 = vunpack.c.h.b16 %v296
      %v360 = vunpack.c.l.b16 %v297
      %v361 = vpack.c.b16 %v349, %v346
      %v362 = vpack.c.b16 %v350, %v347
      %v363 = vpack.c.b16 %v351, %v348
      %v364 = vpack.c.b16 %v355, %v352
      %v365 = vpack.c.b16 %v356, %v353
      %v366 = vpack.c.b16 %v357, %v354
      %v367 = vpack.c.b16 %v358, %v358
      %v368 = vpack.c.b16 %v359, %v359
      %v369 = vpack.c.b16 %v360, %v360
      %vm376 = vcmask 302080
      %v378 = vsel %vm376, %v334, 0
      %v381 = vsel %vm376, %v335, 0
      %vm383 = vcmask 1041408
      %vm384 = vcmask 1042432
      %v385 = vsel %vm383, 4294967295, 65535
      %v386 = vsel %vm384, %v385, 0
      %v388 = vand.u32 %v367, %v386
      %v391 = vand.u32 %v368, %v386
      %v394 = vand.u32 %v369, %v386
      %396 = vmatprep.subr.bf16.mxu0 %v362
      %397 = vmatpush1.bf16.msra.mxu0 %v361
      %398 = vmatprep.subr.bf16.mxu0 %v365
      %399 = vmatpush1.bf16.msra.mxu0 %v364
      %400 = vmatprep.subr.bf16.mxu0 %v391
      %401 = vmatpush1.bf16.msra.mxu0 %v388
      %402 = vmatprep.subr.bf16.mxu0 0
      %403 = vmatpush1.bf16.msra.mxu0 0
      %404 = vmatprep.subr.bf16.mxu0 0
      %405 = vmatpush1.bf16.msra.mxu0 0
      %406 = vmatprep.subr.bf16.mxu0 0
      %407 = vmatpush1.bf16.msra.mxu0 0
      %408 = vmatprep.subr.bf16.mxu0 0
      %409 = vmatpush1.bf16.msra.mxu0 0
      %410 = vmatprep.subr.bf16.mxu0 0
      %411 = vmatpush1.bf16.msra.mxu0 0
      %412 = vmatprep.subr.bf16.mxu0 0
      %413 = vmatpush1.bf16.msra.mxu0 0
      %414 = vmatprep.subr.bf16.mxu0 0
      %415 = vmatpush1.bf16.msra.mxu0 0
      %416 = vmatprep.subr.bf16.mxu0 0
      %417 = vmatpush1.bf16.msra.mxu0 0
      %418 = vmatprep.subr.bf16.mxu0 0
      %419 = vmatpush1.bf16.msra.mxu0 0
      %420 = vmatprep.subr.bf16.mxu0 0
      %421 = vmatpush1.bf16.msra.mxu0 0
      %422 = vmatprep.subr.bf16.mxu0 0
      %423 = vmatpush1.bf16.msra.mxu0 0
      %424 = vmatprep.subr.bf16.mxu0 0
      %425 = vmatpush1.bf16.msra.mxu0 0
      %426 = vmatprep.subr.bf16.mxu0 0
      %427 = vmatpush1.bf16.msra.mxu0 0
      %428 = vmatprep.mubr.bf16.mxu0 0
      %429 = vmatmul.mubr.bf16.gmra.mrb[0].mxu0 %v378
      %v430 = vpop.f32.mrb[0].mxu0
      %v431 = vadd.f32 %v309, %v430
      %v432 = vpop.f32.mrb[0].mxu0
      %v433 = vadd.f32 %v309, %v432
      %v434 = vpop.f32.mrb[0].mxu0
      %v435 = vadd.f32 %v314, %v434
      %v436 = vpop.f32.mrb[0].mxu0
      %v437 = vadd.f32 %v314, %v436
      %438 = vmatprep.mubr.bf16.mxu0 0
      %439 = vmatmul.mubr.bf16.gmra.mrb[0].mxu0 %v381
      %v440 = vpop.f32.mrb[0].mxu0
      %v441 = vadd.f32 %v319, %v440
      %v442 = vpop.f32.mrb[0].mxu0
      %v443 = vadd.f32 %v319, %v442
      %v444 = vpop.f32.mrb[0].mxu0
      %v445 = vadd.f32 %v324, %v444
      %v446 = vpop.f32.mrb[0].mxu0
      %v447 = vadd.f32 %v324, %v446
      %448 = vdwg.mxu0
      %449 = vmatprep.subr.bf16.mxu0 0
      %450 = vmatpush1.bf16.msra.mxu0 %v363
      %451 = vmatprep.subr.bf16.mxu0 0
      %452 = vmatpush1.bf16.msra.mxu0 %v366
      %453 = vmatprep.subr.bf16.mxu0 0
      %454 = vmatpush1.bf16.msra.mxu0 %v394
      %455 = vmatprep.subr.bf16.mxu0 0
      %456 = vmatpush1.bf16.msra.mxu0 0
      %457 = vmatprep.subr.bf16.mxu0 0
      %458 = vmatpush1.bf16.msra.mxu0 0
      %459 = vmatprep.subr.bf16.mxu0 0
      %460 = vmatpush1.bf16.msra.mxu0 0
      %461 = vmatprep.subr.bf16.mxu0 0
      %462 = vmatpush1.bf16.msra.mxu0 0
      %463 = vmatprep.subr.bf16.mxu0 0
      %464 = vmatpush1.bf16.msra.mxu0 0
      %465 = vmatprep.subr.bf16.mxu0 0
      %466 = vmatpush1.bf16.msra.mxu0 0
      %467 = vmatprep.subr.bf16.mxu0 0
      %468 = vmatpush1.bf16.msra.mxu0 0
      %469 = vmatprep.subr.bf16.mxu0 0
      %470 = vmatpush1.bf16.msra.mxu0 0
      %471 = vmatprep.subr.bf16.mxu0 0
      %472 = vmatpush1.bf16.msra.mxu0 0
      %473 = vmatprep.subr.bf16.mxu0 0
      %474 = vmatpush1.bf16.msra.mxu0 0
      %475 = vmatprep.subr.bf16.mxu0 0
      %476 = vmatpush1.bf16.msra.mxu0 0
      %477 = vmatprep.subr.bf16.mxu0 0
      %478 = vmatpush1.bf16.msra.mxu0 0
      %479 = vmatprep.subr.bf16.mxu0 0
      %480 = vmatpush1.bf16.msra.mxu0 0
      %481 = vmatprep.mubr.bf16.mxu0 0
      %482 = vmatmul.mubr.bf16.gmra.mrb[0].mxu0 %v378
      %v483 = vpop.f32.mrb[0].mxu0
      %v484 = vadd.f32 %v309, %v483
      %v485 = vpop.f32.mrb[0].mxu0
      %v486 = vpop.f32.mrb[0].mxu0
      %v487 = vadd.f32 %v314, %v486
      %v488 = vpop.f32.mrb[0].mxu0
      %489 = vmatprep.mubr.bf16.mxu0 0
      %490 = vmatmul.mubr.bf16.gmra.mrb[0].mxu0 %v381
      %v491 = vpop.f32.mrb[0].mxu0
      %v492 = vadd.f32 %v319, %v491
      %v493 = vpop.f32.mrb[0].mxu0
      %v494 = vpop.f32.mrb[0].mxu0
      %v495 = vadd.f32 %v324, %v494
      %v496 = vpop.f32.mrb[0].mxu0
      %497 = vdwg.mxu0
      %v498 = vmax.f32 %v431, 0.0
      %v499 = vmax.f32 %v433, 0.0
      %v500 = vmax.f32 %v484, 0.0
      %v501 = vmax.f32 %v435, 0.0
      %v502 = vmax.f32 %v437, 0.0
      %v503 = vmax.f32 %v487, 0.0
      %v504 = vmax.f32 %v441, 0.0
      %v505 = vmax.f32 %v443, 0.0
      %v506 = vmax.f32 %v492, 0.0
      %v507 = vmax.f32 %v445, 0.0
      %v508 = vmax.f32 %v447, 0.0
      %v509 = vmax.f32 %v495, 0.0
      %v510 = vpack.c.bf16 %v501, %v498
      %v511 = vpack.c.bf16 %v502, %v499
      %v512 = vpack.c.bf16 %v503, %v500
      %v513 = vpack.c.bf16 %v507, %v504
      %v514 = vpack.c.bf16 %v508, %v505
      %v515 = vpack.c.bf16 %v509, %v506
      %516 = vst [vmem:[#allocation2 + $0x8] sm:$0xff] %v510
      %517 = vst [vmem:[#allocation2 + $0x10] sm:$0xff] %v511
      %518 = vst.msk [vmem:[#allocation2 + $0x18] sm:$0xff] %vm284, %v512
      %519 = vst [vmem:[#allocation2 + $0x30] sm:$0xff] %v513
      %520 = vst [vmem:[#allocation2 + $0x38] sm:$0xff] %v514
      %521 = vst.msk [vmem:[#allocation2 + $0x40] sm:$0xff] %vm284, %v515
      %v522 = vld [vmem:[#allocation2] sm:$0xff]
      %v523 = vld [vmem:[#allocation2 + $0x8] sm:$0xff]
      %v524 = vld [vmem:[#allocation2 + $0x10] sm:$0xff]
      %v525 = vld [vmem:[#allocation2 + $0x18] sm:$0xff]
      %v526 = vld [vmem:[#allocation2 + $0x28] sm:$0xff]
      %v527 = vld [vmem:[#allocation2 + $0x30] sm:$0xff]
      %v528 = vld [vmem:[#allocation2 + $0x38] sm:$0xff]
      %v529 = vld [vmem:[#allocation2 + $0x40] sm:$0xff]
      %538 = vrot.lane.b32.xlu0 %v522, 19
      %v539 = vpop.permute.xlu0 %538
      %540 = vrot.lane.b32.xlu0 %v523, 19
      %v541 = vpop.permute.xlu0 %540
      %542 = vrot.lane.b32.xlu0 %v524, 19
      %v543 = vpop.permute.xlu0 %542
      %544 = vrot.lane.b32.xlu0 %v525, 19
      %v545 = vpop.permute.xlu0 %544
      %546 = vrot.lane.b32.xlu0 %v526, 19
      %v547 = vpop.permute.xlu0 %546
      %548 = vrot.lane.b32.xlu0 %v527, 19
      %v549 = vpop.permute.xlu0 %548
      %550 = vrot.lane.b32.xlu0 %v528, 19
      %v551 = vpop.permute.xlu0 %550
      %552 = vrot.lane.b32.xlu0 %v529, 19
      %v553 = vpop.permute.xlu0 %552
      %vm554 = vcmask 154624
      %v555 = vsel %vm554, %v539, %v541
      %v556 = vsel %vm554, %v541, %v543
      %v557 = vsel %vm554, %v543, %v545
      %v558 = vsel %vm554, %v547, %v549
      %v559 = vsel %vm554, %v549, %v551
      %v560 = vsel %vm554, %v551, %v553
      %567 = vst [vmem:[#allocation3] sm:$0xff] %v555
      %568 = vst [vmem:[#allocation3 + $0x8] sm:$0xff] %v556
      %569 = vst.msk [vmem:[#allocation3 + $0x10] sm:$0xff] %vm284, %v557
      %570 = vst [vmem:[#allocation3 + $0x18] sm:$0xff] %v558
      %571 = vst [vmem:[#allocation3 + $0x20] sm:$0xff] %v559
      %572 = vst.msk [vmem:[#allocation3 + $0x28] sm:$0xff] %vm284, %v560
      %v573 = vld [vmem:[#allocation2] sm:$0xff]
      %v574 = vld [vmem:[#allocation2 + $0x8] sm:$0xff]
      %v575 = vld [vmem:[#allocation2 + $0x10] sm:$0xff]
      %v576 = vld [vmem:[#allocation2 + $0x18] sm:$0xff]
      %v577 = vld [vmem:[#allocation2 + $0x28] sm:$0xff]
      %v578 = vld [vmem:[#allocation2 + $0x30] sm:$0xff]
      %v579 = vld [vmem:[#allocation2 + $0x38] sm:$0xff]
      %v580 = vld [vmem:[#allocation2 + $0x40] sm:$0xff]
      %589 = vrot.lane.b32.xlu0 %v573, 18
      %v590 = vpop.permute.xlu0 %589
      %591 = vrot.lane.b32.xlu0 %v574, 18
      %v592 = vpop.permute.xlu0 %591
      %593 = vrot.lane.b32.xlu0 %v575, 18
      %v594 = vpop.permute.xlu0 %593
      %595 = vrot.lane.b32.xlu0 %v576, 18
      %v596 = vpop.permute.xlu0 %595
      %597 = vrot.lane.b32.xlu0 %v577, 18
      %v598 = vpop.permute.xlu0 %597
      %599 = vrot.lane.b32.xlu0 %v578, 18
      %v600 = vpop.permute.xlu0 %599
      %601 = vrot.lane.b32.xlu0 %v579, 18
      %v602 = vpop.permute.xlu0 %601
      %603 = vrot.lane.b32.xlu0 %v580, 18
      %v604 = vpop.permute.xlu0 %603
      %vm605 = vcmask 146432
      %v606 = vsel %vm605, %v590, %v592
      %v607 = vsel %vm605, %v592, %v594
      %v608 = vsel %vm605, %v594, %v596
      %v609 = vsel %vm605, %v598, %v600
      %v610 = vsel %vm605, %v600, %v602
      %v611 = vsel %vm605, %v602, %v604
      %618 = vst [vmem:[#allocation3 + $0x30] sm:$0xff] %v606
      %619 = vst [vmem:[#allocation3 + $0x38] sm:$0xff] %v607
      %620 = vst.msk [vmem:[#allocation3 + $0x40] sm:$0xff] %vm284, %v608
      %621 = vst [vmem:[#allocation3 + $0x48] sm:$0xff] %v609
      %622 = vst [vmem:[#allocation3 + $0x50] sm:$0xff] %v610
      %623 = vst.msk [vmem:[#allocation3 + $0x58] sm:$0xff] %vm284, %v611
      %v624 = vld [vmem:[#allocation2] sm:$0xff]
      %v625 = vld [vmem:[#allocation2 + $0x8] sm:$0xff]
      %v626 = vld [vmem:[#allocation2 + $0x10] sm:$0xff]
      %v627 = vld [vmem:[#allocation2 + $0x18] sm:$0xff]
      %v628 = vld [vmem:[#allocation2 + $0x28] sm:$0xff]
      %v629 = vld [vmem:[#allocation2 + $0x30] sm:$0xff]
      %v630 = vld [vmem:[#allocation2 + $0x38] sm:$0xff]
      %v631 = vld [vmem:[#allocation2 + $0x40] sm:$0xff]
      %640 = vrot.lane.b32.xlu0 %v624, 17
      %v641 = vpop.permute.xlu0 %640
      %642 = vrot.lane.b32.xlu0 %v625, 17
      %v643 = vpop.permute.xlu0 %642
      %644 = vrot.lane.b32.xlu0 %v626, 17
      %v645 = vpop.permute.xlu0 %644
      %646 = vrot.lane.b32.xlu0 %v627, 17
      %v647 = vpop.permute.xlu0 %646
      %648 = vrot.lane.b32.xlu0 %v628, 17
      %v649 = vpop.permute.xlu0 %648
      %650 = vrot.lane.b32.xlu0 %v629, 17
      %v651 = vpop.permute.xlu0 %650
      %652 = vrot.lane.b32.xlu0 %v630, 17
      %v653 = vpop.permute.xlu0 %652
      %654 = vrot.lane.b32.xlu0 %v631, 17
      %v655 = vpop.permute.xlu0 %654
      %vm656 = vcmask 138240
      %v657 = vsel %vm656, %v641, %v643
      %v658 = vsel %vm656, %v643, %v645
      %v659 = vsel %vm656, %v645, %v647
      %v660 = vsel %vm656, %v649, %v651
      %v661 = vsel %vm656, %v651, %v653
      %v662 = vsel %vm656, %v653, %v655
      %669 = vst [vmem:[#allocation3 + $0x60] sm:$0xff] %v657
      %670 = vst [vmem:[#allocation3 + $0x68] sm:$0xff] %v658
      %671 = vst.msk [vmem:[#allocation3 + $0x70] sm:$0xff] %vm284, %v659
      %672 = vst [vmem:[#allocation3 + $0x78] sm:$0xff] %v660
      %673 = vst [vmem:[#allocation3 + $0x80] sm:$0xff] %v661
      %674 = vst.msk [vmem:[#allocation3 + $0x88] sm:$0xff] %vm284, %v662
      %v675 = vld [vmem:[#allocation2] sm:$0xff]
      %v676 = vld [vmem:[#allocation2 + $0x8] sm:$0xff]
      %v677 = vld [vmem:[#allocation2 + $0x10] sm:$0xff]
      %v678 = vld [vmem:[#allocation2 + $0x18] sm:$0xff]
      %v679 = vld [vmem:[#allocation2 + $0x28] sm:$0xff]
      %v680 = vld [vmem:[#allocation2 + $0x30] sm:$0xff]
      %v681 = vld [vmem:[#allocation2 + $0x38] sm:$0xff]
      %v682 = vld [vmem:[#allocation2 + $0x40] sm:$0xff]
      %691 = vrot.lane.b32.xlu0 %v675, 1
      %v692 = vpop.permute.xlu0 %691
      %693 = vrot.lane.b32.xlu0 %v676, 1
      %v694 = vpop.permute.xlu0 %693
      %695 = vrot.lane.b32.xlu0 %v677, 1
      %v696 = vpop.permute.xlu0 %695
      %697 = vrot.lane.b32.xlu0 %v678, 1
      %v698 = vpop.permute.xlu0 %697
      %699 = vrot.lane.b32.xlu0 %v679, 1
      %v700 = vpop.permute.xlu0 %699
      %701 = vrot.lane.b32.xlu0 %v680, 1
      %v702 = vpop.permute.xlu0 %701
      %703 = vrot.lane.b32.xlu0 %v681, 1
      %v704 = vpop.permute.xlu0 %703
      %705 = vrot.lane.b32.xlu0 %v682, 1
      %v706 = vpop.permute.xlu0 %705
      %vm707 = vcmask 7168
      %v708 = vsel %vm707, %v692, %v694
      %v709 = vsel %vm707, %v694, %v696
      %v710 = vsel %vm707, %v696, %v698
      %v711 = vsel %vm707, %v700, %v702
      %v712 = vsel %vm707, %v702, %v704
      %v713 = vsel %vm707, %v704, %v706
      %720 = vst [vmem:[#allocation3 + $0x90] sm:$0xff] %v708
      %721 = vst [vmem:[#allocation3 + $0x98] sm:$0xff] %v709
      %722 = vst.msk [vmem:[#allocation3 + $0xa0] sm:$0xff] %vm284, %v710
      %723 = vst [vmem:[#allocation3 + $0xa8] sm:$0xff] %v711
      %724 = vst [vmem:[#allocation3 + $0xb0] sm:$0xff] %v712
      %725 = vst.msk [vmem:[#allocation3 + $0xb8] sm:$0xff] %vm284, %v713
      %v726 = vld [vmem:[#allocation2 + $0x8] sm:$0xff]
      %v727 = vld [vmem:[#allocation2 + $0x10] sm:$0xff]
      %v728 = vld [vmem:[#allocation2 + $0x18] sm:$0xff]
      %v729 = vld [vmem:[#allocation2 + $0x30] sm:$0xff]
      %v730 = vld [vmem:[#allocation2 + $0x38] sm:$0xff]
      %v731 = vld [vmem:[#allocation2 + $0x40] sm:$0xff]
      %732 = vst [vmem:[#allocation3 + $0xc0] sm:$0xff] %v726
      %733 = vst [vmem:[#allocation3 + $0xc8] sm:$0xff] %v727
      %734 = vst.msk [vmem:[#allocation3 + $0xd0] sm:$0xff] %vm284, %v728
      %735 = vst [vmem:[#allocation3 + $0xd8] sm:$0xff] %v729
      %736 = vst [vmem:[#allocation3 + $0xe0] sm:$0xff] %v730
      %737 = vst.msk [vmem:[#allocation3 + $0xe8] sm:$0xff] %vm284, %v731
      %v738 = vld [vmem:[#allocation2 + $0x8] sm:$0xff]
      %v739 = vld [vmem:[#allocation2 + $0x10] sm:$0xff]
      %v740 = vld [vmem:[#allocation2 + $0x18] sm:$0xff]
      %v741 = vld [vmem:[#allocation2 + $0x30] sm:$0xff]
      %v742 = vld [vmem:[#allocation2 + $0x38] sm:$0xff]
      %v743 = vld [vmem:[#allocation2 + $0x40] sm:$0xff]
      %750 = vrot.lane.b32.xlu0 %v738, 127
      %v751 = vpop.permute.xlu0 %750
      %752 = vrot.lane.b32.xlu0 %v739, 127
      %v753 = vpop.permute.xlu0 %752
      %754 = vrot.lane.b32.xlu0 %v740, 127
      %v755 = vpop.permute.xlu0 %754
      %756 = vrot.lane.b32.xlu0 %v741, 127
      %v757 = vpop.permute.xlu0 %756
      %758 = vrot.lane.b32.xlu0 %v742, 127
      %v759 = vpop.permute.xlu0 %758
      %760 = vrot.lane.b32.xlu0 %v743, 127
      %v761 = vpop.permute.xlu0 %760
      %vm762 = vcmask 1039360
      %v763 = vsel %vm762, %v751, %v753
      %v764 = vsel %vm762, %v753, %v755
      %v765 = vsel %vm762, %v757, %v759
      %v766 = vsel %vm762, %v759, %v761
      %773 = vst [vmem:[#allocation3 + $0xf0] sm:$0xff] %v763
      %774 = vst [vmem:[#allocation3 + $0xf8] sm:$0xff] %v764
      %775 = vst.msk [vmem:[#allocation3 + $0x100] sm:$0xff] %vm284, %v755
      %776 = vst [vmem:[#allocation3 + $0x108] sm:$0xff] %v765
      %777 = vst [vmem:[#allocation3 + $0x110] sm:$0xff] %v766
      %778 = vst.msk [vmem:[#allocation3 + $0x118] sm:$0xff] %vm284, %v761
      %v779 = vld [vmem:[#allocation2 + $0x8] sm:$0xff]
      %v780 = vld [vmem:[#allocation2 + $0x10] sm:$0xff]
      %v781 = vld [vmem:[#allocation2 + $0x18] sm:$0xff]
      %v782 = vld [vmem:[#allocation2 + $0x30] sm:$0xff]
      %v783 = vld [vmem:[#allocation2 + $0x38] sm:$0xff]
      %v784 = vld [vmem:[#allocation2 + $0x40] sm:$0xff]
      %791 = vrot.lane.b32.xlu0 %v779, 111
      %v792 = vpop.permute.xlu0 %791
      %793 = vrot.lane.b32.xlu0 %v780, 111
      %v794 = vpop.permute.xlu0 %793
      %795 = vrot.lane.b32.xlu0 %v781, 111
      %v796 = vpop.permute.xlu0 %795
      %797 = vrot.lane.b32.xlu0 %v782, 111
      %v798 = vpop.permute.xlu0 %797
      %799 = vrot.lane.b32.xlu0 %v783, 111
      %v800 = vpop.permute.xlu0 %799
      %801 = vrot.lane.b32.xlu0 %v784, 111
      %v802 = vpop.permute.xlu0 %801
      %vm803 = vcmask 908288
      %v804 = vsel %vm803, %v792, %v794
      %v805 = vsel %vm803, %v794, %v796
      %v806 = vsel %vm803, %v798, %v800
      %v807 = vsel %vm803, %v800, %v802
      %814 = vst [vmem:[#allocation3 + $0x120] sm:$0xff] %v804
      %815 = vst [vmem:[#allocation3 + $0x128] sm:$0xff] %v805
      %816 = vst.msk [vmem:[#allocation3 + $0x130] sm:$0xff] %vm284, %v796
      %817 = vst [vmem:[#allocation3 + $0x138] sm:$0xff] %v806
      %818 = vst [vmem:[#allocation3 + $0x140] sm:$0xff] %v807
      %819 = vst.msk [vmem:[#allocation3 + $0x148] sm:$0xff] %vm284, %v802
      %v820 = vld [vmem:[#allocation2 + $0x8] sm:$0xff]
      %v821 = vld [vmem:[#allocation2 + $0x10] sm:$0xff]
      %v822 = vld [vmem:[#allocation2 + $0x18] sm:$0xff]
      %v823 = vld [vmem:[#allocation2 + $0x30] sm:$0xff]
      %v824 = vld [vmem:[#allocation2 + $0x38] sm:$0xff]
      %v825 = vld [vmem:[#allocation2 + $0x40] sm:$0xff]
      %832 = vrot.lane.b32.xlu0 %v820, 110
      %v833 = vpop.permute.xlu0 %832
      %834 = vrot.lane.b32.xlu0 %v821, 110
      %v835 = vpop.permute.xlu0 %834
      %836 = vrot.lane.b32.xlu0 %v822, 110
      %v837 = vpop.permute.xlu0 %836
      %838 = vrot.lane.b32.xlu0 %v823, 110
      %v839 = vpop.permute.xlu0 %838
      %840 = vrot.lane.b32.xlu0 %v824, 110
      %v841 = vpop.permute.xlu0 %840
      %842 = vrot.lane.b32.xlu0 %v825, 110
      %v843 = vpop.permute.xlu0 %842
      %vm844 = vcmask 900096
      %v845 = vsel %vm844, %v833, %v835
      %v846 = vsel %vm844, %v835, %v837
      %v847 = vsel %vm844, %v839, %v841
      %v848 = vsel %vm844, %v841, %v843
      %855 = vst [vmem:[#allocation3 + $0x150] sm:$0xff] %v845
      %856 = vst [vmem:[#allocation3 + $0x158] sm:$0xff] %v846
      %857 = vst.msk [vmem:[#allocation3 + $0x160] sm:$0xff] %vm284, %v837
      %858 = vst [vmem:[#allocation3 + $0x168] sm:$0xff] %v847
      %859 = vst [vmem:[#allocation3 + $0x170] sm:$0xff] %v848
      %860 = vst.msk [vmem:[#allocation3 + $0x178] sm:$0xff] %vm284, %v843
      %v861 = vld [vmem:[#allocation2 + $0x8] sm:$0xff]
      %v862 = vld [vmem:[#allocation2 + $0x10] sm:$0xff]
      %v863 = vld [vmem:[#allocation2 + $0x18] sm:$0xff]
      %v864 = vld [vmem:[#allocation2 + $0x30] sm:$0xff]
      %v865 = vld [vmem:[#allocation2 + $0x38] sm:$0xff]
      %v866 = vld [vmem:[#allocation2 + $0x40] sm:$0xff]
      %873 = vrot.lane.b32.xlu0 %v861, 109
      %v874 = vpop.permute.xlu0 %873
      %875 = vrot.lane.b32.xlu0 %v862, 109
      %v876 = vpop.permute.xlu0 %875
      %877 = vrot.lane.b32.xlu0 %v863, 109
      %v878 = vpop.permute.xlu0 %877
      %879 = vrot.lane.b32.xlu0 %v864, 109
      %v880 = vpop.permute.xlu0 %879
      %881 = vrot.lane.b32.xlu0 %v865, 109
      %v882 = vpop.permute.xlu0 %881
      %883 = vrot.lane.b32.xlu0 %v866, 109
      %v884 = vpop.permute.xlu0 %883
      %vm885 = vcmask 891904
      %v886 = vsel %vm885, %v874, %v876
      %v887 = vsel %vm885, %v876, %v878
      %v888 = vsel %vm885, %v880, %v882
      %v889 = vsel %vm885, %v882, %v884
      %896 = vst [vmem:[#allocation3 + $0x180] sm:$0xff] %v886
      %897 = vst [vmem:[#allocation3 + $0x188] sm:$0xff] %v887
      %898 = vst.msk [vmem:[#allocation3 + $0x190] sm:$0xff] %vm284, %v878
      %899 = vst [vmem:[#allocation3 + $0x198] sm:$0xff] %v888
      %900 = vst [vmem:[#allocation3 + $0x1a0] sm:$0xff] %v889
      %901 = vst.msk [vmem:[#allocation3 + $0x1a8] sm:$0xff] %vm284, %v884
      %v902 = vld [vmem:[%s3] sm:$0xff]
      %v903 = vld [vmem:[%s3 + $0x8] sm:$0xf]
      %v904 = vld [vmem:[%s3 + $0xc] sm:$0xff]
      %v905 = vld [vmem:[%s3 + $0x14] sm:$0xf]
      %v906 = vld [vmem:[%s3 + $0x18] sm:$0xff]
      %v907 = vld [vmem:[%s3 + $0x20] sm:$0xf]
      %v908 = vld [vmem:[%s3 + $0x24] sm:$0xff]
      %v909 = vld [vmem:[%s3 + $0x2c] sm:$0xf]
      %v910 = vld [vmem:[#allocation3] sm:$0xff]
      %v911 = vld [vmem:[#allocation3 + $0x8] sm:$0xff]
      %v912 = vld [vmem:[#allocation3 + $0x10] sm:$0xff]
      %v913 = vld [vmem:[#allocation3 + $0x18] sm:$0xff]
      %v914 = vld [vmem:[#allocation3 + $0x20] sm:$0xff]
      %v915 = vld [vmem:[#allocation3 + $0x28] sm:$0xff]
      %v916 = vld [vmem:[#allocation3 + $0x30] sm:$0xff]
      %v917 = vld [vmem:[#allocation3 + $0x38] sm:$0xff]
      %v918 = vld [vmem:[#allocation3 + $0x40] sm:$0xff]
      %v919 = vld [vmem:[#allocation3 + $0x48] sm:$0xff]
      %v920 = vld [vmem:[#allocation3 + $0x50] sm:$0xff]
      %v921 = vld [vmem:[#allocation3 + $0x58] sm:$0xff]
      %v922 = vld [vmem:[#allocation3 + $0x60] sm:$0xff]
      %v923 = vld [vmem:[#allocation3 + $0x68] sm:$0xff]
      %v924 = vld [vmem:[#allocation3 + $0x70] sm:$0xff]
      %v925 = vld [vmem:[#allocation3 + $0x78] sm:$0xff]
      %v926 = vld [vmem:[#allocation3 + $0x80] sm:$0xff]
      %v927 = vld [vmem:[#allocation3 + $0x88] sm:$0xff]
      %v928 = vld [vmem:[#allocation3 + $0x90] sm:$0xff]
      %v929 = vld [vmem:[#allocation3 + $0x98] sm:$0xff]
      %v930 = vld [vmem:[#allocation3 + $0xa0] sm:$0xff]
      %v931 = vld [vmem:[#allocation3 + $0xa8] sm:$0xff]
      %v932 = vld [vmem:[#allocation3 + $0xb0] sm:$0xff]
      %v933 = vld [vmem:[#allocation3 + $0xb8] sm:$0xff]
      %v934 = vld [vmem:[#allocation3 + $0xc0] sm:$0xff]
      %v935 = vld [vmem:[#allocation3 + $0xc8] sm:$0xff]
      %v936 = vld [vmem:[#allocation3 + $0xd0] sm:$0xff]
      %v937 = vld [vmem:[#allocation3 + $0xd8] sm:$0xff]
      %v938 = vld [vmem:[#allocation3 + $0xe0] sm:$0xff]
      %v939 = vld [vmem:[#allocation3 + $0xe8] sm:$0xff]
      %v940 = vld [vmem:[#allocation3 + $0xf0] sm:$0xff]
      %v941 = vld [vmem:[#allocation3 + $0xf8] sm:$0xff]
      %v942 = vld [vmem:[#allocation3 + $0x100] sm:$0xff]
      %v943 = vld [vmem:[#allocation3 + $0x108] sm:$0xff]
      %v944 = vld [vmem:[#allocation3 + $0x110] sm:$0xff]
      %v945 = vld [vmem:[#allocation3 + $0x118] sm:$0xff]
      %v946 = vld [vmem:[#allocation3 + $0x120] sm:$0xff]
      %v947 = vld [vmem:[#allocation3 + $0x128] sm:$0xff]
      %v948 = vld [vmem:[#allocation3 + $0x130] sm:$0xff]
      %v949 = vld [vmem:[#allocation3 + $0x138] sm:$0xff]
      %v950 = vld [vmem:[#allocation3 + $0x140] sm:$0xff]
      %v951 = vld [vmem:[#allocation3 + $0x148] sm:$0xff]
      %v952 = vld [vmem:[#allocation3 + $0x150] sm:$0xff]
      %v953 = vld [vmem:[#allocation3 + $0x158] sm:$0xff]
      %v954 = vld [vmem:[#allocation3 + $0x160] sm:$0xff]
      %v955 = vld [vmem:[#allocation3 + $0x168] sm:$0xff]
      %v956 = vld [vmem:[#allocation3 + $0x170] sm:$0xff]
      %v957 = vld [vmem:[#allocation3 + $0x178] sm:$0xff]
      %v958 = vld [vmem:[#allocation3 + $0x180] sm:$0xff]
      %v959 = vld [vmem:[#allocation3 + $0x188] sm:$0xff]
      %v960 = vld [vmem:[#allocation3 + $0x190] sm:$0xff]
      %v961 = vld [vmem:[#allocation3 + $0x198] sm:$0xff]
      %v962 = vld [vmem:[#allocation3 + $0x1a0] sm:$0xff]
      %v963 = vld [vmem:[#allocation3 + $0x1a8] sm:$0xff]
      %v964 = vld [vmem:[%s4] sm:$0xff]
      %v965 = vld [vmem:[%s4 + $0x8] sm:$0xff]
      %v966 = vld [vmem:[%s4 + $0x10] sm:$0xff]
      %v967 = vld [vmem:[%s4 + $0x18] sm:$0xff]
      %969 = vset.pattern.permute.xlu0 0
      %970 = vperm.xlu0 %969, %v964
      %v971 = vpop.permute.xlu0 %970
      %974 = vset.pattern.permute.xlu0 0
      %975 = vperm.xlu0 %974, %v965
      %v976 = vpop.permute.xlu0 %975
      %979 = vset.pattern.permute.xlu0 0
      %980 = vperm.xlu0 %979, %v966
      %v981 = vpop.permute.xlu0 %980
      %984 = vset.pattern.permute.xlu0 0
      %985 = vperm.xlu0 %984, %v967
      %v986 = vpop.permute.xlu0 %985
      %v996 = vunpack.c.l.b16 %v902
      %v997 = vunpack.c.h.b16 %v902
      %v998 = vunpack.c.l.b16 %v903
      %v999 = vunpack.c.l.b16 %v904
      %v1000 = vunpack.c.h.b16 %v904
      %v1001 = vunpack.c.l.b16 %v905
      %v1002 = vunpack.c.l.b16 %v906
      %v1003 = vunpack.c.h.b16 %v906
      %v1004 = vunpack.c.l.b16 %v907
      %v1005 = vunpack.c.l.b16 %v908
      %v1006 = vunpack.c.h.b16 %v908
      %v1007 = vunpack.c.l.b16 %v909
      %v1008 = vpack.c.b16 %v999, %v996
      %v1009 = vpack.c.b16 %v1000, %v997
      %v1010 = vpack.c.b16 %v1001, %v998
      %v1011 = vpack.c.b16 %v1005, %v1002
      %v1012 = vpack.c.b16 %v1006, %v1003
      %v1013 = vpack.c.b16 %v1007, %v1004
      %vm1018 = vcmask 261120
      %v1020 = vsel %vm1018, %v1010, 0
      %v1023 = vsel %vm1018, %v1013, 0
      %1025 = vmatprep.subr.bf16.mxu0 %v911
      %1026 = vmatpush1.bf16.msra.mxu0 %v910
      %1027 = vmatprep.subr.bf16.mxu0 %v914
      %1028 = vmatpush1.bf16.msra.mxu0 %v913
      %1029 = vmatprep.subr.bf16.mxu0 %v917
      %1030 = vmatpush1.bf16.msra.mxu0 %v916
      %1031 = vmatprep.subr.bf16.mxu0 %v920
      %1032 = vmatpush1.bf16.msra.mxu0 %v919
      %1033 = vmatprep.subr.bf16.mxu0 %v923
      %1034 = vmatpush1.bf16.msra.mxu0 %v922
      %1035 = vmatprep.subr.bf16.mxu0 %v926
      %1036 = vmatpush1.bf16.msra.mxu0 %v925
      %1037 = vmatprep.subr.bf16.mxu0 %v929
      %1038 = vmatpush1.bf16.msra.mxu0 %v928
      %1039 = vmatprep.subr.bf16.mxu0 %v932
      %1040 = vmatpush1.bf16.msra.mxu0 %v931
      %1041 = vmatprep.subr.bf16.mxu0 %v935
      %1042 = vmatpush1.bf16.msra.mxu0 %v934
      %1043 = vmatprep.subr.bf16.mxu0 %v938
      %1044 = vmatpush1.bf16.msra.mxu0 %v937
      %1045 = vmatprep.subr.bf16.mxu0 %v941
      %1046 = vmatpush1.bf16.msra.mxu0 %v940
      %1047 = vmatprep.subr.bf16.mxu0 %v944
      %1048 = vmatpush1.bf16.msra.mxu0 %v943
      %1049 = vmatprep.subr.bf16.mxu0 %v947
      %1050 = vmatpush1.bf16.msra.mxu0 %v946
      %1051 = vmatprep.subr.bf16.mxu0 %v950
      %1052 = vmatpush1.bf16.msra.mxu0 %v949
      %1053 = vmatprep.subr.bf16.mxu0 %v953
      %1054 = vmatpush1.bf16.msra.mxu0 %v952
      %1055 = vmatprep.subr.bf16.mxu0 %v956
      %1056 = vmatpush1.bf16.msra.mxu0 %v955
      %1057 = vmatprep.mubr.bf16.mxu0 %v1009
      %1058 = vmatmul.mubr.bf16.gmra.mrb[0].mxu0 %v1008
      %v1059 = vpop.f32.mrb[0].mxu0
      %v1060 = vadd.f32 %v971, %v1059
      %v1061 = vpop.f32.mrb[0].mxu0
      %v1062 = vadd.f32 %v971, %v1061
      %v1063 = vpop.f32.mrb[0].mxu0
      %v1064 = vadd.f32 %v976, %v1063
      %v1065 = vpop.f32.mrb[0].mxu0
      %v1066 = vadd.f32 %v976, %v1065
      %1067 = vmatprep.mubr.bf16.mxu0 %v1012
      %1068 = vmatmul.mubr.bf16.gmra.mrb[0].mxu0 %v1011
      %v1069 = vpop.f32.mrb[0].mxu0
      %v1070 = vadd.f32 %v981, %v1069
      %v1071 = vpop.f32.mrb[0].mxu0
      %v1072 = vadd.f32 %v981, %v1071
      %v1073 = vpop.f32.mrb[0].mxu0
      %v1074 = vadd.f32 %v986, %v1073
      %v1075 = vpop.f32.mrb[0].mxu0
      %v1076 = vadd.f32 %v986, %v1075
      %1077 = vdwg.mxu0
      %1078 = vmatprep.subr.bf16.mxu0 %v959
      %1079 = vmatpush1.bf16.msra.mxu0 %v958
      %1080 = vmatprep.subr.bf16.mxu0 %v962
      %1081 = vmatpush1.bf16.msra.mxu0 %v961
      %1082 = vmatprep.subr.bf16.mxu0 0
      %1083 = vmatpush1.bf16.msra.mxu0 0
      %1084 = vmatprep.subr.bf16.mxu0 0
      %1085 = vmatpush1.bf16.msra.mxu0 0
      %1086 = vmatprep.subr.bf16.mxu0 0
      %1087 = vmatpush1.bf16.msra.mxu0 0
      %1088 = vmatprep.subr.bf16.mxu0 0
      %1089 = vmatpush1.bf16.msra.mxu0 0
      %1090 = vmatprep.subr.bf16.mxu0 0
      %1091 = vmatpush1.bf16.msra.mxu0 0
      %1092 = vmatprep.subr.bf16.mxu0 0
      %1093 = vmatpush1.bf16.msra.mxu0 0
      %1094 = vmatprep.subr.bf16.mxu0 0
      %1095 = vmatpush1.bf16.msra.mxu0 0
      %1096 = vmatprep.subr.bf16.mxu0 0
      %1097 = vmatpush1.bf16.msra.mxu0 0
      %1098 = vmatprep.subr.bf16.mxu0 0
      %1099 = vmatpush1.bf16.msra.mxu0 0
      %1100 = vmatprep.subr.bf16.mxu0 0
      %1101 = vmatpush1.bf16.msra.mxu0 0
      %1102 = vmatprep.subr.bf16.mxu0 0
      %1103 = vmatpush1.bf16.msra.mxu0 0
      %1104 = vmatprep.subr.bf16.mxu0 0
      %1105 = vmatpush1.bf16.msra.mxu0 0
      %1106 = vmatprep.subr.bf16.mxu0 0
      %1107 = vmatpush1.bf16.msra.mxu0 0
      %1108 = vmatprep.subr.bf16.mxu0 0
      %1109 = vmatpush1.bf16.msra.mxu0 0
      %1110 = vmatprep.mubr.bf16.mxu0 0
      %1111 = vmatmul.mubr.bf16.gmra.mrb[0].mxu0 %v1020
      %v1112 = vpop.f32.mrb[0].mxu0
      %v1113 = vadd.f32 %v1060, %v1112
      %v1114 = vpop.f32.mrb[0].mxu0
      %v1115 = vadd.f32 %v1062, %v1114
      %v1116 = vpop.f32.mrb[0].mxu0
      %v1117 = vadd.f32 %v1064, %v1116
      %v1118 = vpop.f32.mrb[0].mxu0
      %v1119 = vadd.f32 %v1066, %v1118
      %1120 = vmatprep.mubr.bf16.mxu0 0
      %1121 = vmatmul.mubr.bf16.gmra.mrb[0].mxu0 %v1023
      %v1122 = vpop.f32.mrb[0].mxu0
      %v1123 = vadd.f32 %v1070, %v1122
      %v1124 = vpop.f32.mrb[0].mxu0
      %v1125 = vadd.f32 %v1072, %v1124
      %v1126 = vpop.f32.mrb[0].mxu0
      %v1127 = vadd.f32 %v1074, %v1126
      %v1128 = vpop.f32.mrb[0].mxu0
      %v1129 = vadd.f32 %v1076, %v1128
      %1130 = vdwg.mxu0
      %1131 = vmatprep.subr.bf16.mxu0 0
      %1132 = vmatpush1.bf16.msra.mxu0 %v912
      %1133 = vmatprep.subr.bf16.mxu0 0
      %1134 = vmatpush1.bf16.msra.mxu0 %v915
      %1135 = vmatprep.subr.bf16.mxu0 0
      %1136 = vmatpush1.bf16.msra.mxu0 %v918
      %1137 = vmatprep.subr.bf16.mxu0 0
      %1138 = vmatpush1.bf16.msra.mxu0 %v921
      %1139 = vmatprep.subr.bf16.mxu0 0
      %1140 = vmatpush1.bf16.msra.mxu0 %v924
      %1141 = vmatprep.subr.bf16.mxu0 0
      %1142 = vmatpush1.bf16.msra.mxu0 %v927
      %1143 = vmatprep.subr.bf16.mxu0 0
      %1144 = vmatpush1.bf16.msra.mxu0 %v930
      %1145 = vmatprep.subr.bf16.mxu0 0
      %1146 = vmatpush1.bf16.msra.mxu0 %v933
      %1147 = vmatprep.subr.bf16.mxu0 0
      %1148 = vmatpush1.bf16.msra.mxu0 %v936
      %1149 = vmatprep.subr.bf16.mxu0 0
      %1150 = vmatpush1.bf16.msra.mxu0 %v939
      %1151 = vmatprep.subr.bf16.mxu0 0
      %1152 = vmatpush1.bf16.msra.mxu0 %v942
      %1153 = vmatprep.subr.bf16.mxu0 0
      %1154 = vmatpush1.bf16.msra.mxu0 %v945
      %1155 = vmatprep.subr.bf16.mxu0 0
      %1156 = vmatpush1.bf16.msra.mxu0 %v948
      %1157 = vmatprep.subr.bf16.mxu0 0
      %1158 = vmatpush1.bf16.msra.mxu0 %v951
      %1159 = vmatprep.subr.bf16.mxu0 0
      %1160 = vmatpush1.bf16.msra.mxu0 %v954
      %1161 = vmatprep.subr.bf16.mxu0 0
      %1162 = vmatpush1.bf16.msra.mxu0 %v957
      %1163 = vmatprep.mubr.bf16.mxu0 %v1009
      %1164 = vmatmul.mubr.bf16.gmra.mrb[0].mxu0 %v1008
      %v1165 = vpop.f32.mrb[0].mxu0
      %v1166 = vadd.f32 %v971, %v1165
      %v1167 = vpop.f32.mrb[0].mxu0
      %v1168 = vpop.f32.mrb[0].mxu0
      %v1169 = vadd.f32 %v976, %v1168
      %v1170 = vpop.f32.mrb[0].mxu0
      %1171 = vmatprep.mubr.bf16.mxu0 %v1012
      %1172 = vmatmul.mubr.bf16.gmra.mrb[0].mxu0 %v1011
      %v1173 = vpop.f32.mrb[0].mxu0
      %v1174 = vadd.f32 %v981, %v1173
      %v1175 = vpop.f32.mrb[0].mxu0
      %v1176 = vpop.f32.mrb[0].mxu0
      %v1177 = vadd.f32 %v986, %v1176
      %v1178 = vpop.f32.mrb[0].mxu0
      %1179 = vdwg.mxu0
      %1180 = vmatprep.subr.bf16.mxu0 0
      %1181 = vmatpush1.bf16.msra.mxu0 %v960
      %1182 = vmatprep.subr.bf16.mxu0 0
      %1183 = vmatpush1.bf16.msra.mxu0 %v963
      %1184 = vmatprep.subr.bf16.mxu0 0
      %1185 = vmatpush1.bf16.msra.mxu0 0
      %1186 = vmatprep.subr.bf16.mxu0 0
      %1187 = vmatpush1.bf16.msra.mxu0 0
      %1188 = vmatprep.subr.bf16.mxu0 0
      %1189 = vmatpush1.bf16.msra.mxu0 0
      %1190 = vmatprep.subr.bf16.mxu0 0
      %1191 = vmatpush1.bf16.msra.mxu0 0
      %1192 = vmatprep.subr.bf16.mxu0 0
      %1193 = vmatpush1.bf16.msra.mxu0 0
      %1194 = vmatprep.subr.bf16.mxu0 0
      %1195 = vmatpush1.bf16.msra.mxu0 0
      %1196 = vmatprep.subr.bf16.mxu0 0
      %1197 = vmatpush1.bf16.msra.mxu0 0
      %1198 = vmatprep.subr.bf16.mxu0 0
      %1199 = vmatpush1.bf16.msra.mxu0 0
      %1200 = vmatprep.subr.bf16.mxu0 0
      %1201 = vmatpush1.bf16.msra.mxu0 0
      %1202 = vmatprep.subr.bf16.mxu0 0
      %1203 = vmatpush1.bf16.msra.mxu0 0
      %1204 = vmatprep.subr.bf16.mxu0 0
      %1205 = vmatpush1.bf16.msra.mxu0 0
      %1206 = vmatprep.subr.bf16.mxu0 0
      %1207 = vmatpush1.bf16.msra.mxu0 0
      %1208 = vmatprep.subr.bf16.mxu0 0
      %1209 = vmatpush1.bf16.msra.mxu0 0
      %1210 = vmatprep.subr.bf16.mxu0 0
      %1211 = vmatpush1.bf16.msra.mxu0 0
      %1212 = vmatprep.mubr.bf16.mxu0 0
      %1213 = vmatmul.mubr.bf16.gmra.mrb[0].mxu0 %v1020
      %v1214 = vpop.f32.mrb[0].mxu0
      %v1215 = vadd.f32 %v1166, %v1214
      %v1216 = vpop.f32.mrb[0].mxu0
      %v1217 = vpop.f32.mrb[0].mxu0
      %v1218 = vadd.f32 %v1169, %v1217
      %v1219 = vpop.f32.mrb[0].mxu0
      %1220 = vmatprep.mubr.bf16.mxu0 0
      %1221 = vmatmul.mubr.bf16.gmra.mrb[0].mxu0 %v1023
      %v1222 = vpop.f32.mrb[0].mxu0
      %v1223 = vadd.f32 %v1174, %v1222
      %v1224 = vpop.f32.mrb[0].mxu0
      %v1225 = vpop.f32.mrb[0].mxu0
      %v1226 = vadd.f32 %v1177, %v1225
      %v1227 = vpop.f32.mrb[0].mxu0
      %1228 = vdwg.mxu0
      %v1229 = vmax.f32 %v1113, 0.0
      %v1230 = vmax.f32 %v1115, 0.0
      %v1231 = vmax.f32 %v1215, 0.0
      %v1232 = vmax.f32 %v1117, 0.0
      %v1233 = vmax.f32 %v1119, 0.0
      %v1234 = vmax.f32 %v1218, 0.0
      %v1235 = vmax.f32 %v1123, 0.0
      %v1236 = vmax.f32 %v1125, 0.0
      %v1237 = vmax.f32 %v1223, 0.0
      %v1238 = vmax.f32 %v1127, 0.0
      %v1239 = vmax.f32 %v1129, 0.0
      %v1240 = vmax.f32 %v1226, 0.0
      %v1241 = vld [vmem:[%s5] sm:$0x7f]
      %v1242 = vld [vmem:[%s6] sm:$0x7f]
      %1244 = vset.pattern.permute.xlu0 0
      %1245 = vperm.xlu0 %1244, %v1242
      %v1246 = vpop.permute.xlu0 %1245
      %v1249 = vsel %vm1018, %v1241, 0
      %1251 = vmatprep.subr.mxu0 %v1230
      %1252 = vmatpush1.msra.mxu0 %v1229
      %1253 = vmatprep.subr.mxu0 %v1233
      %1254 = vmatpush1.msra.mxu0 %v1232
      %1255 = vmatprep.subr.mxu0 %v1236
      %1256 = vmatpush1.msra.mxu0 %v1235
      %1257 = vmatprep.subr.mxu0 %v1239
      %1258 = vmatpush1.msra.mxu0 %v1238
      %1259 = vmatprep.subr.mxu0 0.0
      %1260 = vmatpush1.msra.mxu0 0.0
      %1261 = vmatprep.subr.mxu0 0.0
      %1262 = vmatpush1.msra.mxu0 0.0
      %1263 = vmatprep.subr.mxu0 0.0
      %1264 = vmatpush1.msra.mxu0 0.0
      %1265 = vmatprep.subr.mxu0 0.0
      %1266 = vmatpush1.msra.mxu0 0.0
      %1267 = vmatprep.subr.mxu0 0.0
      %1268 = vmatpush1.msra.mxu0 0.0
      %1269 = vmatprep.subr.mxu0 0.0
      %1270 = vmatpush1.msra.mxu0 0.0
      %1271 = vmatprep.subr.mxu0 0.0
      %1272 = vmatpush1.msra.mxu0 0.0
      %1273 = vmatprep.subr.mxu0 0.0
      %1274 = vmatpush1.msra.mxu0 0.0
      %1275 = vmatprep.subr.mxu0 0.0
      %1276 = vmatpush1.msra.mxu0 0.0
      %1277 = vmatprep.subr.mxu0 0.0
      %1278 = vmatpush1.msra.mxu0 0.0
      %1279 = vmatprep.subr.mxu0 0.0
      %1280 = vmatpush1.msra.mxu0 0.0
      %1281 = vmatprep.subr.mxu0 0.0
      %1282 = vmatpush1.msra.mxu0 0.0
      %1283 = vmatprep.subr.mxu0 0.0
      %1284 = vmatpush1.msra.mxu0 0.0
      %1285 = vmatprep.subr.mxu0 0.0
      %1286 = vmatpush1.msra.mxu0 0.0
      %1287 = vmatprep.subr.mxu0 0.0
      %1288 = vmatpush1.msra.mxu0 0.0
      %1289 = vmatprep.subr.mxu0 0.0
      %1290 = vmatpush1.msra.mxu0 0.0
      %1291 = vmatprep.subr.mxu0 0.0
      %1292 = vmatpush1.msra.mxu0 0.0
      %1293 = vmatprep.subr.mxu0 0.0
      %1294 = vmatpush1.msra.mxu0 0.0
      %1295 = vmatprep.subr.mxu0 0.0
      %1296 = vmatpush1.msra.mxu0 0.0
      %1297 = vmatprep.subr.mxu0 0.0
      %1298 = vmatpush1.msra.mxu0 0.0
      %1299 = vmatprep.subr.mxu0 0.0
      %1300 = vmatpush1.msra.mxu0 0.0
      %1301 = vmatprep.subr.mxu0 0.0
      %1302 = vmatpush1.msra.mxu0 0.0
      %1303 = vmatprep.subr.mxu0 0.0
      %1304 = vmatpush1.msra.mxu0 0.0
      %1305 = vmatprep.subr.mxu0 0.0
      %1306 = vmatpush1.msra.mxu0 0.0
      %1307 = vmatprep.subr.mxu0 0.0
      %1308 = vmatpush1.msra.mxu0 0.0
      %1309 = vmatprep.subr.mxu0 0.0
      %1310 = vmatpush1.msra.mxu0 0.0
      %1311 = vmatprep.subr.mxu0 0.0
      %1312 = vmatpush1.msra.mxu0 0.0
      %1313 = vmatprep.subr.mxu0 0.0
      %1314 = vmatpush1.msra.mxu0 0.0
      %1315 = vmatprep.mubr.f32.mxu0 0.0
      %1316 = vmatmul.mubr.f32.gmra.mrb[0].mxu0 %v1249
      %v1317 = vpop.f32.mrb[0].mxu0
      %v1318 = vadd.f32 %v1246, %v1317
      %v1319 = vpop.f32.mrb[0].mxu0
      %v1320 = vadd.f32 %v1246, %v1319
      %1321 = vdwg.mxu0
      %1322 = vmatprep.subr.mxu0 0.0
      %1323 = vmatpush1.msra.mxu0 %v1231
      %1324 = vmatprep.subr.mxu0 0.0
      %1325 = vmatpush1.msra.mxu0 %v1234
      %1326 = vmatprep.subr.mxu0 0.0
      %1327 = vmatpush1.msra.mxu0 %v1237
      %1328 = vmatprep.subr.mxu0 0.0
      %1329 = vmatpush1.msra.mxu0 %v1240
      %1330 = vmatprep.subr.mxu0 0.0
      %1331 = vmatpush1.msra.mxu0 0.0
      %1332 = vmatprep.subr.mxu0 0.0
      %1333 = vmatpush1.msra.mxu0 0.0
      %1334 = vmatprep.subr.mxu0 0.0
      %1335 = vmatpush1.msra.mxu0 0.0
      %1336 = vmatprep.subr.mxu0 0.0
      %1337 = vmatpush1.msra.mxu0 0.0
      %1338 = vmatprep.subr.mxu0 0.0
      %1339 = vmatpush1.msra.mxu0 0.0
      %1340 = vmatprep.subr.mxu0 0.0
      %1341 = vmatpush1.msra.mxu0 0.0
      %1342 = vmatprep.subr.mxu0 0.0
      %1343 = vmatpush1.msra.mxu0 0.0
      %1344 = vmatprep.subr.mxu0 0.0
      %1345 = vmatpush1.msra.mxu0 0.0
      %1346 = vmatprep.subr.mxu0 0.0
      %1347 = vmatpush1.msra.mxu0 0.0
      %1348 = vmatprep.subr.mxu0 0.0
      %1349 = vmatpush1.msra.mxu0 0.0
      %1350 = vmatprep.subr.mxu0 0.0
      %1351 = vmatpush1.msra.mxu0 0.0
      %1352 = vmatprep.subr.mxu0 0.0
      %1353 = vmatpush1.msra.mxu0 0.0
      %1354 = vmatprep.subr.mxu0 0.0
      %1355 = vmatpush1.msra.mxu0 0.0
      %1356 = vmatprep.subr.mxu0 0.0
      %1357 = vmatpush1.msra.mxu0 0.0
      %1358 = vmatprep.subr.mxu0 0.0
      %1359 = vmatpush1.msra.mxu0 0.0
      %1360 = vmatprep.subr.mxu0 0.0
      %1361 = vmatpush1.msra.mxu0 0.0
      %1362 = vmatprep.subr.mxu0 0.0
      %1363 = vmatpush1.msra.mxu0 0.0
      %1364 = vmatprep.subr.mxu0 0.0
      %1365 = vmatpush1.msra.mxu0 0.0
      %1366 = vmatprep.subr.mxu0 0.0
      %1367 = vmatpush1.msra.mxu0 0.0
      %1368 = vmatprep.subr.mxu0 0.0
      %1369 = vmatpush1.msra.mxu0 0.0
      %1370 = vmatprep.subr.mxu0 0.0
      %1371 = vmatpush1.msra.mxu0 0.0
      %1372 = vmatprep.subr.mxu0 0.0
      %1373 = vmatpush1.msra.mxu0 0.0
      %1374 = vmatprep.subr.mxu0 0.0
      %1375 = vmatpush1.msra.mxu0 0.0
      %1376 = vmatprep.subr.mxu0 0.0
      %1377 = vmatpush1.msra.mxu0 0.0
      %1378 = vmatprep.subr.mxu0 0.0
      %1379 = vmatpush1.msra.mxu0 0.0
      %1380 = vmatprep.subr.mxu0 0.0
      %1381 = vmatpush1.msra.mxu0 0.0
      %1382 = vmatprep.subr.mxu0 0.0
      %1383 = vmatpush1.msra.mxu0 0.0
      %1384 = vmatprep.subr.mxu0 0.0
      %1385 = vmatpush1.msra.mxu0 0.0
      %1386 = vmatprep.mubr.f32.mxu0 0.0
      %1387 = vmatmul.mubr.f32.gmra.mrb[0].mxu0 %v1249
      %v1388 = vpop.f32.mrb[0].mxu0
      %v1389 = vadd.f32 %v1246, %v1388
      %v1390 = vpop.f32.mrb[0].mxu0
      %1391 = vdwg.mxu0
      %v1392 = vlaneseq
      %v1393 = vshrl.u32 %v1392, 7
      %vm1394 = vcmp.ge.s32.totalorder %v1393, 1
      %vm1395 = vcmp.lt.s32.totalorder %v1393, 2
      %vm1396 = vmand %vm1394, %vm1395
      %v1397 = vsel %vm1396, %v1318, 0.0
      %v1398 = vsel %vm1396, %v1320, 0.0
      %v1399 = vsel %vm1396, %v1389, 0.0
      %v1400 = vmul.f32 %v1397, 1.442695
      %v1401 = vpow.pop %v1400
      %v1402 = vmul.f32 %v1398, 1.442695
      %v1403 = vpow.pop %v1402
      %v1404 = vmul.f32 %v1399, 1.442695
      %v1405 = vpow.pop %v1404
      %v1406 = vsel %vm1396, %v1401, %v1318
      %v1407 = vsel %vm1396, %v1403, %v1320
      %v1408 = vsel %vm1396, %v1405, %v1389
      %1409 = vst [vmem:[%s278] sm:$0x7f] %v1406
      %1410 = vst [vmem:[%s278 + $0x8] sm:$0x7f] %v1407
      %vm1411 = vcmask 555008
      %1412 = vst.msk [vmem:[%s278 + $0x10] sm:$0x7f] %vm1411, %v1408
      %s1413 = scalar_lea.vmem %s1, 16
      %v1414 = vld [vmem:[%s1413] sm:$0xf]
      %v1415 = vld [vmem:[%s1413 + $0x4] sm:$0xf]
      %v1416 = vld [vmem:[%s1413 + $0x8] sm:$0xf]
      %v1417 = vld [vmem:[%s1413 + $0xc] sm:$0xf]
      %s1418 = scalar_lea.vmem %s2, 32
      %v1419 = vld [vmem:[%s1418] sm:$0xff]
      %v1420 = vld [vmem:[%s1418 + $0x8] sm:$0xff]
      %v1421 = vld [vmem:[%s1418 + $0x10] sm:$0xff]
      %v1422 = vld [vmem:[%s1418 + $0x18] sm:$0xff]
      %1424 = vset.pattern.permute.xlu0 0
      %1425 = vperm.xlu0 %1424, %v1419
      %v1426 = vpop.permute.xlu0 %1425
      %1429 = vset.pattern.permute.xlu0 0
      %1430 = vperm.xlu0 %1429, %v1420
      %v1431 = vpop.permute.xlu0 %1430
      %1434 = vset.pattern.permute.xlu0 0
      %1435 = vperm.xlu0 %1434, %v1421
      %v1436 = vpop.permute.xlu0 %1435
      %1439 = vset.pattern.permute.xlu0 0
      %1440 = vperm.xlu0 %1439, %v1422
      %v1441 = vpop.permute.xlu0 %1440
      %v1447 = vunpack.c.l.b16 %v1414
      %v1448 = vunpack.c.l.b16 %v1415
      %v1449 = vunpack.c.l.b16 %v1416
      %v1450 = vunpack.c.l.b16 %v1417
      %v1451 = vpack.c.b16 %v1448, %v1447
      %v1452 = vpack.c.b16 %v1450, %v1449
      %v1454 = vsel %vm376, %v1451, 0
      %v1457 = vsel %vm376, %v1452, 0
      %1459 = vmatprep.subr.bf16.mxu0 %v362
      %1460 = vmatpush1.bf16.msra.mxu0 %v361
      %1461 = vmatprep.subr.bf16.mxu0 %v365
      %1462 = vmatpush1.bf16.msra.mxu0 %v364
      %1463 = vmatprep.subr.bf16.mxu0 %v391
      %1464 = vmatpush1.bf16.msra.mxu0 %v388
      %1465 = vmatprep.subr.bf16.mxu0 0
      %1466 = vmatpush1.bf16.msra.mxu0 0
      %1467 = vmatprep.subr.bf16.mxu0 0
      %1468 = vmatpush1.bf16.msra.mxu0 0
      %1469 = vmatprep.subr.bf16.mxu0 0
      %1470 = vmatpush1.bf16.msra.mxu0 0
      %1471 = vmatprep.subr.bf16.mxu0 0
      %1472 = vmatpush1.bf16.msra.mxu0 0
      %1473 = vmatprep.subr.bf16.mxu0 0
      %1474 = vmatpush1.bf16.msra.mxu0 0
      %1475 = vmatprep.subr.bf16.mxu0 0
      %1476 = vmatpush1.bf16.msra.mxu0 0
      %1477 = vmatprep.subr.bf16.mxu0 0
      %1478 = vmatpush1.bf16.msra.mxu0 0
      %1479 = vmatprep.subr.bf16.mxu0 0
      %1480 = vmatpush1.bf16.msra.mxu0 0
      %1481 = vmatprep.subr.bf16.mxu0 0
      %1482 = vmatpush1.bf16.msra.mxu0 0
      %1483 = vmatprep.subr.bf16.mxu0 0
      %1484 = vmatpush1.bf16.msra.mxu0 0
      %1485 = vmatprep.subr.bf16.mxu0 0
      %1486 = vmatpush1.bf16.msra.mxu0 0
      %1487 = vmatprep.subr.bf16.mxu0 0
      %1488 = vmatpush1.bf16.msra.mxu0 0
      %1489 = vmatprep.subr.bf16.mxu0 0
      %1490 = vmatpush1.bf16.msra.mxu0 0
      %1491 = vmatprep.mubr.bf16.mxu0 0
      %1492 = vmatmul.mubr.bf16.gmra.mrb[0].mxu0 %v1454
      %v1493 = vpop.f32.mrb[0].mxu0
      %v1494 = vadd.f32 %v1426, %v1493
      %v1495 = vpop.f32.mrb[0].mxu0
      %v1496 = vadd.f32 %v1426, %v1495
      %v1497 = vpop.f32.mrb[0].mxu0
      %v1498 = vadd.f32 %v1431, %v1497
      %v1499 = vpop.f32.mrb[0].mxu0
      %v1500 = vadd.f32 %v1431, %v1499
      %1501 = vmatprep.mubr.bf16.mxu0 0
      %1502 = vmatmul.mubr.bf16.gmra.mrb[0].mxu0 %v1457
      %v1503 = vpop.f32.mrb[0].mxu0
      %v1504 = vadd.f32 %v1436, %v1503
      %v1505 = vpop.f32.mrb[0].mxu0
      %v1506 = vadd.f32 %v1436, %v1505
      %v1507 = vpop.f32.mrb[0].mxu0
      %v1508 = vadd.f32 %v1441, %v1507
      %v1509 = vpop.f32.mrb[0].mxu0
      %v1510 = vadd.f32 %v1441, %v1509
      %1511 = vdwg.mxu0
      %1512 = vmatprep.subr.bf16.mxu0 0
      %1513 = vmatpush1.bf16.msra.mxu0 %v363
      %1514 = vmatprep.subr.bf16.mxu0 0
      %1515 = vmatpush1.bf16.msra.mxu0 %v366
      %1516 = vmatprep.subr.bf16.mxu0 0
      %1517 = vmatpush1.bf16.msra.mxu0 %v394
      %1518 = vmatprep.subr.bf16.mxu0 0
      %1519 = vmatpush1.bf16.msra.mxu0 0
      %1520 = vmatprep.subr.bf16.mxu0 0
      %1521 = vmatpush1.bf16.msra.mxu0 0
      %1522 = vmatprep.subr.bf16.mxu0 0
      %1523 = vmatpush1.bf16.msra.mxu0 0
      %1524 = vmatprep.subr.bf16.mxu0 0
      %1525 = vmatpush1.bf16.msra.mxu0 0
      %1526 = vmatprep.subr.bf16.mxu0 0
      %1527 = vmatpush1.bf16.msra.mxu0 0
      %1528 = vmatprep.subr.bf16.mxu0 0
      %1529 = vmatpush1.bf16.msra.mxu0 0
      %1530 = vmatprep.subr.bf16.mxu0 0
      %1531 = vmatpush1.bf16.msra.mxu0 0
      %1532 = vmatprep.subr.bf16.mxu0 0
      %1533 = vmatpush1.bf16.msra.mxu0 0
      %1534 = vmatprep.subr.bf16.mxu0 0
      %1535 = vmatpush1.bf16.msra.mxu0 0
      %1536 = vmatprep.subr.bf16.mxu0 0
      %1537 = vmatpush1.bf16.msra.mxu0 0
      %1538 = vmatprep.subr.bf16.mxu0 0
      %1539 = vmatpush1.bf16.msra.mxu0 0
      %1540 = vmatprep.subr.bf16.mxu0 0
      %1541 = vmatpush1.bf16.msra.mxu0 0
      %1542 = vmatprep.subr.bf16.mxu0 0
      %1543 = vmatpush1.bf16.msra.mxu0 0
      %1544 = vmatprep.mubr.bf16.mxu0 0
      %1545 = vmatmul.mubr.bf16.gmra.mrb[0].mxu0 %v1454
      %v1546 = vpop.f32.mrb[0].mxu0
      %v1547 = vadd.f32 %v1426, %v1546
      %v1548 = vpop.f32.mrb[0].mxu0
      %v1549 = vpop.f32.mrb[0].mxu0
      %v1550 = vadd.f32 %v1431, %v1549
      %v1551 = vpop.f32.mrb[0].mxu0
      %1552 = vmatprep.mubr.bf16.mxu0 0
      %1553 = vmatmul.mubr.bf16.gmra.mrb[0].mxu0 %v1457
      %v1554 = vpop.f32.mrb[0].mxu0
      %v1555 = vadd.f32 %v1436, %v1554
      %v1556 = vpop.f32.mrb[0].mxu0
      %v1557 = vpop.f32.mrb[0].mxu0
      %v1558 = vadd.f32 %v1441, %v1557
      %v1559 = vpop.f32.mrb[0].mxu0
      %1560 = vdwg.mxu0
      %v1561 = vmax.f32 %v1494, 0.0
      %v1562 = vmax.f32 %v1496, 0.0
      %v1563 = vmax.f32 %v1547, 0.0
      %v1564 = vmax.f32 %v1498, 0.0
      %v1565 = vmax.f32 %v1500, 0.0
      %v1566 = vmax.f32 %v1550, 0.0
      %v1567 = vmax.f32 %v1504, 0.0
      %v1568 = vmax.f32 %v1506, 0.0
      %v1569 = vmax.f32 %v1555, 0.0
      %v1570 = vmax.f32 %v1508, 0.0
      %v1571 = vmax.f32 %v1510, 0.0
      %v1572 = vmax.f32 %v1558, 0.0
      %v1573 = vpack.c.bf16 %v1564, %v1561
      %v1574 = vpack.c.bf16 %v1565, %v1562
      %v1575 = vpack.c.bf16 %v1566, %v1563
      %v1576 = vpack.c.bf16 %v1570, %v1567
      %v1577 = vpack.c.bf16 %v1571, %v1568
      %v1578 = vpack.c.bf16 %v1572, %v1569
      %1579 = vst [vmem:[#allocation2 + $0x8] sm:$0xff] %v1573
      %1580 = vst [vmem:[#allocation2 + $0x10] sm:$0xff] %v1574
      %1581 = vst.msk [vmem:[#allocation2 + $0x18] sm:$0xff] %vm284, %v1575
      %1582 = vst [vmem:[#allocation2 + $0x30] sm:$0xff] %v1576
      %1583 = vst [vmem:[#allocation2 + $0x38] sm:$0xff] %v1577
      %1584 = vst.msk [vmem:[#allocation2 + $0x40] sm:$0xff] %vm284, %v1578
      %v1585 = vld [vmem:[#allocation2] sm:$0xff]
      %v1586 = vld [vmem:[#allocation2 + $0x8] sm:$0xff]
      %v1587 = vld [vmem:[#allocation2 + $0x10] sm:$0xff]
      %v1588 = vld [vmem:[#allocation2 + $0x18] sm:$0xff]
      %v1589 = vld [vmem:[#allocation2 + $0x28] sm:$0xff]
      %v1590 = vld [vmem:[#allocation2 + $0x30] sm:$0xff]
      %v1591 = vld [vmem:[#allocation2 + $0x38] sm:$0xff]
      %v1592 = vld [vmem:[#allocation2 + $0x40] sm:$0xff]
      %1601 = vrot.lane.b32.xlu0 %v1585, 19
      %v1602 = vpop.permute.xlu0 %1601
      %1603 = vrot.lane.b32.xlu0 %v1586, 19
      %v1604 = vpop.permute.xlu0 %1603
      %1605 = vrot.lane.b32.xlu0 %v1587, 19
      %v1606 = vpop.permute.xlu0 %1605
      %1607 = vrot.lane.b32.xlu0 %v1588, 19
      %v1608 = vpop.permute.xlu0 %1607
      %1609 = vrot.lane.b32.xlu0 %v1589, 19
      %v1610 = vpop.permute.xlu0 %1609
      %1611 = vrot.lane.b32.xlu0 %v1590, 19
      %v1612 = vpop.permute.xlu0 %1611
      %1613 = vrot.lane.b32.xlu0 %v1591, 19
      %v1614 = vpop.permute.xlu0 %1613
      %1615 = vrot.lane.b32.xlu0 %v1592, 19
      %v1616 = vpop.permute.xlu0 %1615
      %v1617 = vsel %vm554, %v1602, %v1604
      %v1618 = vsel %vm554, %v1604, %v1606
      %v1619 = vsel %vm554, %v1606, %v1608
      %v1620 = vsel %vm554, %v1610, %v1612
      %v1621 = vsel %vm554, %v1612, %v1614
      %v1622 = vsel %vm554, %v1614, %v1616
      %1629 = vst [vmem:[#allocation3] sm:$0xff] %v1617
      %1630 = vst [vmem:[#allocation3 + $0x8] sm:$0xff] %v1618
      %1631 = vst.msk [vmem:[#allocation3 + $0x10] sm:$0xff] %vm284, %v1619
      %1632 = vst [vmem:[#allocation3 + $0x18] sm:$0xff] %v1620
      %1633 = vst [vmem:[#allocation3 + $0x20] sm:$0xff] %v1621
      %1634 = vst.msk [vmem:[#allocation3 + $0x28] sm:$0xff] %vm284, %v1622
      %v1635 = vld [vmem:[#allocation2] sm:$0xff]
      %v1636 = vld [vmem:[#allocation2 + $0x8] sm:$0xff]
      %v1637 = vld [vmem:[#allocation2 + $0x10] sm:$0xff]
      %v1638 = vld [vmem:[#allocation2 + $0x18] sm:$0xff]
      %v1639 = vld [vmem:[#allocation2 + $0x28] sm:$0xff]
      %v1640 = vld [vmem:[#allocation2 + $0x30] sm:$0xff]
      %v1641 = vld [vmem:[#allocation2 + $0x38] sm:$0xff]
      %v1642 = vld [vmem:[#allocation2 + $0x40] sm:$0xff]
      %1651 = vrot.lane.b32.xlu0 %v1635, 18
      %v1652 = vpop.permute.xlu0 %1651
      %1653 = vrot.lane.b32.xlu0 %v1636, 18
      %v1654 = vpop.permute.xlu0 %1653
      %1655 = vrot.lane.b32.xlu0 %v1637, 18
      %v1656 = vpop.permute.xlu0 %1655
      %1657 = vrot.lane.b32.xlu0 %v1638, 18
      %v1658 = vpop.permute.xlu0 %1657
      %1659 = vrot.lane.b32.xlu0 %v1639, 18
      %v1660 = vpop.permute.xlu0 %1659
      %1661 = vrot.lane.b32.xlu0 %v1640, 18
      %v1662 = vpop.permute.xlu0 %1661
      %1663 = vrot.lane.b32.xlu0 %v1641, 18
      %v1664 = vpop.permute.xlu0 %1663
      %1665 = vrot.lane.b32.xlu0 %v1642, 18
      %v1666 = vpop.permute.xlu0 %1665
      %v1667 = vsel %vm605, %v1652, %v1654
      %v1668 = vsel %vm605, %v1654, %v1656
      %v1669 = vsel %vm605, %v1656, %v1658
      %v1670 = vsel %vm605, %v1660, %v1662
      %v1671 = vsel %vm605, %v1662, %v1664
      %v1672 = vsel %vm605, %v1664, %v1666
      %1679 = vst [vmem:[#allocation3 + $0x30] sm:$0xff] %v1667
      %1680 = vst [vmem:[#allocation3 + $0x38] sm:$0xff] %v1668
      %1681 = vst.msk [vmem:[#allocation3 + $0x40] sm:$0xff] %vm284, %v1669
      %1682 = vst [vmem:[#allocation3 + $0x48] sm:$0xff] %v1670
      %1683 = vst [vmem:[#allocation3 + $0x50] sm:$0xff] %v1671
      %1684 = vst.msk [vmem:[#allocation3 + $0x58] sm:$0xff] %vm284, %v1672
      %v1685 = vld [vmem:[#allocation2] sm:$0xff]
      %v1686 = vld [vmem:[#allocation2 + $0x8] sm:$0xff]
      %v1687 = vld [vmem:[#allocation2 + $0x10] sm:$0xff]
      %v1688 = vld [vmem:[#allocation2 + $0x18] sm:$0xff]
      %v1689 = vld [vmem:[#allocation2 + $0x28] sm:$0xff]
      %v1690 = vld [vmem:[#allocation2 + $0x30] sm:$0xff]
      %v1691 = vld [vmem:[#allocation2 + $0x38] sm:$0xff]
      %v1692 = vld [vmem:[#allocation2 + $0x40] sm:$0xff]
      %1701 = vrot.lane.b32.xlu0 %v1685, 17
      %v1702 = vpop.permute.xlu0 %1701
      %1703 = vrot.lane.b32.xlu0 %v1686, 17
      %v1704 = vpop.permute.xlu0 %1703
      %1705 = vrot.lane.b32.xlu0 %v1687, 17
      %v1706 = vpop.permute.xlu0 %1705
      %1707 = vrot.lane.b32.xlu0 %v1688, 17
      %v1708 = vpop.permute.xlu0 %1707
      %1709 = vrot.lane.b32.xlu0 %v1689, 17
      %v1710 = vpop.permute.xlu0 %1709
      %1711 = vrot.lane.b32.xlu0 %v1690, 17
      %v1712 = vpop.permute.xlu0 %1711
      %1713 = vrot.lane.b32.xlu0 %v1691, 17
      %v1714 = vpop.permute.xlu0 %1713
      %1715 = vrot.lane.b32.xlu0 %v1692, 17
      %v1716 = vpop.permute.xlu0 %1715
      %v1717 = vsel %vm656, %v1702, %v1704
      %v1718 = vsel %vm656, %v1704, %v1706
      %v1719 = vsel %vm656, %v1706, %v1708
      %v1720 = vsel %vm656, %v1710, %v1712
      %v1721 = vsel %vm656, %v1712, %v1714
      %v1722 = vsel %vm656, %v1714, %v1716
      %1729 = vst [vmem:[#allocation3 + $0x60] sm:$0xff] %v1717
      %1730 = vst [vmem:[#allocation3 + $0x68] sm:$0xff] %v1718
      %1731 = vst.msk [vmem:[#allocation3 + $0x70] sm:$0xff] %vm284, %v1719
      %1732 = vst [vmem:[#allocation3 + $0x78] sm:$0xff] %v1720
      %1733 = vst [vmem:[#allocation3 + $0x80] sm:$0xff] %v1721
      %1734 = vst.msk [vmem:[#allocation3 + $0x88] sm:$0xff] %vm284, %v1722
      %v1735 = vld [vmem:[#allocation2] sm:$0xff]
      %v1736 = vld [vmem:[#allocation2 + $0x8] sm:$0xff]
      %v1737 = vld [vmem:[#allocation2 + $0x10] sm:$0xff]
      %v1738 = vld [vmem:[#allocation2 + $0x18] sm:$0xff]
      %v1739 = vld [vmem:[#allocation2 + $0x28] sm:$0xff]
      %v1740 = vld [vmem:[#allocation2 + $0x30] sm:$0xff]
      %v1741 = vld [vmem:[#allocation2 + $0x38] sm:$0xff]
      %v1742 = vld [vmem:[#allocation2 + $0x40] sm:$0xff]
      %1751 = vrot.lane.b32.xlu0 %v1735, 1
      %v1752 = vpop.permute.xlu0 %1751
      %1753 = vrot.lane.b32.xlu0 %v1736, 1
      %v1754 = vpop.permute.xlu0 %1753
      %1755 = vrot.lane.b32.xlu0 %v1737, 1
      %v1756 = vpop.permute.xlu0 %1755
      %1757 = vrot.lane.b32.xlu0 %v1738, 1
      %v1758 = vpop.permute.xlu0 %1757
      %1759 = vrot.lane.b32.xlu0 %v1739, 1
      %v1760 = vpop.permute.xlu0 %1759
      %1761 = vrot.lane.b32.xlu0 %v1740, 1
      %v1762 = vpop.permute.xlu0 %1761
      %1763 = vrot.lane.b32.xlu0 %v1741, 1
      %v1764 = vpop.permute.xlu0 %1763
      %1765 = vrot.lane.b32.xlu0 %v1742, 1
      %v1766 = vpop.permute.xlu0 %1765
      %v1767 = vsel %vm707, %v1752, %v1754
      %v1768 = vsel %vm707, %v1754, %v1756
      %v1769 = vsel %vm707, %v1756, %v1758
      %v1770 = vsel %vm707, %v1760, %v1762
      %v1771 = vsel %vm707, %v1762, %v1764
      %v1772 = vsel %vm707, %v1764, %v1766
      %1779 = vst [vmem:[#allocation3 + $0x90] sm:$0xff] %v1767
      %1780 = vst [vmem:[#allocation3 + $0x98] sm:$0xff] %v1768
      %1781 = vst.msk [vmem:[#allocation3 + $0xa0] sm:$0xff] %vm284, %v1769
      %1782 = vst [vmem:[#allocation3 + $0xa8] sm:$0xff] %v1770
      %1783 = vst [vmem:[#allocation3 + $0xb0] sm:$0xff] %v1771
      %1784 = vst.msk [vmem:[#allocation3 + $0xb8] sm:$0xff] %vm284, %v1772
      %v1785 = vld [vmem:[#allocation2 + $0x8] sm:$0xff]
      %v1786 = vld [vmem:[#allocation2 + $0x10] sm:$0xff]
      %v1787 = vld [vmem:[#allocation2 + $0x18] sm:$0xff]
      %v1788 = vld [vmem:[#allocation2 + $0x30] sm:$0xff]
      %v1789 = vld [vmem:[#allocation2 + $0x38] sm:$0xff]
      %v1790 = vld [vmem:[#allocation2 + $0x40] sm:$0xff]
      %1791 = vst [vmem:[#allocation3 + $0xc0] sm:$0xff] %v1785
      %1792 = vst [vmem:[#allocation3 + $0xc8] sm:$0xff] %v1786
      %1793 = vst.msk [vmem:[#allocation3 + $0xd0] sm:$0xff] %vm284, %v1787
      %1794 = vst [vmem:[#allocation3 + $0xd8] sm:$0xff] %v1788
      %1795 = vst [vmem:[#allocation3 + $0xe0] sm:$0xff] %v1789
      %1796 = vst.msk [vmem:[#allocation3 + $0xe8] sm:$0xff] %vm284, %v1790
      %v1797 = vld [vmem:[#allocation2 + $0x8] sm:$0xff]
      %v1798 = vld [vmem:[#allocation2 + $0x10] sm:$0xff]
      %v1799 = vld [vmem:[#allocation2 + $0x18] sm:$0xff]
      %v1800 = vld [vmem:[#allocation2 + $0x30] sm:$0xff]
      %v1801 = vld [vmem:[#allocation2 + $0x38] sm:$0xff]
      %v1802 = vld [vmem:[#allocation2 + $0x40] sm:$0xff]
      %1809 = vrot.lane.b32.xlu0 %v1797, 127
      %v1810 = vpop.permute.xlu0 %1809
      %1811 = vrot.lane.b32.xlu0 %v1798, 127
      %v1812 = vpop.permute.xlu0 %1811
      %1813 = vrot.lane.b32.xlu0 %v1799, 127
      %v1814 = vpop.permute.xlu0 %1813
      %1815 = vrot.lane.b32.xlu0 %v1800, 127
      %v1816 = vpop.permute.xlu0 %1815
      %1817 = vrot.lane.b32.xlu0 %v1801, 127
      %v1818 = vpop.permute.xlu0 %1817
      %1819 = vrot.lane.b32.xlu0 %v1802, 127
      %v1820 = vpop.permute.xlu0 %1819
      %v1821 = vsel %vm762, %v1810, %v1812
      %v1822 = vsel %vm762, %v1812, %v1814
      %v1823 = vsel %vm762, %v1816, %v1818
      %v1824 = vsel %vm762, %v1818, %v1820
      %1831 = vst [vmem:[#allocation3 + $0xf0] sm:$0xff] %v1821
      %1832 = vst [vmem:[#allocation3 + $0xf8] sm:$0xff] %v1822
      %1833 = vst.msk [vmem:[#allocation3 + $0x100] sm:$0xff] %vm284, %v1814
      %1834 = vst [vmem:[#allocation3 + $0x108] sm:$0xff] %v1823
      %1835 = vst [vmem:[#allocation3 + $0x110] sm:$0xff] %v1824
      %1836 = vst.msk [vmem:[#allocation3 + $0x118] sm:$0xff] %vm284, %v1820
      %v1837 = vld [vmem:[#allocation2 + $0x8] sm:$0xff]
      %v1838 = vld [vmem:[#allocation2 + $0x10] sm:$0xff]
      %v1839 = vld [vmem:[#allocation2 + $0x18] sm:$0xff]
      %v1840 = vld [vmem:[#allocation2 + $0x30] sm:$0xff]
      %v1841 = vld [vmem:[#allocation2 + $0x38] sm:$0xff]
      %v1842 = vld [vmem:[#allocation2 + $0x40] sm:$0xff]
      %1849 = vrot.lane.b32.xlu0 %v1837, 111
      %v1850 = vpop.permute.xlu0 %1849
      %1851 = vrot.lane.b32.xlu0 %v1838, 111
      %v1852 = vpop.permute.xlu0 %1851
      %1853 = vrot.lane.b32.xlu0 %v1839, 111
      %v1854 = vpop.permute.xlu0 %1853
      %1855 = vrot.lane.b32.xlu0 %v1840, 111
      %v1856 = vpop.permute.xlu0 %1855
      %1857 = vrot.lane.b32.xlu0 %v1841, 111
      %v1858 = vpop.permute.xlu0 %1857
      %1859 = vrot.lane.b32.xlu0 %v1842, 111
      %v1860 = vpop.permute.xlu0 %1859
      %v1861 = vsel %vm803, %v1850, %v1852
      %v1862 = vsel %vm803, %v1852, %v1854
      %v1863 = vsel %vm803, %v1856, %v1858
      %v1864 = vsel %vm803, %v1858, %v1860
      %1871 = vst [vmem:[#allocation3 + $0x120] sm:$0xff] %v1861
      %1872 = vst [vmem:[#allocation3 + $0x128] sm:$0xff] %v1862
      %1873 = vst.msk [vmem:[#allocation3 + $0x130] sm:$0xff] %vm284, %v1854
      %1874 = vst [vmem:[#allocation3 + $0x138] sm:$0xff] %v1863
      %1875 = vst [vmem:[#allocation3 + $0x140] sm:$0xff] %v1864
      %1876 = vst.msk [vmem:[#allocation3 + $0x148] sm:$0xff] %vm284, %v1860
      %v1877 = vld [vmem:[#allocation2 + $0x8] sm:$0xff]
      %v1878 = vld [vmem:[#allocation2 + $0x10] sm:$0xff]
      %v1879 = vld [vmem:[#allocation2 + $0x18] sm:$0xff]
      %v1880 = vld [vmem:[#allocation2 + $0x30] sm:$0xff]
      %v1881 = vld [vmem:[#allocation2 + $0x38] sm:$0xff]
      %v1882 = vld [vmem:[#allocation2 + $0x40] sm:$0xff]
      %1889 = vrot.lane.b32.xlu0 %v1877, 110
      %v1890 = vpop.permute.xlu0 %1889
      %1891 = vrot.lane.b32.xlu0 %v1878, 110
      %v1892 = vpop.permute.xlu0 %1891
      %1893 = vrot.lane.b32.xlu0 %v1879, 110
      %v1894 = vpop.permute.xlu0 %1893
      %1895 = vrot.lane.b32.xlu0 %v1880, 110
      %v1896 = vpop.permute.xlu0 %1895
      %1897 = vrot.lane.b32.xlu0 %v1881, 110
      %v1898 = vpop.permute.xlu0 %1897
      %1899 = vrot.lane.b32.xlu0 %v1882, 110
      %v1900 = vpop.permute.xlu0 %1899
      %v1901 = vsel %vm844, %v1890, %v1892
      %v1902 = vsel %vm844, %v1892, %v1894
      %v1903 = vsel %vm844, %v1896, %v1898
      %v1904 = vsel %vm844, %v1898, %v1900
      %1911 = vst [vmem:[#allocation3 + $0x150] sm:$0xff] %v1901
      %1912 = vst [vmem:[#allocation3 + $0x158] sm:$0xff] %v1902
      %1913 = vst.msk [vmem:[#allocation3 + $0x160] sm:$0xff] %vm284, %v1894
      %1914 = vst [vmem:[#allocation3 + $0x168] sm:$0xff] %v1903
      %1915 = vst [vmem:[#allocation3 + $0x170] sm:$0xff] %v1904
      %1916 = vst.msk [vmem:[#allocation3 + $0x178] sm:$0xff] %vm284, %v1900
      %v1917 = vld [vmem:[#allocation2 + $0x8] sm:$0xff]
      %v1918 = vld [vmem:[#allocation2 + $0x10] sm:$0xff]
      %v1919 = vld [vmem:[#allocation2 + $0x18] sm:$0xff]
      %v1920 = vld [vmem:[#allocation2 + $0x30] sm:$0xff]
      %v1921 = vld [vmem:[#allocation2 + $0x38] sm:$0xff]
      %v1922 = vld [vmem:[#allocation2 + $0x40] sm:$0xff]
      %1929 = vrot.lane.b32.xlu0 %v1917, 109
      %v1930 = vpop.permute.xlu0 %1929
      %1931 = vrot.lane.b32.xlu0 %v1918, 109
      %v1932 = vpop.permute.xlu0 %1931
      %1933 = vrot.lane.b32.xlu0 %v1919, 109
      %v1934 = vpop.permute.xlu0 %1933
      %1935 = vrot.lane.b32.xlu0 %v1920, 109
      %v1936 = vpop.permute.xlu0 %1935
      %1937 = vrot.lane.b32.xlu0 %v1921, 109
      %v1938 = vpop.permute.xlu0 %1937
      %1939 = vrot.lane.b32.xlu0 %v1922, 109
      %v1940 = vpop.permute.xlu0 %1939
      %v1941 = vsel %vm885, %v1930, %v1932
      %v1942 = vsel %vm885, %v1932, %v1934
      %v1943 = vsel %vm885, %v1936, %v1938
      %v1944 = vsel %vm885, %v1938, %v1940
      %1951 = vst [vmem:[#allocation3 + $0x180] sm:$0xff] %v1941
      %1952 = vst [vmem:[#allocation3 + $0x188] sm:$0xff] %v1942
      %1953 = vst.msk [vmem:[#allocation3 + $0x190] sm:$0xff] %vm284, %v1934
      %1954 = vst [vmem:[#allocation3 + $0x198] sm:$0xff] %v1943
      %1955 = vst [vmem:[#allocation3 + $0x1a0] sm:$0xff] %v1944
      %1956 = vst.msk [vmem:[#allocation3 + $0x1a8] sm:$0xff] %vm284, %v1940
      %s1957 = scalar_lea.vmem %s3, 48
      %v1958 = vld [vmem:[%s1957] sm:$0xff]
      %v1959 = vld [vmem:[%s1957 + $0x8] sm:$0xf]
      %v1960 = vld [vmem:[%s1957 + $0xc] sm:$0xff]
      %v1961 = vld [vmem:[%s1957 + $0x14] sm:$0xf]
      %v1962 = vld [vmem:[%s1957 + $0x18] sm:$0xff]
      %v1963 = vld [vmem:[%s1957 + $0x20] sm:$0xf]
      %v1964 = vld [vmem:[%s1957 + $0x24] sm:$0xff]
      %v1965 = vld [vmem:[%s1957 + $0x2c] sm:$0xf]
      %v1966 = vld [vmem:[#allocation3] sm:$0xff]
      %v1967 = vld [vmem:[#allocation3 + $0x8] sm:$0xff]
      %v1968 = vld [vmem:[#allocation3 + $0x10] sm:$0xff]
      %v1969 = vld [vmem:[#allocation3 + $0x18] sm:$0xff]
      %v1970 = vld [vmem:[#allocation3 + $0x20] sm:$0xff]
      %v1971 = vld [vmem:[#allocation3 + $0x28] sm:$0xff]
      %v1972 = vld [vmem:[#allocation3 + $0x30] sm:$0xff]
      %v1973 = vld [vmem:[#allocation3 + $0x38] sm:$0xff]
      %v1974 = vld [vmem:[#allocation3 + $0x40] sm:$0xff]
      %v1975 = vld [vmem:[#allocation3 + $0x48] sm:$0xff]
      %v1976 = vld [vmem:[#allocation3 + $0x50] sm:$0xff]
      %v1977 = vld [vmem:[#allocation3 + $0x58] sm:$0xff]
      %v1978 = vld [vmem:[#allocation3 + $0x60] sm:$0xff]
      %v1979 = vld [vmem:[#allocation3 + $0x68] sm:$0xff]
      %v1980 = vld [vmem:[#allocation3 + $0x70] sm:$0xff]
      %v1981 = vld [vmem:[#allocation3 + $0x78] sm:$0xff]
      %v1982 = vld [vmem:[#allocation3 + $0x80] sm:$0xff]
      %v1983 = vld [vmem:[#allocation3 + $0x88] sm:$0xff]
      %v1984 = vld [vmem:[#allocation3 + $0x90] sm:$0xff]
      %v1985 = vld [vmem:[#allocation3 + $0x98] sm:$0xff]
      %v1986 = vld [vmem:[#allocation3 + $0xa0] sm:$0xff]
      %v1987 = vld [vmem:[#allocation3 + $0xa8] sm:$0xff]
      %v1988 = vld [vmem:[#allocation3 + $0xb0] sm:$0xff]
      %v1989 = vld [vmem:[#allocation3 + $0xb8] sm:$0xff]
      %v1990 = vld [vmem:[#allocation3 + $0xc0] sm:$0xff]
      %v1991 = vld [vmem:[#allocation3 + $0xc8] sm:$0xff]
      %v1992 = vld [vmem:[#allocation3 + $0xd0] sm:$0xff]
      %v1993 = vld [vmem:[#allocation3 + $0xd8] sm:$0xff]
      %v1994 = vld [vmem:[#allocation3 + $0xe0] sm:$0xff]
      %v1995 = vld [vmem:[#allocation3 + $0xe8] sm:$0xff]
      %v1996 = vld [vmem:[#allocation3 + $0xf0] sm:$0xff]
      %v1997 = vld [vmem:[#allocation3 + $0xf8] sm:$0xff]
      %v1998 = vld [vmem:[#allocation3 + $0x100] sm:$0xff]
      %v1999 = vld [vmem:[#allocation3 + $0x108] sm:$0xff]
      %v2000 = vld [vmem:[#allocation3 + $0x110] sm:$0xff]
      %v2001 = vld [vmem:[#allocation3 + $0x118] sm:$0xff]
      %v2002 = vld [vmem:[#allocation3 + $0x120] sm:$0xff]
      %v2003 = vld [vmem:[#allocation3 + $0x128] sm:$0xff]
      %v2004 = vld [vmem:[#allocation3 + $0x130] sm:$0xff]
      %v2005 = vld [vmem:[#allocation3 + $0x138] sm:$0xff]
      %v2006 = vld [vmem:[#allocation3 + $0x140] sm:$0xff]
      %v2007 = vld [vmem:[#allocation3 + $0x148] sm:$0xff]
      %v2008 = vld [vmem:[#allocation3 + $0x150] sm:$0xff]
      %v2009 = vld [vmem:[#allocation3 + $0x158] sm:$0xff]
      %v2010 = vld [vmem:[#allocation3 + $0x160] sm:$0xff]
      %v2011 = vld [vmem:[#allocation3 + $0x168] sm:$0xff]
      %v2012 = vld [vmem:[#allocation3 + $0x170] sm:$0xff]
      %v2013 = vld [vmem:[#allocation3 + $0x178] sm:$0xff]
      %v2014 = vld [vmem:[#allocation3 + $0x180] sm:$0xff]
      %v2015 = vld [vmem:[#allocation3 + $0x188] sm:$0xff]
      %v2016 = vld [vmem:[#allocation3 + $0x190] sm:$0xff]
      %v2017 = vld [vmem:[#allocation3 + $0x198] sm:$0xff]
      %v2018 = vld [vmem:[#allocation3 + $0x1a0] sm:$0xff]
      %v2019 = vld [vmem:[#allocation3 + $0x1a8] sm:$0xff]
      %s2020 = scalar_lea.vmem %s4, 32
      %v2021 = vld [vmem:[%s2020] sm:$0xff]
      %v2022 = vld [vmem:[%s2020 + $0x8] sm:$0xff]
      %v2023 = vld [vmem:[%s2020 + $0x10] sm:$0xff]
      %v2024 = vld [vmem:[%s2020 + $0x18] sm:$0xff]
      %2026 = vset.pattern.permute.xlu0 0
      %2027 = vperm.xlu0 %2026, %v2021
      %v2028 = vpop.permute.xlu0 %2027
      %2031 = vset.pattern.permute.xlu0 0
      %2032 = vperm.xlu0 %2031, %v2022
      %v2033 = vpop.permute.xlu0 %2032
      %2036 = vset.pattern.permute.xlu0 0
      %2037 = vperm.xlu0 %2036, %v2023
      %v2038 = vpop.permute.xlu0 %2037
      %2041 = vset.pattern.permute.xlu0 0
      %2042 = vperm.xlu0 %2041, %v2024
      %v2043 = vpop.permute.xlu0 %2042
      %v2053 = vunpack.c.l.b16 %v1958
      %v2054 = vunpack.c.h.b16 %v1958
      %v2055 = vunpack.c.l.b16 %v1959
      %v2056 = vunpack.c.l.b16 %v1960
      %v2057 = vunpack.c.h.b16 %v1960
      %v2058 = vunpack.c.l.b16 %v1961
      %v2059 = vunpack.c.l.b16 %v1962
      %v2060 = vunpack.c.h.b16 %v1962
      %v2061 = vunpack.c.l.b16 %v1963
      %v2062 = vunpack.c.l.b16 %v1964
      %v2063 = vunpack.c.h.b16 %v1964
      %v2064 = vunpack.c.l.b16 %v1965
      %v2065 = vpack.c.b16 %v2056, %v2053
      %v2066 = vpack.c.b16 %v2057, %v2054
      %v2067 = vpack.c.b16 %v2058, %v2055
      %v2068 = vpack.c.b16 %v2062, %v2059
      %v2069 = vpack.c.b16 %v2063, %v2060
      %v2070 = vpack.c.b16 %v2064, %v2061
      %v2076 = vsel %vm1018, %v2067, 0
      %v2079 = vsel %vm1018, %v2070, 0
      %2081 = vmatprep.subr.bf16.mxu0 %v1967
      %2082 = vmatpush1.bf16.msra.mxu0 %v1966
      %2083 = vmatprep.subr.bf16.mxu0 %v1970
      %2084 = vmatpush1.bf16.msra.mxu0 %v1969
      %2085 = vmatprep.subr.bf16.mxu0 %v1973
      %2086 = vmatpush1.bf16.msra.mxu0 %v1972
      %2087 = vmatprep.subr.bf16.mxu0 %v1976
      %2088 = vmatpush1.bf16.msra.mxu0 %v1975
      %2089 = vmatprep.subr.bf16.mxu0 %v1979
      %2090 = vmatpush1.bf16.msra.mxu0 %v1978
      %2091 = vmatprep.subr.bf16.mxu0 %v1982
      %2092 = vmatpush1.bf16.msra.mxu0 %v1981
      %2093 = vmatprep.subr.bf16.mxu0 %v1985
      %2094 = vmatpush1.bf16.msra.mxu0 %v1984
      %2095 = vmatprep.subr.bf16.mxu0 %v1988
      %2096 = vmatpush1.bf16.msra.mxu0 %v1987
      %2097 = vmatprep.subr.bf16.mxu0 %v1991
      %2098 = vmatpush1.bf16.msra.mxu0 %v1990
      %2099 = vmatprep.subr.bf16.mxu0 %v1994
      %2100 = vmatpush1.bf16.msra.mxu0 %v1993
      %2101 = vmatprep.subr.bf16.mxu0 %v1997
      %2102 = vmatpush1.bf16.msra.mxu0 %v1996
      %2103 = vmatprep.subr.bf16.mxu0 %v2000
      %2104 = vmatpush1.bf16.msra.mxu0 %v1999
      %2105 = vmatprep.subr.bf16.mxu0 %v2003
      %2106 = vmatpush1.bf16.msra.mxu0 %v2002
      %2107 = vmatprep.subr.bf16.mxu0 %v2006
      %2108 = vmatpush1.bf16.msra.mxu0 %v2005
      %2109 = vmatprep.subr.bf16.mxu0 %v2009
      %2110 = vmatpush1.bf16.msra.mxu0 %v2008
      %2111 = vmatprep.subr.bf16.mxu0 %v2012
      %2112 = vmatpush1.bf16.msra.mxu0 %v2011
      %2113 = vmatprep.mubr.bf16.mxu0 %v2066
      %2114 = vmatmul.mubr.bf16.gmra.mrb[0].mxu0 %v2065
      %v2115 = vpop.f32.mrb[0].mxu0
      %v2116 = vadd.f32 %v2028, %v2115
      %v2117 = vpop.f32.mrb[0].mxu0
      %v2118 = vadd.f32 %v2028, %v2117
      %v2119 = vpop.f32.mrb[0].mxu0
      %v2120 = vadd.f32 %v2033, %v2119
      %v2121 = vpop.f32.mrb[0].mxu0
      %v2122 = vadd.f32 %v2033, %v2121
      %2123 = vmatprep.mubr.bf16.mxu0 %v2069
      %2124 = vmatmul.mubr.bf16.gmra.mrb[0].mxu0 %v2068
      %v2125 = vpop.f32.mrb[0].mxu0
      %v2126 = vadd.f32 %v2038, %v2125
      %v2127 = vpop.f32.mrb[0].mxu0
      %v2128 = vadd.f32 %v2038, %v2127
      %v2129 = vpop.f32.mrb[0].mxu0
      %v2130 = vadd.f32 %v2043, %v2129
      %v2131 = vpop.f32.mrb[0].mxu0
      %v2132 = vadd.f32 %v2043, %v2131
      %2133 = vdwg.mxu0
      %2134 = vmatprep.subr.bf16.mxu0 %v2015
      %2135 = vmatpush1.bf16.msra.mxu0 %v2014
      %2136 = vmatprep.subr.bf16.mxu0 %v2018
      %2137 = vmatpush1.bf16.msra.mxu0 %v2017
      %2138 = vmatprep.subr.bf16.mxu0 0
      %2139 = vmatpush1.bf16.msra.mxu0 0
      %2140 = vmatprep.subr.bf16.mxu0 0
      %2141 = vmatpush1.bf16.msra.mxu0 0
      %2142 = vmatprep.subr.bf16.mxu0 0
      %2143 = vmatpush1.bf16.msra.mxu0 0
      %2144 = vmatprep.subr.bf16.mxu0 0
      %2145 = vmatpush1.bf16.msra.mxu0 0
      %2146 = vmatprep.subr.bf16.mxu0 0
      %2147 = vmatpush1.bf16.msra.mxu0 0
      %2148 = vmatprep.subr.bf16.mxu0 0
      %2149 = vmatpush1.bf16.msra.mxu0 0
      %2150 = vmatprep.subr.bf16.mxu0 0
      %2151 = vmatpush1.bf16.msra.mxu0 0
      %2152 = vmatprep.subr.bf16.mxu0 0
      %2153 = vmatpush1.bf16.msra.mxu0 0
      %2154 = vmatprep.subr.bf16.mxu0 0
      %2155 = vmatpush1.bf16.msra.mxu0 0
      %2156 = vmatprep.subr.bf16.mxu0 0
      %2157 = vmatpush1.bf16.msra.mxu0 0
      %2158 = vmatprep.subr.bf16.mxu0 0
      %2159 = vmatpush1.bf16.msra.mxu0 0
      %2160 = vmatprep.subr.bf16.mxu0 0
      %2161 = vmatpush1.bf16.msra.mxu0 0
      %2162 = vmatprep.subr.bf16.mxu0 0
      %2163 = vmatpush1.bf16.msra.mxu0 0
      %2164 = vmatprep.subr.bf16.mxu0 0
      %2165 = vmatpush1.bf16.msra.mxu0 0
      %2166 = vmatprep.mubr.bf16.mxu0 0
      %2167 = vmatmul.mubr.bf16.gmra.mrb[0].mxu0 %v2076
      %v2168 = vpop.f32.mrb[0].mxu0
      %v2169 = vadd.f32 %v2116, %v2168
      %v2170 = vpop.f32.mrb[0].mxu0
      %v2171 = vadd.f32 %v2118, %v2170
      %v2172 = vpop.f32.mrb[0].mxu0
      %v2173 = vadd.f32 %v2120, %v2172
      %v2174 = vpop.f32.mrb[0].mxu0
      %v2175 = vadd.f32 %v2122, %v2174
      %2176 = vmatprep.mubr.bf16.mxu0 0
      %2177 = vmatmul.mubr.bf16.gmra.mrb[0].mxu0 %v2079
      %v2178 = vpop.f32.mrb[0].mxu0
      %v2179 = vadd.f32 %v2126, %v2178
      %v2180 = vpop.f32.mrb[0].mxu0
      %v2181 = vadd.f32 %v2128, %v2180
      %v2182 = vpop.f32.mrb[0].mxu0
      %v2183 = vadd.f32 %v2130, %v2182
      %v2184 = vpop.f32.mrb[0].mxu0
      %v2185 = vadd.f32 %v2132, %v2184
      %2186 = vdwg.mxu0
      %2187 = vmatprep.subr.bf16.mxu0 0
      %2188 = vmatpush1.bf16.msra.mxu0 %v1968
      %2189 = vmatprep.subr.bf16.mxu0 0
      %2190 = vmatpush1.bf16.msra.mxu0 %v1971
      %2191 = vmatprep.subr.bf16.mxu0 0
      %2192 = vmatpush1.bf16.msra.mxu0 %v1974
      %2193 = vmatprep.subr.bf16.mxu0 0
      %2194 = vmatpush1.bf16.msra.mxu0 %v1977
      %2195 = vmatprep.subr.bf16.mxu0 0
      %2196 = vmatpush1.bf16.msra.mxu0 %v1980
      %2197 = vmatprep.subr.bf16.mxu0 0
      %2198 = vmatpush1.bf16.msra.mxu0 %v1983
      %2199 = vmatprep.subr.bf16.mxu0 0
      %2200 = vmatpush1.bf16.msra.mxu0 %v1986
      %2201 = vmatprep.subr.bf16.mxu0 0
      %2202 = vmatpush1.bf16.msra.mxu0 %v1989
      %2203 = vmatprep.subr.bf16.mxu0 0
      %2204 = vmatpush1.bf16.msra.mxu0 %v1992
      %2205 = vmatprep.subr.bf16.mxu0 0
      %2206 = vmatpush1.bf16.msra.mxu0 %v1995
      %2207 = vmatprep.subr.bf16.mxu0 0
      %2208 = vmatpush1.bf16.msra.mxu0 %v1998
      %2209 = vmatprep.subr.bf16.mxu0 0
      %2210 = vmatpush1.bf16.msra.mxu0 %v2001
      %2211 = vmatprep.subr.bf16.mxu0 0
      %2212 = vmatpush1.bf16.msra.mxu0 %v2004
      %2213 = vmatprep.subr.bf16.mxu0 0
      %2214 = vmatpush1.bf16.msra.mxu0 %v2007
      %2215 = vmatprep.subr.bf16.mxu0 0
      %2216 = vmatpush1.bf16.msra.mxu0 %v2010
      %2217 = vmatprep.subr.bf16.mxu0 0
      %2218 = vmatpush1.bf16.msra.mxu0 %v2013
      %2219 = vmatprep.mubr.bf16.mxu0 %v2066
      %2220 = vmatmul.mubr.bf16.gmra.mrb[0].mxu0 %v2065
      %v2221 = vpop.f32.mrb[0].mxu0
      %v2222 = vadd.f32 %v2028, %v2221
      %v2223 = vpop.f32.mrb[0].mxu0
      %v2224 = vpop.f32.mrb[0].mxu0
      %v2225 = vadd.f32 %v2033, %v2224
      %v2226 = vpop.f32.mrb[0].mxu0
      %2227 = vmatprep.mubr.bf16.mxu0 %v2069
      %2228 = vmatmul.mubr.bf16.gmra.mrb[0].mxu0 %v2068
      %v2229 = vpop.f32.mrb[0].mxu0
      %v2230 = vadd.f32 %v2038, %v2229
      %v2231 = vpop.f32.mrb[0].mxu0
      %v2232 = vpop.f32.mrb[0].mxu0
      %v2233 = vadd.f32 %v2043, %v2232
      %v2234 = vpop.f32.mrb[0].mxu0
      %2235 = vdwg.mxu0
      %2236 = vmatprep.subr.bf16.mxu0 0
      %2237 = vmatpush1.bf16.msra.mxu0 %v2016
      %2238 = vmatprep.subr.bf16.mxu0 0
      %2239 = vmatpush1.bf16.msra.mxu0 %v2019
      %2240 = vmatprep.subr.bf16.mxu0 0
      %2241 = vmatpush1.bf16.msra.mxu0 0
      %2242 = vmatprep.subr.bf16.mxu0 0
      %2243 = vmatpush1.bf16.msra.mxu0 0
      %2244 = vmatprep.subr.bf16.mxu0 0
      %2245 = vmatpush1.bf16.msra.mxu0 0
      %2246 = vmatprep.subr.bf16.mxu0 0
      %2247 = vmatpush1.bf16.msra.mxu0 0
      %2248 = vmatprep.subr.bf16.mxu0 0
      %2249 = vmatpush1.bf16.msra.mxu0 0
      %2250 = vmatprep.subr.bf16.mxu0 0
      %2251 = vmatpush1.bf16.msra.mxu0 0
      %2252 = vmatprep.subr.bf16.mxu0 0
      %2253 = vmatpush1.bf16.msra.mxu0 0
      %2254 = vmatprep.subr.bf16.mxu0 0
      %2255 = vmatpush1.bf16.msra.mxu0 0
      %2256 = vmatprep.subr.bf16.mxu0 0
      %2257 = vmatpush1.bf16.msra.mxu0 0
      %2258 = vmatprep.subr.bf16.mxu0 0
      %2259 = vmatpush1.bf16.msra.mxu0 0
      %2260 = vmatprep.subr.bf16.mxu0 0
      %2261 = vmatpush1.bf16.msra.mxu0 0
      %2262 = vmatprep.subr.bf16.mxu0 0
      %2263 = vmatpush1.bf16.msra.mxu0 0
      %2264 = vmatprep.subr.bf16.mxu0 0
      %2265 = vmatpush1.bf16.msra.mxu0 0
      %2266 = vmatprep.subr.bf16.mxu0 0
      %2267 = vmatpush1.bf16.msra.mxu0 0
      %2268 = vmatprep.mubr.bf16.mxu0 0
      %2269 = vmatmul.mubr.bf16.gmra.mrb[0].mxu0 %v2076
      %v2270 = vpop.f32.mrb[0].mxu0
      %v2271 = vadd.f32 %v2222, %v2270
      %v2272 = vpop.f32.mrb[0].mxu0
      %v2273 = vpop.f32.mrb[0].mxu0
      %v2274 = vadd.f32 %v2225, %v2273
      %v2275 = vpop.f32.mrb[0].mxu0
      %2276 = vmatprep.mubr.bf16.mxu0 0
      %2277 = vmatmul.mubr.bf16.gmra.mrb[0].mxu0 %v2079
      %v2278 = vpop.f32.mrb[0].mxu0
      %v2279 = vadd.f32 %v2230, %v2278
      %v2280 = vpop.f32.mrb[0].mxu0
      %v2281 = vpop.f32.mrb[0].mxu0
      %v2282 = vadd.f32 %v2233, %v2281
      %v2283 = vpop.f32.mrb[0].mxu0
      %2284 = vdwg.mxu0
      %v2285 = vmax.f32 %v2169, 0.0
      %v2286 = vmax.f32 %v2171, 0.0
      %v2287 = vmax.f32 %v2271, 0.0
      %v2288 = vmax.f32 %v2173, 0.0
      %v2289 = vmax.f32 %v2175, 0.0
      %v2290 = vmax.f32 %v2274, 0.0
      %v2291 = vmax.f32 %v2179, 0.0
      %v2292 = vmax.f32 %v2181, 0.0
      %v2293 = vmax.f32 %v2279, 0.0
      %v2294 = vmax.f32 %v2183, 0.0
      %v2295 = vmax.f32 %v2185, 0.0
      %v2296 = vmax.f32 %v2282, 0.0
      %s2297 = scalar_lea.vmem %s5, 8
      %v2298 = vld [vmem:[%s2297] sm:$0x7f]
      %s2299 = scalar_lea.vmem %s6, 8
      %v2300 = vld [vmem:[%s2299] sm:$0x7f]
      %2302 = vset.pattern.permute.xlu0 0
      %2303 = vperm.xlu0 %2302, %v2300
      %v2304 = vpop.permute.xlu0 %2303
      %v2307 = vsel %vm1018, %v2298, 0
      %2309 = vmatprep.subr.mxu0 %v2286
      %2310 = vmatpush1.msra.mxu0 %v2285
      %2311 = vmatprep.subr.mxu0 %v2289
      %2312 = vmatpush1.msra.mxu0 %v2288
      %2313 = vmatprep.subr.mxu0 %v2292
      %2314 = vmatpush1.msra.mxu0 %v2291
      %2315 = vmatprep.subr.mxu0 %v2295
      %2316 = vmatpush1.msra.mxu0 %v2294
      %2317 = vmatprep.subr.mxu0 0.0
      %2318 = vmatpush1.msra.mxu0 0.0
      %2319 = vmatprep.subr.mxu0 0.0
      %2320 = vmatpush1.msra.mxu0 0.0
      %2321 = vmatprep.subr.mxu0 0.0
      %2322 = vmatpush1.msra.mxu0 0.0
      %2323 = vmatprep.subr.mxu0 0.0
      %2324 = vmatpush1.msra.mxu0 0.0
      %2325 = vmatprep.subr.mxu0 0.0
      %2326 = vmatpush1.msra.mxu0 0.0
      %2327 = vmatprep.subr.mxu0 0.0
      %2328 = vmatpush1.msra.mxu0 0.0
      %2329 = vmatprep.subr.mxu0 0.0
      %2330 = vmatpush1.msra.mxu0 0.0
      %2331 = vmatprep.subr.mxu0 0.0
      %2332 = vmatpush1.msra.mxu0 0.0
      %2333 = vmatprep.subr.mxu0 0.0
      %2334 = vmatpush1.msra.mxu0 0.0
      %2335 = vmatprep.subr.mxu0 0.0
      %2336 = vmatpush1.msra.mxu0 0.0
      %2337 = vmatprep.subr.mxu0 0.0
      %2338 = vmatpush1.msra.mxu0 0.0
      %2339 = vmatprep.subr.mxu0 0.0
      %2340 = vmatpush1.msra.mxu0 0.0
      %2341 = vmatprep.subr.mxu0 0.0
      %2342 = vmatpush1.msra.mxu0 0.0
      %2343 = vmatprep.subr.mxu0 0.0
      %2344 = vmatpush1.msra.mxu0 0.0
      %2345 = vmatprep.subr.mxu0 0.0
      %2346 = vmatpush1.msra.mxu0 0.0
      %2347 = vmatprep.subr.mxu0 0.0
      %2348 = vmatpush1.msra.mxu0 0.0
      %2349 = vmatprep.subr.mxu0 0.0
      %2350 = vmatpush1.msra.mxu0 0.0
      %2351 = vmatprep.subr.mxu0 0.0
      %2352 = vmatpush1.msra.mxu0 0.0
      %2353 = vmatprep.subr.mxu0 0.0
      %2354 = vmatpush1.msra.mxu0 0.0
      %2355 = vmatprep.subr.mxu0 0.0
      %2356 = vmatpush1.msra.mxu0 0.0
      %2357 = vmatprep.subr.mxu0 0.0
      %2358 = vmatpush1.msra.mxu0 0.0
      %2359 = vmatprep.subr.mxu0 0.0
      %2360 = vmatpush1.msra.mxu0 0.0
      %2361 = vmatprep.subr.mxu0 0.0
      %2362 = vmatpush1.msra.mxu0 0.0
      %2363 = vmatprep.subr.mxu0 0.0
      %2364 = vmatpush1.msra.mxu0 0.0
      %2365 = vmatprep.subr.mxu0 0.0
      %2366 = vmatpush1.msra.mxu0 0.0
      %2367 = vmatprep.subr.mxu0 0.0
      %2368 = vmatpush1.msra.mxu0 0.0
      %2369 = vmatprep.subr.mxu0 0.0
      %2370 = vmatpush1.msra.mxu0 0.0
      %2371 = vmatprep.subr.mxu0 0.0
      %2372 = vmatpush1.msra.mxu0 0.0
      %2373 = vmatprep.mubr.f32.mxu0 0.0
      %2374 = vmatmul.mubr.f32.gmra.mrb[0].mxu0 %v2307
      %v2375 = vpop.f32.mrb[0].mxu0
      %v2376 = vadd.f32 %v2304, %v2375
      %v2377 = vpop.f32.mrb[0].mxu0
      %v2378 = vadd.f32 %v2304, %v2377
      %2379 = vdwg.mxu0
      %2380 = vmatprep.subr.mxu0 0.0
      %2381 = vmatpush1.msra.mxu0 %v2287
      %2382 = vmatprep.subr.mxu0 0.0
      %2383 = vmatpush1.msra.mxu0 %v2290
      %2384 = vmatprep.subr.mxu0 0.0
      %2385 = vmatpush1.msra.mxu0 %v2293
      %2386 = vmatprep.subr.mxu0 0.0
      %2387 = vmatpush1.msra.mxu0 %v2296
      %2388 = vmatprep.subr.mxu0 0.0
      %2389 = vmatpush1.msra.mxu0 0.0
      %2390 = vmatprep.subr.mxu0 0.0
      %2391 = vmatpush1.msra.mxu0 0.0
      %2392 = vmatprep.subr.mxu0 0.0
      %2393 = vmatpush1.msra.mxu0 0.0
      %2394 = vmatprep.subr.mxu0 0.0
      %2395 = vmatpush1.msra.mxu0 0.0
      %2396 = vmatprep.subr.mxu0 0.0
      %2397 = vmatpush1.msra.mxu0 0.0
      %2398 = vmatprep.subr.mxu0 0.0
      %2399 = vmatpush1.msra.mxu0 0.0
      %2400 = vmatprep.subr.mxu0 0.0
      %2401 = vmatpush1.msra.mxu0 0.0
      %2402 = vmatprep.subr.mxu0 0.0
      %2403 = vmatpush1.msra.mxu0 0.0
      %2404 = vmatprep.subr.mxu0 0.0
      %2405 = vmatpush1.msra.mxu0 0.0
      %2406 = vmatprep.subr.mxu0 0.0
      %2407 = vmatpush1.msra.mxu0 0.0
      %2408 = vmatprep.subr.mxu0 0.0
      %2409 = vmatpush1.msra.mxu0 0.0
      %2410 = vmatprep.subr.mxu0 0.0
      %2411 = vmatpush1.msra.mxu0 0.0
      %2412 = vmatprep.subr.mxu0 0.0
      %2413 = vmatpush1.msra.mxu0 0.0
      %2414 = vmatprep.subr.mxu0 0.0
      %2415 = vmatpush1.msra.mxu0 0.0
      %2416 = vmatprep.subr.mxu0 0.0
      %2417 = vmatpush1.msra.mxu0 0.0
      %2418 = vmatprep.subr.mxu0 0.0
      %2419 = vmatpush1.msra.mxu0 0.0
      %2420 = vmatprep.subr.mxu0 0.0
      %2421 = vmatpush1.msra.mxu0 0.0
      %2422 = vmatprep.subr.mxu0 0.0
      %2423 = vmatpush1.msra.mxu0 0.0
      %2424 = vmatprep.subr.mxu0 0.0
      %2425 = vmatpush1.msra.mxu0 0.0
      %2426 = vmatprep.subr.mxu0 0.0
      %2427 = vmatpush1.msra.mxu0 0.0
      %2428 = vmatprep.subr.mxu0 0.0
      %2429 = vmatpush1.msra.mxu0 0.0
      %2430 = vmatprep.subr.mxu0 0.0
      %2431 = vmatpush1.msra.mxu0 0.0
      %2432 = vmatprep.subr.mxu0 0.0
      %2433 = vmatpush1.msra.mxu0 0.0
      %2434 = vmatprep.subr.mxu0 0.0
      %2435 = vmatpush1.msra.mxu0 0.0
      %2436 = vmatprep.subr.mxu0 0.0
      %2437 = vmatpush1.msra.mxu0 0.0
      %2438 = vmatprep.subr.mxu0 0.0
      %2439 = vmatpush1.msra.mxu0 0.0
      %2440 = vmatprep.subr.mxu0 0.0
      %2441 = vmatpush1.msra.mxu0 0.0
      %2442 = vmatprep.subr.mxu0 0.0
      %2443 = vmatpush1.msra.mxu0 0.0
      %2444 = vmatprep.mubr.f32.mxu0 0.0
      %2445 = vmatmul.mubr.f32.gmra.mrb[0].mxu0 %v2307
      %v2446 = vpop.f32.mrb[0].mxu0
      %v2447 = vadd.f32 %v2304, %v2446
      %v2448 = vpop.f32.mrb[0].mxu0
      %2449 = vdwg.mxu0
      %v2450 = vsel %vm1396, %v2376, 0.0
      %v2451 = vsel %vm1396, %v2378, 0.0
      %v2452 = vsel %vm1396, %v2447, 0.0
      %v2453 = vmul.f32 %v2450, 1.442695
      %v2454 = vpow.pop %v2453
      %v2455 = vmul.f32 %v2451, 1.442695
      %v2456 = vpow.pop %v2455
      %v2457 = vmul.f32 %v2452, 1.442695
      %v2458 = vpow.pop %v2457
      %v2459 = vsel %vm1396, %v2454, %v2376
      %v2460 = vsel %vm1396, %v2456, %v2378
      %v2461 = vsel %vm1396, %v2458, %v2447
      %s2462 = scalar_lea.vmem %s278, 24
      %2463 = vst [vmem:[%s2462] sm:$0x7f] %v2459
      %2464 = vst [vmem:[%s2462 + $0x8] sm:$0x7f] %v2460
      %2465 = vst.msk [vmem:[%s2462 + $0x10] sm:$0x7f] %vm1411, %v2461
      %s2466 = scalar_lea.vmem %s1, 32
      %v2467 = vld [vmem:[%s2466] sm:$0xf]
      %v2468 = vld [vmem:[%s2466 + $0x4] sm:$0xf]
      %v2469 = vld [vmem:[%s2466 + $0x8] sm:$0xf]
      %v2470 = vld [vmem:[%s2466 + $0xc] sm:$0xf]
      %s2471 = scalar_lea.vmem %s2, 64
      %v2472 = vld [vmem:[%s2471] sm:$0xff]
      %v2473 = vld [vmem:[%s2471 + $0x8] sm:$0xff]
      %v2474 = vld [vmem:[%s2471 + $0x10] sm:$0xff]
      %v2475 = vld [vmem:[%s2471 + $0x18] sm:$0xff]
      %2477 = vset.pattern.permute.xlu0 0
      %2478 = vperm.xlu0 %2477, %v2472
      %v2479 = vpop.permute.xlu0 %2478
      %2482 = vset.pattern.permute.xlu0 0
      %2483 = vperm.xlu0 %2482, %v2473
      %v2484 = vpop.permute.xlu0 %2483
      %2487 = vset.pattern.permute.xlu0 0
      %2488 = vperm.xlu0 %2487, %v2474
      %v2489 = vpop.permute.xlu0 %2488
      %2492 = vset.pattern.permute.xlu0 0
      %2493 = vperm.xlu0 %2492, %v2475
      %v2494 = vpop.permute.xlu0 %2493
      %v2500 = vunpack.c.l.b16 %v2467
      %v2501 = vunpack.c.l.b16 %v2468
      %v2502 = vunpack.c.l.b16 %v2469
      %v2503 = vunpack.c.l.b16 %v2470
      %v2504 = vpack.c.b16 %v2501, %v2500
      %v2505 = vpack.c.b16 %v2503, %v2502
      %v2507 = vsel %vm376, %v2504, 0
      %v2510 = vsel %vm376, %v2505, 0
      %2512 = vmatprep.subr.bf16.mxu0 %v362
      %2513 = vmatpush1.bf16.msra.mxu0 %v361
      %2514 = vmatprep.subr.bf16.mxu0 %v365
      %2515 = vmatpush1.bf16.msra.mxu0 %v364
      %2516 = vmatprep.subr.bf16.mxu0 %v391
      %2517 = vmatpush1.bf16.msra.mxu0 %v388
      %2518 = vmatprep.subr.bf16.mxu0 0
      %2519 = vmatpush1.bf16.msra.mxu0 0
      %2520 = vmatprep.subr.bf16.mxu0 0
      %2521 = vmatpush1.bf16.msra.mxu0 0
      %2522 = vmatprep.subr.bf16.mxu0 0
      %2523 = vmatpush1.bf16.msra.mxu0 0
      %2524 = vmatprep.subr.bf16.mxu0 0
      %2525 = vmatpush1.bf16.msra.mxu0 0
      %2526 = vmatprep.subr.bf16.mxu0 0
      %2527 = vmatpush1.bf16.msra.mxu0 0
      %2528 = vmatprep.subr.bf16.mxu0 0
      %2529 = vmatpush1.bf16.msra.mxu0 0
      %2530 = vmatprep.subr.bf16.mxu0 0
      %2531 = vmatpush1.bf16.msra.mxu0 0
      %2532 = vmatprep.subr.bf16.mxu0 0
      %2533 = vmatpush1.bf16.msra.mxu0 0
      %2534 = vmatprep.subr.bf16.mxu0 0
      %2535 = vmatpush1.bf16.msra.mxu0 0
      %2536 = vmatprep.subr.bf16.mxu0 0
      %2537 = vmatpush1.bf16.msra.mxu0 0
      %2538 = vmatprep.subr.bf16.mxu0 0
      %2539 = vmatpush1.bf16.msra.mxu0 0
      %2540 = vmatprep.subr.bf16.mxu0 0
      %2541 = vmatpush1.bf16.msra.mxu0 0
      %2542 = vmatprep.subr.bf16.mxu0 0
      %2543 = vmatpush1.bf16.msra.mxu0 0
      %2544 = vmatprep.mubr.bf16.mxu0 0
      %2545 = vmatmul.mubr.bf16.gmra.mrb[0].mxu0 %v2507
      %v2546 = vpop.f32.mrb[0].mxu0
      %v2547 = vadd.f32 %v2479, %v2546
      %v2548 = vpop.f32.mrb[0].mxu0
      %v2549 = vadd.f32 %v2479, %v2548
      %v2550 = vpop.f32.mrb[0].mxu0
      %v2551 = vadd.f32 %v2484, %v2550
      %v2552 = vpop.f32.mrb[0].mxu0
      %v2553 = vadd.f32 %v2484, %v2552
      %2554 = vmatprep.mubr.bf16.mxu0 0
      %2555 = vmatmul.mubr.bf16.gmra.mrb[0].mxu0 %v2510
      %v2556 = vpop.f32.mrb[0].mxu0
      %v2557 = vadd.f32 %v2489, %v2556
      %v2558 = vpop.f32.mrb[0].mxu0
      %v2559 = vadd.f32 %v2489, %v2558
      %v2560 = vpop.f32.mrb[0].mxu0
      %v2561 = vadd.f32 %v2494, %v2560
      %v2562 = vpop.f32.mrb[0].mxu0
      %v2563 = vadd.f32 %v2494, %v2562
      %2564 = vdwg.mxu0
      %2565 = vmatprep.subr.bf16.mxu0 0
      %2566 = vmatpush1.bf16.msra.mxu0 %v363
      %2567 = vmatprep.subr.bf16.mxu0 0
      %2568 = vmatpush1.bf16.msra.mxu0 %v366
      %2569 = vmatprep.subr.bf16.mxu0 0
      %2570 = vmatpush1.bf16.msra.mxu0 %v394
      %2571 = vmatprep.subr.bf16.mxu0 0
      %2572 = vmatpush1.bf16.msra.mxu0 0
      %2573 = vmatprep.subr.bf16.mxu0 0
      %2574 = vmatpush1.bf16.msra.mxu0 0
      %2575 = vmatprep.subr.bf16.mxu0 0
      %2576 = vmatpush1.bf16.msra.mxu0 0
      %2577 = vmatprep.subr.bf16.mxu0 0
      %2578 = vmatpush1.bf16.msra.mxu0 0
      %2579 = vmatprep.subr.bf16.mxu0 0
      %2580 = vmatpush1.bf16.msra.mxu0 0
      %2581 = vmatprep.subr.bf16.mxu0 0
      %2582 = vmatpush1.bf16.msra.mxu0 0
      %2583 = vmatprep.subr.bf16.mxu0 0
      %2584 = vmatpush1.bf16.msra.mxu0 0
      %2585 = vmatprep.subr.bf16.mxu0 0
      %2586 = vmatpush1.bf16.msra.mxu0 0
      %2587 = vmatprep.subr.bf16.mxu0 0
      %2588 = vmatpush1.bf16.msra.mxu0 0
      %2589 = vmatprep.subr.bf16.mxu0 0
      %2590 = vmatpush1.bf16.msra.mxu0 0
      %2591 = vmatprep.subr.bf16.mxu0 0
      %2592 = vmatpush1.bf16.msra.mxu0 0
      %2593 = vmatprep.subr.bf16.mxu0 0
      %2594 = vmatpush1.bf16.msra.mxu0 0
      %2595 = vmatprep.subr.bf16.mxu0 0
      %2596 = vmatpush1.bf16.msra.mxu0 0
      %2597 = vmatprep.mubr.bf16.mxu0 0
      %2598 = vmatmul.mubr.bf16.gmra.mrb[0].mxu0 %v2507
      %v2599 = vpop.f32.mrb[0].mxu0
      %v2600 = vadd.f32 %v2479, %v2599
      %v2601 = vpop.f32.mrb[0].mxu0
      %v2602 = vpop.f32.mrb[0].mxu0
      %v2603 = vadd.f32 %v2484, %v2602
      %v2604 = vpop.f32.mrb[0].mxu0
      %2605 = vmatprep.mubr.bf16.mxu0 0
      %2606 = vmatmul.mubr.bf16.gmra.mrb[0].mxu0 %v2510
      %v2607 = vpop.f32.mrb[0].mxu0
      %v2608 = vadd.f32 %v2489, %v2607
      %v2609 = vpop.f32.mrb[0].mxu0
      %v2610 = vpop.f32.mrb[0].mxu0
      %v2611 = vadd.f32 %v2494, %v2610
      %v2612 = vpop.f32.mrb[0].mxu0
      %2613 = vdwg.mxu0
      %v2614 = vmax.f32 %v2547, 0.0
      %v2615 = vmax.f32 %v2549, 0.0
      %v2616 = vmax.f32 %v2600, 0.0
      %v2617 = vmax.f32 %v2551, 0.0
      %v2618 = vmax.f32 %v2553, 0.0
      %v2619 = vmax.f32 %v2603, 0.0
      %v2620 = vmax.f32 %v2557, 0.0
      %v2621 = vmax.f32 %v2559, 0.0
      %v2622 = vmax.f32 %v2608, 0.0
      %v2623 = vmax.f32 %v2561, 0.0
      %v2624 = vmax.f32 %v2563, 0.0
      %v2625 = vmax.f32 %v2611, 0.0
      %v2626 = vpack.c.bf16 %v2617, %v2614
      %v2627 = vpack.c.bf16 %v2618, %v2615
      %v2628 = vpack.c.bf16 %v2619, %v2616
      %v2629 = vpack.c.bf16 %v2623, %v2620
      %v2630 = vpack.c.bf16 %v2624, %v2621
      %v2631 = vpack.c.bf16 %v2625, %v2622
      %2632 = vst [vmem:[#allocation2 + $0x8] sm:$0xff] %v2626
      %2633 = vst [vmem:[#allocation2 + $0x10] sm:$0xff] %v2627
      %2634 = vst.msk [vmem:[#allocation2 + $0x18] sm:$0xff] %vm284, %v2628
      %2635 = vst [vmem:[#allocation2 + $0x30] sm:$0xff] %v2629
      %2636 = vst [vmem:[#allocation2 + $0x38] sm:$0xff] %v2630
      %2637 = vst.msk [vmem:[#allocation2 + $0x40] sm:$0xff] %vm284, %v2631
      %v2638 = vld [vmem:[#allocation2] sm:$0xff]
      %v2639 = vld [vmem:[#allocation2 + $0x8] sm:$0xff]
      %v2640 = vld [vmem:[#allocation2 + $0x10] sm:$0xff]
      %v2641 = vld [vmem:[#allocation2 + $0x18] sm:$0xff]
      %v2642 = vld [vmem:[#allocation2 + $0x28] sm:$0xff]
      %v2643 = vld [vmem:[#allocation2 + $0x30] sm:$0xff]
      %v2644 = vld [vmem:[#allocation2 + $0x38] sm:$0xff]
      %v2645 = vld [vmem:[#allocation2 + $0x40] sm:$0xff]
      %2654 = vrot.lane.b32.xlu0 %v2638, 19
      %v2655 = vpop.permute.xlu0 %2654
      %2656 = vrot.lane.b32.xlu0 %v2639, 19
      %v2657 = vpop.permute.xlu0 %2656
      %2658 = vrot.lane.b32.xlu0 %v2640, 19
      %v2659 = vpop.permute.xlu0 %2658
      %2660 = vrot.lane.b32.xlu0 %v2641, 19
      %v2661 = vpop.permute.xlu0 %2660
      %2662 = vrot.lane.b32.xlu0 %v2642, 19
      %v2663 = vpop.permute.xlu0 %2662
      %2664 = vrot.lane.b32.xlu0 %v2643, 19
      %v2665 = vpop.permute.xlu0 %2664
      %2666 = vrot.lane.b32.xlu0 %v2644, 19
      %v2667 = vpop.permute.xlu0 %2666
      %2668 = vrot.lane.b32.xlu0 %v2645, 19
      %v2669 = vpop.permute.xlu0 %2668
      %v2670 = vsel %vm554, %v2655, %v2657
      %v2671 = vsel %vm554, %v2657, %v2659
      %v2672 = vsel %vm554, %v2659, %v2661
      %v2673 = vsel %vm554, %v2663, %v2665
      %v2674 = vsel %vm554, %v2665, %v2667
      %v2675 = vsel %vm554, %v2667, %v2669
      %2682 = vst [vmem:[#allocation3] sm:$0xff] %v2670
      %2683 = vst [vmem:[#allocation3 + $0x8] sm:$0xff] %v2671
      %2684 = vst.msk [vmem:[#allocation3 + $0x10] sm:$0xff] %vm284, %v2672
      %2685 = vst [vmem:[#allocation3 + $0x18] sm:$0xff] %v2673
      %2686 = vst [vmem:[#allocation3 + $0x20] sm:$0xff] %v2674
      %2687 = vst.msk [vmem:[#allocation3 + $0x28] sm:$0xff] %vm284, %v2675
      %v2688 = vld [vmem:[#allocation2] sm:$0xff]
      %v2689 = vld [vmem:[#allocation2 + $0x8] sm:$0xff]
      %v2690 = vld [vmem:[#allocation2 + $0x10] sm:$0xff]
      %v2691 = vld [vmem:[#allocation2 + $0x18] sm:$0xff]
      %v2692 = vld [vmem:[#allocation2 + $0x28] sm:$0xff]
      %v2693 = vld [vmem:[#allocation2 + $0x30] sm:$0xff]
      %v2694 = vld [vmem:[#allocation2 + $0x38] sm:$0xff]
      %v2695 = vld [vmem:[#allocation2 + $0x40] sm:$0xff]
      %2704 = vrot.lane.b32.xlu0 %v2688, 18
      %v2705 = vpop.permute.xlu0 %2704
      %2706 = vrot.lane.b32.xlu0 %v2689, 18
      %v2707 = vpop.permute.xlu0 %2706
      %2708 = vrot.lane.b32.xlu0 %v2690, 18
      %v2709 = vpop.permute.xlu0 %2708
      %2710 = vrot.lane.b32.xlu0 %v2691, 18
      %v2711 = vpop.permute.xlu0 %2710
      %2712 = vrot.lane.b32.xlu0 %v2692, 18
      %v2713 = vpop.permute.xlu0 %2712
      %2714 = vrot.lane.b32.xlu0 %v2693, 18
      %v2715 = vpop.permute.xlu0 %2714
      %2716 = vrot.lane.b32.xlu0 %v2694, 18
      %v2717 = vpop.permute.xlu0 %2716
      %2718 = vrot.lane.b32.xlu0 %v2695, 18
      %v2719 = vpop.permute.xlu0 %2718
      %v2720 = vsel %vm605, %v2705, %v2707
      %v2721 = vsel %vm605, %v2707, %v2709
      %v2722 = vsel %vm605, %v2709, %v2711
      %v2723 = vsel %vm605, %v2713, %v2715
      %v2724 = vsel %vm605, %v2715, %v2717
      %v2725 = vsel %vm605, %v2717, %v2719
      %2732 = vst [vmem:[#allocation3 + $0x30] sm:$0xff] %v2720
      %2733 = vst [vmem:[#allocation3 + $0x38] sm:$0xff] %v2721
      %2734 = vst.msk [vmem:[#allocation3 + $0x40] sm:$0xff] %vm284, %v2722
      %2735 = vst [vmem:[#allocation3 + $0x48] sm:$0xff] %v2723
      %2736 = vst [vmem:[#allocation3 + $0x50] sm:$0xff] %v2724
      %2737 = vst.msk [vmem:[#allocation3 + $0x58] sm:$0xff] %vm284, %v2725
      %v2738 = vld [vmem:[#allocation2] sm:$0xff]
      %v2739 = vld [vmem:[#allocation2 + $0x8] sm:$0xff]
      %v2740 = vld [vmem:[#allocation2 + $0x10] sm:$0xff]
      %v2741 = vld [vmem:[#allocation2 + $0x18] sm:$0xff]
      %v2742 = vld [vmem:[#allocation2 + $0x28] sm:$0xff]
      %v2743 = vld [vmem:[#allocation2 + $0x30] sm:$0xff]
      %v2744 = vld [vmem:[#allocation2 + $0x38] sm:$0xff]
      %v2745 = vld [vmem:[#allocation2 + $0x40] sm:$0xff]
      %2754 = vrot.lane.b32.xlu0 %v2738, 17
      %v2755 = vpop.permute.xlu0 %2754
      %2756 = vrot.lane.b32.xlu0 %v2739, 17
      %v2757 = vpop.permute.xlu0 %2756
      %2758 = vrot.lane.b32.xlu0 %v2740, 17
      %v2759 = vpop.permute.xlu0 %2758
      %2760 = vrot.lane.b32.xlu0 %v2741, 17
      %v2761 = vpop.permute.xlu0 %2760
      %2762 = vrot.lane.b32.xlu0 %v2742, 17
      %v2763 = vpop.permute.xlu0 %2762
      %2764 = vrot.lane.b32.xlu0 %v2743, 17
      %v2765 = vpop.permute.xlu0 %2764
      %2766 = vrot.lane.b32.xlu0 %v2744, 17
      %v2767 = vpop.permute.xlu0 %2766
      %2768 = vrot.lane.b32.xlu0 %v2745, 17
      %v2769 = vpop.permute.xlu0 %2768
      %v2770 = vsel %vm656, %v2755, %v2757
      %v2771 = vsel %vm656, %v2757, %v2759
      %v2772 = vsel %vm656, %v2759, %v2761
      %v2773 = vsel %vm656, %v2763, %v2765
      %v2774 = vsel %vm656, %v2765, %v2767
      %v2775 = vsel %vm656, %v2767, %v2769
      %2782 = vst [vmem:[#allocation3 + $0x60] sm:$0xff] %v2770
      %2783 = vst [vmem:[#allocation3 + $0x68] sm:$0xff] %v2771
      %2784 = vst.msk [vmem:[#allocation3 + $0x70] sm:$0xff] %vm284, %v2772
      %2785 = vst [vmem:[#allocation3 + $0x78] sm:$0xff] %v2773
      %2786 = vst [vmem:[#allocation3 + $0x80] sm:$0xff] %v2774
      %2787 = vst.msk [vmem:[#allocation3 + $0x88] sm:$0xff] %vm284, %v2775
      %v2788 = vld [vmem:[#allocation2] sm:$0xff]
      %v2789 = vld [vmem:[#allocation2 + $0x8] sm:$0xff]
      %v2790 = vld [vmem:[#allocation2 + $0x10] sm:$0xff]
      %v2791 = vld [vmem:[#allocation2 + $0x18] sm:$0xff]
      %v2792 = vld [vmem:[#allocation2 + $0x28] sm:$0xff]
      %v2793 = vld [vmem:[#allocation2 + $0x30] sm:$0xff]
      %v2794 = vld [vmem:[#allocation2 + $0x38] sm:$0xff]
      %v2795 = vld [vmem:[#allocation2 + $0x40] sm:$0xff]
      %2804 = vrot.lane.b32.xlu0 %v2788, 1
      %v2805 = vpop.permute.xlu0 %2804
      %2806 = vrot.lane.b32.xlu0 %v2789, 1
      %v2807 = vpop.permute.xlu0 %2806
      %2808 = vrot.lane.b32.xlu0 %v2790, 1
      %v2809 = vpop.permute.xlu0 %2808
      %2810 = vrot.lane.b32.xlu0 %v2791, 1
      %v2811 = vpop.permute.xlu0 %2810
      %2812 = vrot.lane.b32.xlu0 %v2792, 1
      %v2813 = vpop.permute.xlu0 %2812
      %2814 = vrot.lane.b32.xlu0 %v2793, 1
      %v2815 = vpop.permute.xlu0 %2814
      %2816 = vrot.lane.b32.xlu0 %v2794, 1
      %v2817 = vpop.permute.xlu0 %2816
      %2818 = vrot.lane.b32.xlu0 %v2795, 1
      %v2819 = vpop.permute.xlu0 %2818
      %v2820 = vsel %vm707, %v2805, %v2807
      %v2821 = vsel %vm707, %v2807, %v2809
      %v2822 = vsel %vm707, %v2809, %v2811
      %v2823 = vsel %vm707, %v2813, %v2815
      %v2824 = vsel %vm707, %v2815, %v2817
      %v2825 = vsel %vm707, %v2817, %v2819
      %2832 = vst [vmem:[#allocation3 + $0x90] sm:$0xff] %v2820
      %2833 = vst [vmem:[#allocation3 + $0x98] sm:$0xff] %v2821
      %2834 = vst.msk [vmem:[#allocation3 + $0xa0] sm:$0xff] %vm284, %v2822
      %2835 = vst [vmem:[#allocation3 + $0xa8] sm:$0xff] %v2823
      %2836 = vst [vmem:[#allocation3 + $0xb0] sm:$0xff] %v2824
      %2837 = vst.msk [vmem:[#allocation3 + $0xb8] sm:$0xff] %vm284, %v2825
      %v2838 = vld [vmem:[#allocation2 + $0x8] sm:$0xff]
      %v2839 = vld [vmem:[#allocation2 + $0x10] sm:$0xff]
      %v2840 = vld [vmem:[#allocation2 + $0x18] sm:$0xff]
      %v2841 = vld [vmem:[#allocation2 + $0x30] sm:$0xff]
      %v2842 = vld [vmem:[#allocation2 + $0x38] sm:$0xff]
      %v2843 = vld [vmem:[#allocation2 + $0x40] sm:$0xff]
      %2844 = vst [vmem:[#allocation3 + $0xc0] sm:$0xff] %v2838
      %2845 = vst [vmem:[#allocation3 + $0xc8] sm:$0xff] %v2839
      %2846 = vst.msk [vmem:[#allocation3 + $0xd0] sm:$0xff] %vm284, %v2840
      %2847 = vst [vmem:[#allocation3 + $0xd8] sm:$0xff] %v2841
      %2848 = vst [vmem:[#allocation3 + $0xe0] sm:$0xff] %v2842
      %2849 = vst.msk [vmem:[#allocation3 + $0xe8] sm:$0xff] %vm284, %v2843
      %v2850 = vld [vmem:[#allocation2 + $0x8] sm:$0xff]
      %v2851 = vld [vmem:[#allocation2 + $0x10] sm:$0xff]
      %v2852 = vld [vmem:[#allocation2 + $0x18] sm:$0xff]
      %v2853 = vld [vmem:[#allocation2 + $0x30] sm:$0xff]
      %v2854 = vld [vmem:[#allocation2 + $0x38] sm:$0xff]
      %v2855 = vld [vmem:[#allocation2 + $0x40] sm:$0xff]
      %2862 = vrot.lane.b32.xlu0 %v2850, 127
      %v2863 = vpop.permute.xlu0 %2862
      %2864 = vrot.lane.b32.xlu0 %v2851, 127
      %v2865 = vpop.permute.xlu0 %2864
      %2866 = vrot.lane.b32.xlu0 %v2852, 127
      %v2867 = vpop.permute.xlu0 %2866
      %2868 = vrot.lane.b32.xlu0 %v2853, 127
      %v2869 = vpop.permute.xlu0 %2868
      %2870 = vrot.lane.b32.xlu0 %v2854, 127
      %v2871 = vpop.permute.xlu0 %2870
      %2872 = vrot.lane.b32.xlu0 %v2855, 127
      %v2873 = vpop.permute.xlu0 %2872
      %v2874 = vsel %vm762, %v2863, %v2865
      %v2875 = vsel %vm762, %v2865, %v2867
      %v2876 = vsel %vm762, %v2869, %v2871
      %v2877 = vsel %vm762, %v2871, %v2873
      %2884 = vst [vmem:[#allocation3 + $0xf0] sm:$0xff] %v2874
      %2885 = vst [vmem:[#allocation3 + $0xf8] sm:$0xff] %v2875
      %2886 = vst.msk [vmem:[#allocation3 + $0x100] sm:$0xff] %vm284, %v2867
      %2887 = vst [vmem:[#allocation3 + $0x108] sm:$0xff] %v2876
      %2888 = vst [vmem:[#allocation3 + $0x110] sm:$0xff] %v2877
      %2889 = vst.msk [vmem:[#allocation3 + $0x118] sm:$0xff] %vm284, %v2873
      %v2890 = vld [vmem:[#allocation2 + $0x8] sm:$0xff]
      %v2891 = vld [vmem:[#allocation2 + $0x10] sm:$0xff]
      %v2892 = vld [vmem:[#allocation2 + $0x18] sm:$0xff]
      %v2893 = vld [vmem:[#allocation2 + $0x30] sm:$0xff]
      %v2894 = vld [vmem:[#allocation2 + $0x38] sm:$0xff]
      %v2895 = vld [vmem:[#allocation2 + $0x40] sm:$0xff]
      %2902 = vrot.lane.b32.xlu0 %v2890, 111
      %v2903 = vpop.permute.xlu0 %2902
      %2904 = vrot.lane.b32.xlu0 %v2891, 111
      %v2905 = vpop.permute.xlu0 %2904
      %2906 = vrot.lane.b32.xlu0 %v2892, 111
      %v2907 = vpop.permute.xlu0 %2906
      %2908 = vrot.lane.b32.xlu0 %v2893, 111
      %v2909 = vpop.permute.xlu0 %2908
      %2910 = vrot.lane.b32.xlu0 %v2894, 111
      %v2911 = vpop.permute.xlu0 %2910
      %2912 = vrot.lane.b32.xlu0 %v2895, 111
      %v2913 = vpop.permute.xlu0 %2912
      %v2914 = vsel %vm803, %v2903, %v2905
      %v2915 = vsel %vm803, %v2905, %v2907
      %v2916 = vsel %vm803, %v2909, %v2911
      %v2917 = vsel %vm803, %v2911, %v2913
      %2924 = vst [vmem:[#allocation3 + $0x120] sm:$0xff] %v2914
      %2925 = vst [vmem:[#allocation3 + $0x128] sm:$0xff] %v2915
      %2926 = vst.msk [vmem:[#allocation3 + $0x130] sm:$0xff] %vm284, %v2907
      %2927 = vst [vmem:[#allocation3 + $0x138] sm:$0xff] %v2916
      %2928 = vst [vmem:[#allocation3 + $0x140] sm:$0xff] %v2917
      %2929 = vst.msk [vmem:[#allocation3 + $0x148] sm:$0xff] %vm284, %v2913
      %v2930 = vld [vmem:[#allocation2 + $0x8] sm:$0xff]
      %v2931 = vld [vmem:[#allocation2 + $0x10] sm:$0xff]
      %v2932 = vld [vmem:[#allocation2 + $0x18] sm:$0xff]
      %v2933 = vld [vmem:[#allocation2 + $0x30] sm:$0xff]
      %v2934 = vld [vmem:[#allocation2 + $0x38] sm:$0xff]
      %v2935 = vld [vmem:[#allocation2 + $0x40] sm:$0xff]
      %2942 = vrot.lane.b32.xlu0 %v2930, 110
      %v2943 = vpop.permute.xlu0 %2942
      %2944 = vrot.lane.b32.xlu0 %v2931, 110
      %v2945 = vpop.permute.xlu0 %2944
      %2946 = vrot.lane.b32.xlu0 %v2932, 110
      %v2947 = vpop.permute.xlu0 %2946
      %2948 = vrot.lane.b32.xlu0 %v2933, 110
      %v2949 = vpop.permute.xlu0 %2948
      %2950 = vrot.lane.b32.xlu0 %v2934, 110
      %v2951 = vpop.permute.xlu0 %2950
      %2952 = vrot.lane.b32.xlu0 %v2935, 110
      %v2953 = vpop.permute.xlu0 %2952
      %v2954 = vsel %vm844, %v2943, %v2945
      %v2955 = vsel %vm844, %v2945, %v2947
      %v2956 = vsel %vm844, %v2949, %v2951
      %v2957 = vsel %vm844, %v2951, %v2953
      %2964 = vst [vmem:[#allocation3 + $0x150] sm:$0xff] %v2954
      %2965 = vst [vmem:[#allocation3 + $0x158] sm:$0xff] %v2955
      %2966 = vst.msk [vmem:[#allocation3 + $0x160] sm:$0xff] %vm284, %v2947
      %2967 = vst [vmem:[#allocation3 + $0x168] sm:$0xff] %v2956
      %2968 = vst [vmem:[#allocation3 + $0x170] sm:$0xff] %v2957
      %2969 = vst.msk [vmem:[#allocation3 + $0x178] sm:$0xff] %vm284, %v2953
      %v2970 = vld [vmem:[#allocation2 + $0x8] sm:$0xff]
      %v2971 = vld [vmem:[#allocation2 + $0x10] sm:$0xff]
      %v2972 = vld [vmem:[#allocation2 + $0x18] sm:$0xff]
      %v2973 = vld [vmem:[#allocation2 + $0x30] sm:$0xff]
      %v2974 = vld [vmem:[#allocation2 + $0x38] sm:$0xff]
      %v2975 = vld [vmem:[#allocation2 + $0x40] sm:$0xff]
      %2982 = vrot.lane.b32.xlu0 %v2970, 109
      %v2983 = vpop.permute.xlu0 %2982
      %2984 = vrot.lane.b32.xlu0 %v2971, 109
      %v2985 = vpop.permute.xlu0 %2984
      %2986 = vrot.lane.b32.xlu0 %v2972, 109
      %v2987 = vpop.permute.xlu0 %2986
      %2988 = vrot.lane.b32.xlu0 %v2973, 109
      %v2989 = vpop.permute.xlu0 %2988
      %2990 = vrot.lane.b32.xlu0 %v2974, 109
      %v2991 = vpop.permute.xlu0 %2990
      %2992 = vrot.lane.b32.xlu0 %v2975, 109
      %v2993 = vpop.permute.xlu0 %2992
      %v2994 = vsel %vm885, %v2983, %v2985
      %v2995 = vsel %vm885, %v2985, %v2987
      %v2996 = vsel %vm885, %v2989, %v2991
      %v2997 = vsel %vm885, %v2991, %v2993
      %3004 = vst [vmem:[#allocation3 + $0x180] sm:$0xff] %v2994
      %3005 = vst [vmem:[#allocation3 + $0x188] sm:$0xff] %v2995
      %3006 = vst.msk [vmem:[#allocation3 + $0x190] sm:$0xff] %vm284, %v2987
      %3007 = vst [vmem:[#allocation3 + $0x198] sm:$0xff] %v2996
      %3008 = vst [vmem:[#allocation3 + $0x1a0] sm:$0xff] %v2997
      %3009 = vst.msk [vmem:[#allocation3 + $0x1a8] sm:$0xff] %vm284, %v2993
      %s3010 = scalar_lea.vmem %s3, 96
      %v3011 = vld [vmem:[%s3010] sm:$0xff]
      %v3012 = vld [vmem:[%s3010 + $0x8] sm:$0xf]
      %v3013 = vld [vmem:[%s3010 + $0xc] sm:$0xff]
      %v3014 = vld [vmem:[%s3010 + $0x14] sm:$0xf]
      %v3015 = vld [vmem:[%s3010 + $0x18] sm:$0xff]
      %v3016 = vld [vmem:[%s3010 + $0x20] sm:$0xf]
      %v3017 = vld [vmem:[%s3010 + $0x24] sm:$0xff]
      %v3018 = vld [vmem:[%s3010 + $0x2c] sm:$0xf]
      %v3019 = vld [vmem:[#allocation3] sm:$0xff]
      %v3020 = vld [vmem:[#allocation3 + $0x8] sm:$0xff]
      %v3021 = vld [vmem:[#allocation3 + $0x10] sm:$0xff]
      %v3022 = vld [vmem:[#allocation3 + $0x18] sm:$0xff]
      %v3023 = vld [vmem:[#allocation3 + $0x20] sm:$0xff]
      %v3024 = vld [vmem:[#allocation3 + $0x28] sm:$0xff]
      %v3025 = vld [vmem:[#allocation3 + $0x30] sm:$0xff]
      %v3026 = vld [vmem:[#allocation3 + $0x38] sm:$0xff]
      %v3027 = vld [vmem:[#allocation3 + $0x40] sm:$0xff]
      %v3028 = vld [vmem:[#allocation3 + $0x48] sm:$0xff]
      %v3029 = vld [vmem:[#allocation3 + $0x50] sm:$0xff]
      %v3030 = vld [vmem:[#allocation3 + $0x58] sm:$0xff]
      %v3031 = vld [vmem:[#allocation3 + $0x60] sm:$0xff]
      %v3032 = vld [vmem:[#allocation3 + $0x68] sm:$0xff]
      %v3033 = vld [vmem:[#allocation3 + $0x70] sm:$0xff]
      %v3034 = vld [vmem:[#allocation3 + $0x78] sm:$0xff]
      %v3035 = vld [vmem:[#allocation3 + $0x80] sm:$0xff]
      %v3036 = vld [vmem:[#allocation3 + $0x88] sm:$0xff]
      %v3037 = vld [vmem:[#allocation3 + $0x90] sm:$0xff]
      %v3038 = vld [vmem:[#allocation3 + $0x98] sm:$0xff]
      %v3039 = vld [vmem:[#allocation3 + $0xa0] sm:$0xff]
      %v3040 = vld [vmem:[#allocation3 + $0xa8] sm:$0xff]
      %v3041 = vld [vmem:[#allocation3 + $0xb0] sm:$0xff]
      %v3042 = vld [vmem:[#allocation3 + $0xb8] sm:$0xff]
      %v3043 = vld [vmem:[#allocation3 + $0xc0] sm:$0xff]
      %v3044 = vld [vmem:[#allocation3 + $0xc8] sm:$0xff]
      %v3045 = vld [vmem:[#allocation3 + $0xd0] sm:$0xff]
      %v3046 = vld [vmem:[#allocation3 + $0xd8] sm:$0xff]
      %v3047 = vld [vmem:[#allocation3 + $0xe0] sm:$0xff]
      %v3048 = vld [vmem:[#allocation3 + $0xe8] sm:$0xff]
      %v3049 = vld [vmem:[#allocation3 + $0xf0] sm:$0xff]
      %v3050 = vld [vmem:[#allocation3 + $0xf8] sm:$0xff]
      %v3051 = vld [vmem:[#allocation3 + $0x100] sm:$0xff]
      %v3052 = vld [vmem:[#allocation3 + $0x108] sm:$0xff]
      %v3053 = vld [vmem:[#allocation3 + $0x110] sm:$0xff]
      %v3054 = vld [vmem:[#allocation3 + $0x118] sm:$0xff]
      %v3055 = vld [vmem:[#allocation3 + $0x120] sm:$0xff]
      %v3056 = vld [vmem:[#allocation3 + $0x128] sm:$0xff]
      %v3057 = vld [vmem:[#allocation3 + $0x130] sm:$0xff]
      %v3058 = vld [vmem:[#allocation3 + $0x138] sm:$0xff]
      %v3059 = vld [vmem:[#allocation3 + $0x140] sm:$0xff]
      %v3060 = vld [vmem:[#allocation3 + $0x148] sm:$0xff]
      %v3061 = vld [vmem:[#allocation3 + $0x150] sm:$0xff]
      %v3062 = vld [vmem:[#allocation3 + $0x158] sm:$0xff]
      %v3063 = vld [vmem:[#allocation3 + $0x160] sm:$0xff]
      %v3064 = vld [vmem:[#allocation3 + $0x168] sm:$0xff]
      %v3065 = vld [vmem:[#allocation3 + $0x170] sm:$0xff]
      %v3066 = vld [vmem:[#allocation3 + $0x178] sm:$0xff]
      %v3067 = vld [vmem:[#allocation3 + $0x180] sm:$0xff]
      %v3068 = vld [vmem:[#allocation3 + $0x188] sm:$0xff]
      %v3069 = vld [vmem:[#allocation3 + $0x190] sm:$0xff]
      %v3070 = vld [vmem:[#allocation3 + $0x198] sm:$0xff]
      %v3071 = vld [vmem:[#allocation3 + $0x1a0] sm:$0xff]
      %v3072 = vld [vmem:[#allocation3 + $0x1a8] sm:$0xff]
      %s3073 = scalar_lea.vmem %s4, 64
      %v3074 = vld [vmem:[%s3073] sm:$0xff]
      %v3075 = vld [vmem:[%s3073 + $0x8] sm:$0xff]
      %v3076 = vld [vmem:[%s3073 + $0x10] sm:$0xff]
      %v3077 = vld [vmem:[%s3073 + $0x18] sm:$0xff]
      %3079 = vset.pattern.permute.xlu0 0
      %3080 = vperm.xlu0 %3079, %v3074
      %v3081 = vpop.permute.xlu0 %3080
      %3084 = vset.pattern.permute.xlu0 0
      %3085 = vperm.xlu0 %3084, %v3075
      %v3086 = vpop.permute.xlu0 %3085
      %3089 = vset.pattern.permute.xlu0 0
      %3090 = vperm.xlu0 %3089, %v3076
      %v3091 = vpop.permute.xlu0 %3090
      %3094 = vset.pattern.permute.xlu0 0
      %3095 = vperm.xlu0 %3094, %v3077
      %v3096 = vpop.permute.xlu0 %3095
      %v3106 = vunpack.c.l.b16 %v3011
      %v3107 = vunpack.c.h.b16 %v3011
      %v3108 = vunpack.c.l.b16 %v3012
      %v3109 = vunpack.c.l.b16 %v3013
      %v3110 = vunpack.c.h.b16 %v3013
      %v3111 = vunpack.c.l.b16 %v3014
      %v3112 = vunpack.c.l.b16 %v3015
      %v3113 = vunpack.c.h.b16 %v3015
      %v3114 = vunpack.c.l.b16 %v3016
      %v3115 = vunpack.c.l.b16 %v3017
      %v3116 = vunpack.c.h.b16 %v3017
      %v3117 = vunpack.c.l.b16 %v3018
      %v3118 = vpack.c.b16 %v3109, %v3106
      %v3119 = vpack.c.b16 %v3110, %v3107
      %v3120 = vpack.c.b16 %v3111, %v3108
      %v3121 = vpack.c.b16 %v3115, %v3112
      %v3122 = vpack.c.b16 %v3116, %v3113
      %v3123 = vpack.c.b16 %v3117, %v3114
      %v3129 = vsel %vm1018, %v3120, 0
      %v3132 = vsel %vm1018, %v3123, 0
      %3134 = vmatprep.subr.bf16.mxu0 %v3020
      %3135 = vmatpush1.bf16.msra.mxu0 %v3019
      %3136 = vmatprep.subr.bf16.mxu0 %v3023
      %3137 = vmatpush1.bf16.msra.mxu0 %v3022
      %3138 = vmatprep.subr.bf16.mxu0 %v3026
      %3139 = vmatpush1.bf16.msra.mxu0 %v3025
      %3140 = vmatprep.subr.bf16.mxu0 %v3029
      %3141 = vmatpush1.bf16.msra.mxu0 %v3028
      %3142 = vmatprep.subr.bf16.mxu0 %v3032
      %3143 = vmatpush1.bf16.msra.mxu0 %v3031
      %3144 = vmatprep.subr.bf16.mxu0 %v3035
      %3145 = vmatpush1.bf16.msra.mxu0 %v3034
      %3146 = vmatprep.subr.bf16.mxu0 %v3038
      %3147 = vmatpush1.bf16.msra.mxu0 %v3037
      %3148 = vmatprep.subr.bf16.mxu0 %v3041
      %3149 = vmatpush1.bf16.msra.mxu0 %v3040
      %3150 = vmatprep.subr.bf16.mxu0 %v3044
      %3151 = vmatpush1.bf16.msra.mxu0 %v3043
      %3152 = vmatprep.subr.bf16.mxu0 %v3047
      %3153 = vmatpush1.bf16.msra.mxu0 %v3046
      %3154 = vmatprep.subr.bf16.mxu0 %v3050
      %3155 = vmatpush1.bf16.msra.mxu0 %v3049
      %3156 = vmatprep.subr.bf16.mxu0 %v3053
      %3157 = vmatpush1.bf16.msra.mxu0 %v3052
      %3158 = vmatprep.subr.bf16.mxu0 %v3056
      %3159 = vmatpush1.bf16.msra.mxu0 %v3055
      %3160 = vmatprep.subr.bf16.mxu0 %v3059
      %3161 = vmatpush1.bf16.msra.mxu0 %v3058
      %3162 = vmatprep.subr.bf16.mxu0 %v3062
      %3163 = vmatpush1.bf16.msra.mxu0 %v3061
      %3164 = vmatprep.subr.bf16.mxu0 %v3065
      %3165 = vmatpush1.bf16.msra.mxu0 %v3064
      %3166 = vmatprep.mubr.bf16.mxu0 %v3119
      %3167 = vmatmul.mubr.bf16.gmra.mrb[0].mxu0 %v3118
      %v3168 = vpop.f32.mrb[0].mxu0
      %v3169 = vadd.f32 %v3081, %v3168
      %v3170 = vpop.f32.mrb[0].mxu0
      %v3171 = vadd.f32 %v3081, %v3170
      %v3172 = vpop.f32.mrb[0].mxu0
      %v3173 = vadd.f32 %v3086, %v3172
      %v3174 = vpop.f32.mrb[0].mxu0
      %v3175 = vadd.f32 %v3086, %v3174
      %3176 = vmatprep.mubr.bf16.mxu0 %v3122
      %3177 = vmatmul.mubr.bf16.gmra.mrb[0].mxu0 %v3121
      %v3178 = vpop.f32.mrb[0].mxu0
      %v3179 = vadd.f32 %v3091, %v3178
      %v3180 = vpop.f32.mrb[0].mxu0
      %v3181 = vadd.f32 %v3091, %v3180
      %v3182 = vpop.f32.mrb[0].mxu0
      %v3183 = vadd.f32 %v3096, %v3182
      %v3184 = vpop.f32.mrb[0].mxu0
      %v3185 = vadd.f32 %v3096, %v3184
      %3186 = vdwg.mxu0
      %3187 = vmatprep.subr.bf16.mxu0 %v3068
      %3188 = vmatpush1.bf16.msra.mxu0 %v3067
      %3189 = vmatprep.subr.bf16.mxu0 %v3071
      %3190 = vmatpush1.bf16.msra.mxu0 %v3070
      %3191 = vmatprep.subr.bf16.mxu0 0
      %3192 = vmatpush1.bf16.msra.mxu0 0
      %3193 = vmatprep.subr.bf16.mxu0 0
      %3194 = vmatpush1.bf16.msra.mxu0 0
      %3195 = vmatprep.subr.bf16.mxu0 0
      %3196 = vmatpush1.bf16.msra.mxu0 0
      %3197 = vmatprep.subr.bf16.mxu0 0
      %3198 = vmatpush1.bf16.msra.mxu0 0
      %3199 = vmatprep.subr.bf16.mxu0 0
      %3200 = vmatpush1.bf16.msra.mxu0 0
      %3201 = vmatprep.subr.bf16.mxu0 0
      %3202 = vmatpush1.bf16.msra.mxu0 0
      %3203 = vmatprep.subr.bf16.mxu0 0
      %3204 = vmatpush1.bf16.msra.mxu0 0
      %3205 = vmatprep.subr.bf16.mxu0 0
      %3206 = vmatpush1.bf16.msra.mxu0 0
      %3207 = vmatprep.subr.bf16.mxu0 0
      %3208 = vmatpush1.bf16.msra.mxu0 0
      %3209 = vmatprep.subr.bf16.mxu0 0
      %3210 = vmatpush1.bf16.msra.mxu0 0
      %3211 = vmatprep.subr.bf16.mxu0 0
      %3212 = vmatpush1.bf16.msra.mxu0 0
      %3213 = vmatprep.subr.bf16.mxu0 0
      %3214 = vmatpush1.bf16.msra.mxu0 0
      %3215 = vmatprep.subr.bf16.mxu0 0
      %3216 = vmatpush1.bf16.msra.mxu0 0
      %3217 = vmatprep.subr.bf16.mxu0 0
      %3218 = vmatpush1.bf16.msra.mxu0 0
      %3219 = vmatprep.mubr.bf16.mxu0 0
      %3220 = vmatmul.mubr.bf16.gmra.mrb[0].mxu0 %v3129
      %v3221 = vpop.f32.mrb[0].mxu0
      %v3222 = vadd.f32 %v3169, %v3221
      %v3223 = vpop.f32.mrb[0].mxu0
      %v3224 = vadd.f32 %v3171, %v3223
      %v3225 = vpop.f32.mrb[0].mxu0
      %v3226 = vadd.f32 %v3173, %v3225
      %v3227 = vpop.f32.mrb[0].mxu0
      %v3228 = vadd.f32 %v3175, %v3227
      %3229 = vmatprep.mubr.bf16.mxu0 0
      %3230 = vmatmul.mubr.bf16.gmra.mrb[0].mxu0 %v3132
      %v3231 = vpop.f32.mrb[0].mxu0
      %v3232 = vadd.f32 %v3179, %v3231
      %v3233 = vpop.f32.mrb[0].mxu0
      %v3234 = vadd.f32 %v3181, %v3233
      %v3235 = vpop.f32.mrb[0].mxu0
      %v3236 = vadd.f32 %v3183, %v3235
      %v3237 = vpop.f32.mrb[0].mxu0
      %v3238 = vadd.f32 %v3185, %v3237
      %3239 = vdwg.mxu0
      %3240 = vmatprep.subr.bf16.mxu0 0
      %3241 = vmatpush1.bf16.msra.mxu0 %v3021
      %3242 = vmatprep.subr.bf16.mxu0 0
      %3243 = vmatpush1.bf16.msra.mxu0 %v3024
      %3244 = vmatprep.subr.bf16.mxu0 0
      %3245 = vmatpush1.bf16.msra.mxu0 %v3027
      %3246 = vmatprep.subr.bf16.mxu0 0
      %3247 = vmatpush1.bf16.msra.mxu0 %v3030
      %3248 = vmatprep.subr.bf16.mxu0 0
      %3249 = vmatpush1.bf16.msra.mxu0 %v3033
      %3250 = vmatprep.subr.bf16.mxu0 0
      %3251 = vmatpush1.bf16.msra.mxu0 %v3036
      %3252 = vmatprep.subr.bf16.mxu0 0
      %3253 = vmatpush1.bf16.msra.mxu0 %v3039
      %3254 = vmatprep.subr.bf16.mxu0 0
      %3255 = vmatpush1.bf16.msra.mxu0 %v3042
      %3256 = vmatprep.subr.bf16.mxu0 0
      %3257 = vmatpush1.bf16.msra.mxu0 %v3045
      %3258 = vmatprep.subr.bf16.mxu0 0
      %3259 = vmatpush1.bf16.msra.mxu0 %v3048
      %3260 = vmatprep.subr.bf16.mxu0 0
      %3261 = vmatpush1.bf16.msra.mxu0 %v3051
      %3262 = vmatprep.subr.bf16.mxu0 0
      %3263 = vmatpush1.bf16.msra.mxu0 %v3054
      %3264 = vmatprep.subr.bf16.mxu0 0
      %3265 = vmatpush1.bf16.msra.mxu0 %v3057
      %3266 = vmatprep.subr.bf16.mxu0 0
      %3267 = vmatpush1.bf16.msra.mxu0 %v3060
      %3268 = vmatprep.subr.bf16.mxu0 0
      %3269 = vmatpush1.bf16.msra.mxu0 %v3063
      %3270 = vmatprep.subr.bf16.mxu0 0
      %3271 = vmatpush1.bf16.msra.mxu0 %v3066
      %3272 = vmatprep.mubr.bf16.mxu0 %v3119
      %3273 = vmatmul.mubr.bf16.gmra.mrb[0].mxu0 %v3118
      %v3274 = vpop.f32.mrb[0].mxu0
      %v3275 = vadd.f32 %v3081, %v3274
      %v3276 = vpop.f32.mrb[0].mxu0
      %v3277 = vpop.f32.mrb[0].mxu0
      %v3278 = vadd.f32 %v3086, %v3277
      %v3279 = vpop.f32.mrb[0].mxu0
      %3280 = vmatprep.mubr.bf16.mxu0 %v3122
      %3281 = vmatmul.mubr.bf16.gmra.mrb[0].mxu0 %v3121
      %v3282 = vpop.f32.mrb[0].mxu0
      %v3283 = vadd.f32 %v3091, %v3282
      %v3284 = vpop.f32.mrb[0].mxu0
      %v3285 = vpop.f32.mrb[0].mxu0
      %v3286 = vadd.f32 %v3096, %v3285
      %v3287 = vpop.f32.mrb[0].mxu0
      %3288 = vdwg.mxu0
      %3289 = vmatprep.subr.bf16.mxu0 0
      %3290 = vmatpush1.bf16.msra.mxu0 %v3069
      %3291 = vmatprep.subr.bf16.mxu0 0
      %3292 = vmatpush1.bf16.msra.mxu0 %v3072
      %3293 = vmatprep.subr.bf16.mxu0 0
      %3294 = vmatpush1.bf16.msra.mxu0 0
      %3295 = vmatprep.subr.bf16.mxu0 0
      %3296 = vmatpush1.bf16.msra.mxu0 0
      %3297 = vmatprep.subr.bf16.mxu0 0
      %3298 = vmatpush1.bf16.msra.mxu0 0
      %3299 = vmatprep.subr.bf16.mxu0 0
      %3300 = vmatpush1.bf16.msra.mxu0 0
      %3301 = vmatprep.subr.bf16.mxu0 0
      %3302 = vmatpush1.bf16.msra.mxu0 0
      %3303 = vmatprep.subr.bf16.mxu0 0
      %3304 = vmatpush1.bf16.msra.mxu0 0
      %3305 = vmatprep.subr.bf16.mxu0 0
      %3306 = vmatpush1.bf16.msra.mxu0 0
      %3307 = vmatprep.subr.bf16.mxu0 0
      %3308 = vmatpush1.bf16.msra.mxu0 0
      %3309 = vmatprep.subr.bf16.mxu0 0
      %3310 = vmatpush1.bf16.msra.mxu0 0
      %3311 = vmatprep.subr.bf16.mxu0 0
      %3312 = vmatpush1.bf16.msra.mxu0 0
      %3313 = vmatprep.subr.bf16.mxu0 0
      %3314 = vmatpush1.bf16.msra.mxu0 0
      %3315 = vmatprep.subr.bf16.mxu0 0
      %3316 = vmatpush1.bf16.msra.mxu0 0
      %3317 = vmatprep.subr.bf16.mxu0 0
      %3318 = vmatpush1.bf16.msra.mxu0 0
      %3319 = vmatprep.subr.bf16.mxu0 0
      %3320 = vmatpush1.bf16.msra.mxu0 0
      %3321 = vmatprep.mubr.bf16.mxu0 0
      %3322 = vmatmul.mubr.bf16.gmra.mrb[0].mxu0 %v3129
      %v3323 = vpop.f32.mrb[0].mxu0
      %v3324 = vadd.f32 %v3275, %v3323
      %v3325 = vpop.f32.mrb[0].mxu0
      %v3326 = vpop.f32.mrb[0].mxu0
      %v3327 = vadd.f32 %v3278, %v3326
      %v3328 = vpop.f32.mrb[0].mxu0
      %3329 = vmatprep.mubr.bf16.mxu0 0
      %3330 = vmatmul.mubr.bf16.gmra.mrb[0].mxu0 %v3132
      %v3331 = vpop.f32.mrb[0].mxu0
      %v3332 = vadd.f32 %v3283, %v3331
      %v3333 = vpop.f32.mrb[0].mxu0
      %v3334 = vpop.f32.mrb[0].mxu0
      %v3335 = vadd.f32 %v3286, %v3334
      %v3336 = vpop.f32.mrb[0].mxu0
      %3337 = vdwg.mxu0
      %v3338 = vmax.f32 %v3222, 0.0
      %v3339 = vmax.f32 %v3224, 0.0
      %v3340 = vmax.f32 %v3324, 0.0
      %v3341 = vmax.f32 %v3226, 0.0
      %v3342 = vmax.f32 %v3228, 0.0
      %v3343 = vmax.f32 %v3327, 0.0
      %v3344 = vmax.f32 %v3232, 0.0
      %v3345 = vmax.f32 %v3234, 0.0
      %v3346 = vmax.f32 %v3332, 0.0
      %v3347 = vmax.f32 %v3236, 0.0
      %v3348 = vmax.f32 %v3238, 0.0
      %v3349 = vmax.f32 %v3335, 0.0
      %s3350 = scalar_lea.vmem %s5, 16
      %v3351 = vld [vmem:[%s3350] sm:$0x7f]
      %s3352 = scalar_lea.vmem %s6, 16
      %v3353 = vld [vmem:[%s3352] sm:$0x7f]
      %3355 = vset.pattern.permute.xlu0 0
      %3356 = vperm.xlu0 %3355, %v3353
      %v3357 = vpop.permute.xlu0 %3356
      %v3360 = vsel %vm1018, %v3351, 0
      %3362 = vmatprep.subr.mxu0 %v3339
      %3363 = vmatpush1.msra.mxu0 %v3338
      %3364 = vmatprep.subr.mxu0 %v3342
      %3365 = vmatpush1.msra.mxu0 %v3341
      %3366 = vmatprep.subr.mxu0 %v3345
      %3367 = vmatpush1.msra.mxu0 %v3344
      %3368 = vmatprep.subr.mxu0 %v3348
      %3369 = vmatpush1.msra.mxu0 %v3347
      %3370 = vmatprep.subr.mxu0 0.0
      %3371 = vmatpush1.msra.mxu0 0.0
      %3372 = vmatprep.subr.mxu0 0.0
      %3373 = vmatpush1.msra.mxu0 0.0
      %3374 = vmatprep.subr.mxu0 0.0
      %3375 = vmatpush1.msra.mxu0 0.0
      %3376 = vmatprep.subr.mxu0 0.0
      %3377 = vmatpush1.msra.mxu0 0.0
      %3378 = vmatprep.subr.mxu0 0.0
      %3379 = vmatpush1.msra.mxu0 0.0
      %3380 = vmatprep.subr.mxu0 0.0
      %3381 = vmatpush1.msra.mxu0 0.0
      %3382 = vmatprep.subr.mxu0 0.0
      %3383 = vmatpush1.msra.mxu0 0.0
      %3384 = vmatprep.subr.mxu0 0.0
      %3385 = vmatpush1.msra.mxu0 0.0
      %3386 = vmatprep.subr.mxu0 0.0
      %3387 = vmatpush1.msra.mxu0 0.0
      %3388 = vmatprep.subr.mxu0 0.0
      %3389 = vmatpush1.msra.mxu0 0.0
      %3390 = vmatprep.subr.mxu0 0.0
      %3391 = vmatpush1.msra.mxu0 0.0
      %3392 = vmatprep.subr.mxu0 0.0
      %3393 = vmatpush1.msra.mxu0 0.0
      %3394 = vmatprep.subr.mxu0 0.0
      %3395 = vmatpush1.msra.mxu0 0.0
      %3396 = vmatprep.subr.mxu0 0.0
      %3397 = vmatpush1.msra.mxu0 0.0
      %3398 = vmatprep.subr.mxu0 0.0
      %3399 = vmatpush1.msra.mxu0 0.0
      %3400 = vmatprep.subr.mxu0 0.0
      %3401 = vmatpush1.msra.mxu0 0.0
      %3402 = vmatprep.subr.mxu0 0.0
      %3403 = vmatpush1.msra.mxu0 0.0
      %3404 = vmatprep.subr.mxu0 0.0
      %3405 = vmatpush1.msra.mxu0 0.0
      %3406 = vmatprep.subr.mxu0 0.0
      %3407 = vmatpush1.msra.mxu0 0.0
      %3408 = vmatprep.subr.mxu0 0.0
      %3409 = vmatpush1.msra.mxu0 0.0
      %3410 = vmatprep.subr.mxu0 0.0
      %3411 = vmatpush1.msra.mxu0 0.0
      %3412 = vmatprep.subr.mxu0 0.0
      %3413 = vmatpush1.msra.mxu0 0.0
      %3414 = vmatprep.subr.mxu0 0.0
      %3415 = vmatpush1.msra.mxu0 0.0
      %3416 = vmatprep.subr.mxu0 0.0
      %3417 = vmatpush1.msra.mxu0 0.0
      %3418 = vmatprep.subr.mxu0 0.0
      %3419 = vmatpush1.msra.mxu0 0.0
      %3420 = vmatprep.subr.mxu0 0.0
      %3421 = vmatpush1.msra.mxu0 0.0
      %3422 = vmatprep.subr.mxu0 0.0
      %3423 = vmatpush1.msra.mxu0 0.0
      %3424 = vmatprep.subr.mxu0 0.0
      %3425 = vmatpush1.msra.mxu0 0.0
      %3426 = vmatprep.mubr.f32.mxu0 0.0
      %3427 = vmatmul.mubr.f32.gmra.mrb[0].mxu0 %v3360
      %v3428 = vpop.f32.mrb[0].mxu0
      %v3429 = vadd.f32 %v3357, %v3428
      %v3430 = vpop.f32.mrb[0].mxu0
      %v3431 = vadd.f32 %v3357, %v3430
      %3432 = vdwg.mxu0
      %3433 = vmatprep.subr.mxu0 0.0
      %3434 = vmatpush1.msra.mxu0 %v3340
      %3435 = vmatprep.subr.mxu0 0.0
      %3436 = vmatpush1.msra.mxu0 %v3343
      %3437 = vmatprep.subr.mxu0 0.0
      %3438 = vmatpush1.msra.mxu0 %v3346
      %3439 = vmatprep.subr.mxu0 0.0
      %3440 = vmatpush1.msra.mxu0 %v3349
      %3441 = vmatprep.subr.mxu0 0.0
      %3442 = vmatpush1.msra.mxu0 0.0
      %3443 = vmatprep.subr.mxu0 0.0
      %3444 = vmatpush1.msra.mxu0 0.0
      %3445 = vmatprep.subr.mxu0 0.0
      %3446 = vmatpush1.msra.mxu0 0.0
      %3447 = vmatprep.subr.mxu0 0.0
      %3448 = vmatpush1.msra.mxu0 0.0
      %3449 = vmatprep.subr.mxu0 0.0
      %3450 = vmatpush1.msra.mxu0 0.0
      %3451 = vmatprep.subr.mxu0 0.0
      %3452 = vmatpush1.msra.mxu0 0.0
      %3453 = vmatprep.subr.mxu0 0.0
      %3454 = vmatpush1.msra.mxu0 0.0
      %3455 = vmatprep.subr.mxu0 0.0
      %3456 = vmatpush1.msra.mxu0 0.0
      %3457 = vmatprep.subr.mxu0 0.0
      %3458 = vmatpush1.msra.mxu0 0.0
      %3459 = vmatprep.subr.mxu0 0.0
      %3460 = vmatpush1.msra.mxu0 0.0
      %3461 = vmatprep.subr.mxu0 0.0
      %3462 = vmatpush1.msra.mxu0 0.0
      %3463 = vmatprep.subr.mxu0 0.0
      %3464 = vmatpush1.msra.mxu0 0.0
      %3465 = vmatprep.subr.mxu0 0.0
      %3466 = vmatpush1.msra.mxu0 0.0
      %3467 = vmatprep.subr.mxu0 0.0
      %3468 = vmatpush1.msra.mxu0 0.0
      %3469 = vmatprep.subr.mxu0 0.0
      %3470 = vmatpush1.msra.mxu0 0.0
      %3471 = vmatprep.subr.mxu0 0.0
      %3472 = vmatpush1.msra.mxu0 0.0
      %3473 = vmatprep.subr.mxu0 0.0
      %3474 = vmatpush1.msra.mxu0 0.0
      %3475 = vmatprep.subr.mxu0 0.0
      %3476 = vmatpush1.msra.mxu0 0.0
      %3477 = vmatprep.subr.mxu0 0.0
      %3478 = vmatpush1.msra.mxu0 0.0
      %3479 = vmatprep.subr.mxu0 0.0
      %3480 = vmatpush1.msra.mxu0 0.0
      %3481 = vmatprep.subr.mxu0 0.0
      %3482 = vmatpush1.msra.mxu0 0.0
      %3483 = vmatprep.subr.mxu0 0.0
      %3484 = vmatpush1.msra.mxu0 0.0
      %3485 = vmatprep.subr.mxu0 0.0
      %3486 = vmatpush1.msra.mxu0 0.0
      %3487 = vmatprep.subr.mxu0 0.0
      %3488 = vmatpush1.msra.mxu0 0.0
      %3489 = vmatprep.subr.mxu0 0.0
      %3490 = vmatpush1.msra.mxu0 0.0
      %3491 = vmatprep.subr.mxu0 0.0
      %3492 = vmatpush1.msra.mxu0 0.0
      %3493 = vmatprep.subr.mxu0 0.0
      %3494 = vmatpush1.msra.mxu0 0.0
      %3495 = vmatprep.subr.mxu0 0.0
      %3496 = vmatpush1.msra.mxu0 0.0
      %3497 = vmatprep.mubr.f32.mxu0 0.0
      %3498 = vmatmul.mubr.f32.gmra.mrb[0].mxu0 %v3360
      %v3499 = vpop.f32.mrb[0].mxu0
      %v3500 = vadd.f32 %v3357, %v3499
      %v3501 = vpop.f32.mrb[0].mxu0
      %3502 = vdwg.mxu0
      %v3503 = vsel %vm1396, %v3429, 0.0
      %v3504 = vsel %vm1396, %v3431, 0.0
      %v3505 = vsel %vm1396, %v3500, 0.0
      %v3506 = vmul.f32 %v3503, 1.442695
      %v3507 = vpow.pop %v3506
      %v3508 = vmul.f32 %v3504, 1.442695
      %v3509 = vpow.pop %v3508
      %v3510 = vmul.f32 %v3505, 1.442695
      %v3511 = vpow.pop %v3510
      %v3512 = vsel %vm1396, %v3507, %v3429
      %v3513 = vsel %vm1396, %v3509, %v3431
      %v3514 = vsel %vm1396, %v3511, %v3500
      %s3515 = scalar_lea.vmem %s278, 48
      %3516 = vst [vmem:[%s3515] sm:$0x7f] %v3512
      %3517 = vst [vmem:[%s3515 + $0x8] sm:$0x7f] %v3513
      %3518 = vst.msk [vmem:[%s3515 + $0x10] sm:$0x7f] %vm1411, %v3514
      %p3519 = scmp.lt.s32.totalorder %s18, 1
      %s3520 = scalar_select %p3519, %s18, 1
      %s3521 = smul.addr %s3520, 9
      %s3522 = smul.addr %s3521, 8
      %s3523 = scalar_lea.vmem %s7, %s3522
      // Predicated region
      $region49: #{tpu_custom_call.1} parent=47 // pred_check
        %p3524 = pneg %p188
      $region50: #{tpu_custom_call.1} parent=47 // pred_check_branch
        %3526 = sbr.rel (%p3524) target = $region52
      $region51: #{tpu_custom_call.1} parent=47 // pred_region
        _
      $region52: #{tpu_custom_call.1} parent=47 // pred_fallthru
        _
    $region48: #{tpu_custom_call.1} parent=5 // pred_fallthru
      _
    %p3527 = scmp.le.s32.totalorder 2, %s13
    // Predicated region
    $region53: #{tpu_custom_call.1} parent=5 // pred_check
      %p3528 = pneg %p3527
    $region54: #{tpu_custom_call.1} parent=5 // pred_check_branch
      %3530 = sbr.rel (%p3528) target = $region56
    $region55: #{tpu_custom_call.1} parent=5 // pred_region
      %s3531 = ssub.s32 %s13, 2
      // Predicated region
      $region57: #{tpu_custom_call.1} parent=55 // pred_check
        %p3532 = pneg %p194
      $region58: #{tpu_custom_call.1} parent=55 // pred_check_branch
        %3534 = sbr.rel (%p3532) target = $region60
      $region59: #{tpu_custom_call.1} parent=55 // pred_region
        %p3535 = scmp.lt.s32.totalorder %s19, 1
        %s3536 = scalar_select %p3535, %s19, 1
        %s3537 = smul.addr %s3536, 9
        %s3538 = smul.addr %s3537, 8
        %s3539 = scalar_lea.vmem %s7, %s3538
      $region60: #{tpu_custom_call.1} parent=55 // pred_fallthru
        _
    $region56: #{tpu_custom_call.1} parent=5 // pred_fallthru
      _
  $region6: #{tpu_custom_call.1} parent=0 // loop_footer
    %s17 = sadd.s32 1, %s13
  $region7: #{tpu_custom_call.1} parent=0 // loop_footer_branch
    %12 = sbr.rel target = $region3
  $region8: #{tpu_custom_call.1} parent=0 // loop_exit
    _

</llo_original>
